<compile_context>
chip_gen: v7x
topology: tpu7x:2x2x1
jax: 0.10.0
libtpu: 0.0.40
codegen_flags: <defaults>
</compile_context>

<pallas_src>
import functools

import jax
import jax.numpy as jnp
from jax import lax
from jax.experimental import pallas as pl
from jax.experimental.pallas import tpu as pltpu


# ---------------------------------------------------------------------------
# Pass 1: 3x3 conv (9 shifted matmuls) + per-image channel sum / sum-of-squares
# ---------------------------------------------------------------------------
def _conv3x3_stats_kernel(xp_ref, w_ref, o_ref, sum_ref, ssq_ref, acc_ref):
    Hp, Wp, Cin = xp_ref.shape[1], xp_ref.shape[2], xp_ref.shape[3]
    H, W = Hp - 2, Wp - 2
    t = 0
    for dy in range(3):
        for dx in range(3):
            xs = xp_ref[0, dy:dy + H, dx:dx + W, :]          # (H, W, Cin) bf16
            xs = xs.reshape(H * W, Cin)                      # shifted GEMM operand
            contrib = jnp.dot(xs, w_ref[t], preferred_element_type=jnp.float32)
            if t == 0:
                acc_ref[...] = contrib
            else:
                acc_ref[...] += contrib
            t += 1
    acc = acc_ref[...]                                       # (H*W, Cpad) f32
    o_ref[0] = acc.astype(o_ref.dtype)                       # bf16 intermediate
    sum_ref[0] = jnp.sum(acc, axis=0, keepdims=True)
    ssq_ref[0] = jnp.sum(acc * acc, axis=0, keepdims=True)


# ---------------------------------------------------------------------------
# Pass 2: folded BN + (Leaky)ReLU + global average pool (per image)
# ---------------------------------------------------------------------------
def _bn_relu_pool_kernel(x_ref, scale_ref, shift_ref, pool_ref, *, negative_slope, inv_hw):
    y = x_ref[0].astype(jnp.float32) * scale_ref[...] + shift_ref[...]
    if negative_slope == 0.0:
        y = jnp.maximum(y, 0.0)
    else:
        y = jnp.where(y > 0, y, negative_slope * y)
    pool_ref[0] = jnp.sum(y, axis=0, keepdims=True) * inv_hw


# ---------------------------------------------------------------------------
# Pass 3: squeeze-excitation head: 1x1 conv -> BN -> ReLU -> 1x1 conv -> BN -> sigmoid
# (tiny; single grid step, everything resident in VMEM; BN over the batch dim)
# ---------------------------------------------------------------------------
def _se_kernel(p_ref, w1_ref, g1_ref, b1_ref, w2_ref, g2_ref, b2_ref, o_ref, *, eps):
    p = p_ref[...]                                            # (N, Cout) f32
    h = jnp.dot(p, w1_ref[...], preferred_element_type=jnp.float32)   # (N, Cmid)
    mu = jnp.mean(h, axis=0, keepdims=True)
    var = jnp.mean(h * h, axis=0, keepdims=True) - mu * mu
    h = (h - mu) * lax.rsqrt(var + eps) * g1_ref[...] + b1_ref[...]
    h = jnp.maximum(h, 0.0)
    z = jnp.dot(h, w2_ref[...], preferred_element_type=jnp.float32)   # (N, Cout)
    mu2 = jnp.mean(z, axis=0, keepdims=True)
    var2 = jnp.mean(z * z, axis=0, keepdims=True) - mu2 * mu2
    z = (z - mu2) * lax.rsqrt(var2 + eps) * g2_ref[...] + b2_ref[...]
    o_ref[...] = 1.0 / (1.0 + jnp.exp(-z))                    # sigmoid


# ---------------------------------------------------------------------------
# Pass 4: recompute folded BN + ReLU from the bf16 conv intermediate and fuse
#         out = feat + feat * cse = feat * (1 + cse)
# ---------------------------------------------------------------------------
def _bn_relu_fuse_kernel(x_ref, scale_ref, shift_ref, cse_ref, o_ref, *, negative_slope):
    y = x_ref[0].astype(jnp.float32) * scale_ref[...] + shift_ref[...]
    if negative_slope == 0.0:
        feat = jnp.maximum(y, 0.0)
    else:
        feat = jnp.where(y > 0, y, negative_slope * y)
    o_ref[0] = feat * (1.0 + cse_ref[0])


# ---------------------------------------------------------------------------
# Wrapper (PyTorch parameter layouts; NCHW in / NCHW out)
# ---------------------------------------------------------------------------
def feature_fusion_module(x1, x2, params, *, negative_slope=0.0, eps=1e-5):
    w_cbr, gamma_cbr, beta_cbr = params["w_cbr"], params["gamma_cbr"], params["beta_cbr"]
    w_se1, gamma_se1, beta_se1 = params["w_se1"], params["gamma_se1"], params["beta_se1"]
    w_se2, gamma_se2, beta_se2 = params["w_se2"], params["gamma_se2"], params["beta_se2"]

    N, C1, H, W = x1.shape
    Cin = C1 + x2.shape[1]
    Cout = w_cbr.shape[0]
    Cmid = w_se1.shape[0]
    assert w_cbr.shape == (Cout, Cin, 3, 3)
    cp = ((Cout + 127) // 128) * 128          # lane-pad output channels (lane-dense stores)
    HW = H * W

    # ---- plain-JAX glue: concat, NCHW->NHWC, spatial pad; bf16 MXU operands ----
    x = jnp.concatenate([x1, x2], axis=1)
    xh = jnp.transpose(x, (0, 2, 3, 1))
    xp = jnp.pad(xh, ((0, 0), (1, 1), (1, 1), (0, 0))).astype(jnp.bfloat16)

    wt = jnp.transpose(w_cbr, (2, 3, 1, 0))                         # (3,3,Cin,Cout)
    wt = jnp.pad(wt, ((0, 0), (0, 0), (0, 0), (0, cp - Cout)))
    wt = wt.reshape(9, Cin, cp).astype(jnp.bfloat16)                # tap-major GEMM weights

    # ---- pass 1 ----
    conv_out, csum, cssq = pl.pallas_call(
        _conv3x3_stats_kernel,
        out_shape=(jax.ShapeDtypeStruct((N, HW, cp), jnp.bfloat16),
                   jax.ShapeDtypeStruct((N, 1, cp), jnp.float32),
                   jax.ShapeDtypeStruct((N, 1, cp), jnp.float32)),
        grid_spec=pltpu.PrefetchScalarGridSpec(
            num_scalar_prefetch=0,
            grid=(N,),
            in_specs=[pl.BlockSpec((1, H + 2, W + 2, Cin), lambda n: (n, 0, 0, 0)),
                      pl.BlockSpec((9, Cin, cp), lambda n: (0, 0, 0))],
            out_specs=[pl.BlockSpec((1, HW, cp), lambda n: (n, 0, 0)),
                       pl.BlockSpec((1, 1, cp), lambda n: (n, 0, 0)),
                       pl.BlockSpec((1, 1, cp), lambda n: (n, 0, 0))],
            scratch_shapes=[pltpu.VMEM((HW, cp), jnp.float32)]),
        compiler_params=pltpu.CompilerParams(dimension_semantics=("parallel",)),
    )(xp, wt)

    # ---- fold train-mode BN into per-channel scale/shift (tiny, plain JAX) ----
    total = N * HW
    mean = jnp.sum(csum[:, 0, :], axis=0) / total
    var = jnp.maximum(jnp.sum(cssq[:, 0, :], axis=0) / total - mean * mean, 0.0)
    g_pad = jnp.pad(gamma_cbr.astype(jnp.float32), (0, cp - Cout))
    b_pad = jnp.pad(beta_cbr.astype(jnp.float32), (0, cp - Cout))
    inv_std = lax.rsqrt(var + eps)
    scale1 = (g_pad * inv_std).reshape(1, cp)
    shift1 = (b_pad - mean * g_pad * inv_std).reshape(1, cp)

    # ---- pass 2: BN + ReLU + global average pool ----
    pooled = pl.pallas_call(
        functools.partial(_bn_relu_pool_kernel,
                          negative_slope=negative_slope, inv_hw=1.0 / HW),
        out_shape=jax.ShapeDtypeStruct((N, 1, cp), jnp.float32),
        grid_spec=pltpu.PrefetchScalarGridSpec(
            num_scalar_prefetch=0,
            grid=(N,),
            in_specs=[pl.BlockSpec((1, HW, cp), lambda n: (n, 0, 0)),
                      pl.BlockSpec((1, cp), lambda n: (0, 0)),
                      pl.BlockSpec((1, cp), lambda n: (0, 0))],
            out_specs=pl.BlockSpec((1, 1, cp), lambda n: (n, 0, 0))),
        compiler_params=pltpu.CompilerParams(dimension_semantics=("parallel",)),
    )(conv_out, scale1, shift1)

    # ---- pass 3: squeeze-excitation head (tiny, single grid step) ----
    p_se = pooled[:, 0, :Cout]                                      # (N, Cout)
    w1 = w_se1.reshape(Cmid, Cout).T.astype(jnp.float32)            # (Cout, Cmid)
    w2 = w_se2.reshape(Cout, Cmid).T.astype(jnp.float32)            # (Cmid, Cout)
    g1 = gamma_se1.reshape(1, Cmid).astype(jnp.float32)
    b1 = beta_se1.reshape(1, Cmid).astype(jnp.float32)
    g2 = gamma_se2.reshape(1, Cout).astype(jnp.float32)
    b2 = beta_se2.reshape(1, Cout).astype(jnp.float32)

    cse = pl.pallas_call(
        functools.partial(_se_kernel, eps=eps),
        out_shape=jax.ShapeDtypeStruct((N, Cout), jnp.float32),
        grid_spec=pltpu.PrefetchScalarGridSpec(
            num_scalar_prefetch=0,
            grid=(1,),
            in_specs=[pl.BlockSpec((N, Cout), lambda i: (0, 0)),
                      pl.BlockSpec((Cout, Cmid), lambda i: (0, 0)),
                      pl.BlockSpec((1, Cmid), lambda i: (0, 0)),
                      pl.BlockSpec((1, Cmid), lambda i: (0, 0)),
                      pl.BlockSpec((Cmid, Cout), lambda i: (0, 0)),
                      pl.BlockSpec((1, Cout), lambda i: (0, 0)),
                      pl.BlockSpec((1, Cout), lambda i: (0, 0))],
            out_specs=pl.BlockSpec((N, Cout), lambda i: (0, 0))),
        compiler_params=pltpu.CompilerParams(dimension_semantics=("arbitrary",)),
    )(p_se, w1, g1, b1, w2, g2, b2)

    cse_pad = jnp.pad(cse, ((0, 0), (0, cp - Cout)))[:, None, :]    # (N, 1, cp)

    # ---- pass 4: fused BN + ReLU + channel attention output ----
    out_mat = pl.pallas_call(
        functools.partial(_bn_relu_fuse_kernel, negative_slope=negative_slope),
        out_shape=jax.ShapeDtypeStruct((N, HW, cp), jnp.float32),
        grid_spec=pltpu.PrefetchScalarGridSpec(
            num_scalar_prefetch=0,
            grid=(N,),
            in_specs=[pl.BlockSpec((1, HW, cp), lambda n: (n, 0, 0)),
                      pl.BlockSpec((1, cp), lambda n: (0, 0)),
                      pl.BlockSpec((1, cp), lambda n: (0, 0)),
                      pl.BlockSpec((1, 1, cp), lambda n: (n, 0, 0))],
            out_specs=pl.BlockSpec((1, HW, cp), lambda n: (n, 0, 0))),
        compiler_params=pltpu.CompilerParams(dimension_semantics=("parallel",)),
    )(conv_out, scale1, shift1, cse_pad)

    out = out_mat[:, :, :Cout].reshape(N, H, W, Cout)
    return jnp.transpose(out, (0, 3, 1, 2))                         # NCHW


if __name__ == "__main__":
    key = jax.random.PRNGKey(0)
    ks = jax.random.split(key, 12)

    # featureFusionModule(in_channels=128, out_channels=32, reduction=2, is_batchnorm=True)
    N, C_half, H, W = 2, 64, 16, 16
    Cin, Cout, Cmid = 2 * C_half, 32, 16

    # Per-sample offsets keep the two batch samples well separated (the SE path's BatchNorm
    # over a batch of 2 is otherwise sensitive to tiny perturbations).
    offs = jnp.arange(N, dtype=jnp.float32).reshape(N, 1, 1, 1)
    x1 = jax.random.normal(ks[0], (N, C_half, H, W), jnp.float32) + offs
    x2 = jax.random.normal(ks[1], (N, C_half, H, W), jnp.float32) + offs

    params = dict(
        w_cbr=0.05 * jax.random.normal(ks[2], (Cout, Cin, 3, 3), jnp.float32),
        gamma_cbr=1.0 + 0.1 * jax.random.normal(ks[3], (Cout,), jnp.float32),
        beta_cbr=0.1 * jax.random.normal(ks[4], (Cout,), jnp.float32),
        w_se1=0.2 * jax.random.normal(ks[5], (Cmid, Cout, 1, 1), jnp.float32),
        gamma_se1=1.0 + 0.1 * jax.random.normal(ks[6], (Cmid,), jnp.float32),
        beta_se1=0.1 * jax.random.normal(ks[7], (Cmid,), jnp.float32),
        w_se2=0.2 * jax.random.normal(ks[8], (Cout, Cmid, 1, 1), jnp.float32),
        gamma_se2=1.0 + 0.1 * jax.random.normal(ks[9], (Cout,), jnp.float32),
        beta_se2=0.1 * jax.random.normal(ks[10], (Cout,), jnp.float32),
    )

    y = feature_fusion_module(x1, x2, params)
    y = jax.block_until_ready(y)

    # Pure-XLA f32 reference mirroring the PyTorch forward (train-mode BN everywhere).
    def reference(x1, x2, p, eps=1e-5):
        x = jnp.concatenate([x1, x2], axis=1)
        conv = lax.conv_general_dilated(x, p["w_cbr"], (1, 1), [(1, 1), (1, 1)],
                                        dimension_numbers=("NCHW", "OIHW", "NCHW"))

        def bn(t, g, b):
            mu = t.mean(axis=(0, 2, 3), keepdims=True)
            var = t.var(axis=(0, 2, 3), keepdims=True)
            return ((t - mu) * lax.rsqrt(var + eps) * g.reshape(1, -1, 1, 1)
                    + b.reshape(1, -1, 1, 1))

        feat = jnp.maximum(bn(conv, p["gamma_cbr"], p["beta_cbr"]), 0.0)
        pooled = feat.mean(axis=(2, 3), keepdims=True)
        h = lax.conv_general_dilated(pooled, p["w_se1"], (1, 1), [(0, 0), (0, 0)],
                                     dimension_numbers=("NCHW", "OIHW", "NCHW"))
        h = jnp.maximum(bn(h, p["gamma_se1"], p["beta_se1"]), 0.0)
        z = lax.conv_general_dilated(h, p["w_se2"], (1, 1), [(0, 0), (0, 0)],
                                     dimension_numbers=("NCHW", "OIHW", "NCHW"))
        z = bn(z, p["gamma_se2"], p["beta_se2"])
        cse = jax.nn.sigmoid(z)
        return feat + feat * cse

    ref = reference(x1, x2, params)
    assert y.shape == (N, Cout, H, W), y.shape
    max_err = float(jnp.max(jnp.abs(y - ref)))
    assert jnp.allclose(y, ref, atol=1e-1, rtol=1e-1), max_err
    print("KERNEL_OK")
</pallas_src>

<mosaic_0001>
module attributes {stable_mosaic.version = 11 : i64} {
  func.func @_conv3x3_stats_kernel(%arg0: i32, %arg1: memref<1x18x18x128xbf16, #tpu.memory_space<vmem>>, %arg2: memref<9x128x128xbf16, #tpu.memory_space<vmem>>, %arg3: memref<1x256x128xbf16, #tpu.memory_space<vmem>>, %arg4: memref<1x1x128xf32, #tpu.memory_space<vmem>>, %arg5: memref<1x1x128xf32, #tpu.memory_space<vmem>>, %arg6: memref<256x128xf32, #tpu.memory_space<vmem>>) attributes {dimension_semantics = [#tpu.dimension_semantics<parallel>], iteration_bounds = array<i64: 2>, scalar_prefetch = 0 : i64, scratch_operands = 1 : i64, tpu.core_type = #tpu.core_type<tc>, window_params = [{transform_indices = @transform_0, window_bounds = array<i64: 1, 18, 18, 128>}, {pipeline_mode = #tpu.pipeline_mode<synchronous>, transform_indices = @transform_1, window_bounds = array<i64: 9, 128, 128>}, {transform_indices = @transform_2, window_bounds = array<i64: 1, 256, 128>}, {transform_indices = @transform_3, window_bounds = array<i64: 1, 1, 128>}, {transform_indices = @transform_4, window_bounds = array<i64: 1, 1, 128>}]} {
    %c0 = arith.constant 0 : index
    %c0_0 = arith.constant 0 : index
    %c0_1 = arith.constant 0 : index
    %c0_2 = arith.constant 0 : index
    %0 = vector.load %arg1[%c0, %c0_0, %c0_1, %c0_2] : memref<1x18x18x128xbf16, #tpu.memory_space<vmem>>, vector<1x16x16x128xbf16>
    %1 = vector.shape_cast %0 : vector<1x16x16x128xbf16> to vector<16x16x128xbf16>
    %2 = vector.shape_cast %1 : vector<16x16x128xbf16> to vector<256x128xbf16>
    %c0_3 = arith.constant 0 : index
    %c0_4 = arith.constant 0 : index
    %c0_5 = arith.constant 0 : index
    %3 = vector.load %arg2[%c0_3, %c0_4, %c0_5] : memref<9x128x128xbf16, #tpu.memory_space<vmem>>, vector<1x128x128xbf16>
    %4 = vector.shape_cast %3 : vector<1x128x128xbf16> to vector<128x128xbf16>
    %cst = arith.constant dense<0.000000e+00> : vector<256x128xf32>
    %5 = tpu.matmul %2, %4, %cst {dimension_numbers = #tpu.dot_dimension_numbers<[1], [0], [0], [1], [0, 0, 1, 1], [], []>} : vector<256x128xbf16>, vector<128x128xbf16>, vector<256x128xf32> -> vector<256x128xf32>
    %c0_6 = arith.constant 0 : index
    %c0_7 = arith.constant 0 : index
    %6 = vector.load %arg6[%c0_6, %c0_7] : memref<256x128xf32, #tpu.memory_space<vmem>>, vector<256x128xf32>
    tpu.vector_store %arg6[%c0_6, %c0_7], %5 {strides = array<i32>} : memref<256x128xf32, #tpu.memory_space<vmem>>, vector<256x128xf32>,
    %c0_8 = arith.constant 0 : index
    %c0_9 = arith.constant 0 : index
    %c1 = arith.constant 1 : index
    %c0_10 = arith.constant 0 : index
    %7 = vector.load %arg1[%c0_8, %c0_9, %c1, %c0_10] : memref<1x18x18x128xbf16, #tpu.memory_space<vmem>>, vector<1x16x16x128xbf16>
    %8 = vector.shape_cast %7 : vector<1x16x16x128xbf16> to vector<16x16x128xbf16>
    %9 = vector.shape_cast %8 : vector<16x16x128xbf16> to vector<256x128xbf16>
    %c1_11 = arith.constant 1 : index
    %c0_12 = arith.constant 0 : index
    %c0_13 = arith.constant 0 : index
    %10 = vector.load %arg2[%c1_11, %c0_12, %c0_13] : memref<9x128x128xbf16, #tpu.memory_space<vmem>>, vector<1x128x128xbf16>
    %11 = vector.shape_cast %10 : vector<1x128x128xbf16> to vector<128x128xbf16>
    %cst_14 = arith.constant dense<0.000000e+00> : vector<256x128xf32>
    %12 = tpu.matmul %9, %11, %cst_14 {dimension_numbers = #tpu.dot_dimension_numbers<[1], [0], [0], [1], [0, 0, 1, 1], [], []>} : vector<256x128xbf16>, vector<128x128xbf16>, vector<256x128xf32> -> vector<256x128xf32>
    %c0_15 = arith.constant 0 : index
    %c0_16 = arith.constant 0 : index
    %13 = vector.load %arg6[%c0_15, %c0_16] : memref<256x128xf32, #tpu.memory_space<vmem>>, vector<256x128xf32>
    %14 = arith.addf %13, %12 : vector<256x128xf32>
    %c0_17 = arith.constant 0 : index
    %c0_18 = arith.constant 0 : index
    %15 = vector.load %arg6[%c0_17, %c0_18] : memref<256x128xf32, #tpu.memory_space<vmem>>, vector<256x128xf32>
    tpu.vector_store %arg6[%c0_17, %c0_18], %14 {strides = array<i32>} : memref<256x128xf32, #tpu.memory_space<vmem>>, vector<256x128xf32>,
    %c0_19 = arith.constant 0 : index
    %c0_20 = arith.constant 0 : index
    %c2 = arith.constant 2 : index
    %c0_21 = arith.constant 0 : index
    %16 = vector.load %arg1[%c0_19, %c0_20, %c2, %c0_21] : memref<1x18x18x128xbf16, #tpu.memory_space<vmem>>, vector<1x16x16x128xbf16>
    %17 = vector.shape_cast %16 : vector<1x16x16x128xbf16> to vector<16x16x128xbf16>
    %18 = vector.shape_cast %17 : vector<16x16x128xbf16> to vector<256x128xbf16>
    %c2_22 = arith.constant 2 : index
    %c0_23 = arith.constant 0 : index
    %c0_24 = arith.constant 0 : index
    %19 = vector.load %arg2[%c2_22, %c0_23, %c0_24] : memref<9x128x128xbf16, #tpu.memory_space<vmem>>, vector<1x128x128xbf16>
    %20 = vector.shape_cast %19 : vector<1x128x128xbf16> to vector<128x128xbf16>
    %cst_25 = arith.constant dense<0.000000e+00> : vector<256x128xf32>
    %21 = tpu.matmul %18, %20, %cst_25 {dimension_numbers = #tpu.dot_dimension_numbers<[1], [0], [0], [1], [0, 0, 1, 1], [], []>} : vector<256x128xbf16>, vector<128x128xbf16>, vector<256x128xf32> -> vector<256x128xf32>
    %c0_26 = arith.constant 0 : index
    %c0_27 = arith.constant 0 : index
    %22 = vector.load %arg6[%c0_26, %c0_27] : memref<256x128xf32, #tpu.memory_space<vmem>>, vector<256x128xf32>
    %23 = arith.addf %22, %21 : vector<256x128xf32>
    %c0_28 = arith.constant 0 : index
    %c0_29 = arith.constant 0 : index
    %24 = vector.load %arg6[%c0_28, %c0_29] : memref<256x128xf32, #tpu.memory_space<vmem>>, vector<256x128xf32>
    tpu.vector_store %arg6[%c0_28, %c0_29], %23 {strides = array<i32>} : memref<256x128xf32, #tpu.memory_space<vmem>>, vector<256x128xf32>,
    %c0_30 = arith.constant 0 : index
    %c1_31 = arith.constant 1 : index
    %c0_32 = arith.constant 0 : index
    %c0_33 = arith.constant 0 : index
    %25 = vector.load %arg1[%c0_30, %c1_31, %c0_32, %c0_33] : memref<1x18x18x128xbf16, #tpu.memory_space<vmem>>, vector<1x16x16x128xbf16>
    %26 = vector.shape_cast %25 : vector<1x16x16x128xbf16> to vector<16x16x128xbf16>
    %27 = vector.shape_cast %26 : vector<16x16x128xbf16> to vector<256x128xbf16>
    %c3 = arith.constant 3 : index
    %c0_34 = arith.constant 0 : index
    %c0_35 = arith.constant 0 : index
    %28 = vector.load %arg2[%c3, %c0_34, %c0_35] : memref<9x128x128xbf16, #tpu.memory_space<vmem>>, vector<1x128x128xbf16>
    %29 = vector.shape_cast %28 : vector<1x128x128xbf16> to vector<128x128xbf16>
    %cst_36 = arith.constant dense<0.000000e+00> : vector<256x128xf32>
    %30 = tpu.matmul %27, %29, %cst_36 {dimension_numbers = #tpu.dot_dimension_numbers<[1], [0], [0], [1], [0, 0, 1, 1], [], []>} : vector<256x128xbf16>, vector<128x128xbf16>, vector<256x128xf32> -> vector<256x128xf32>
    %c0_37 = arith.constant 0 : index
    %c0_38 = arith.constant 0 : index
    %31 = vector.load %arg6[%c0_37, %c0_38] : memref<256x128xf32, #tpu.memory_space<vmem>>, vector<256x128xf32>
    %32 = arith.addf %31, %30 : vector<256x128xf32>
    %c0_39 = arith.constant 0 : index
    %c0_40 = arith.constant 0 : index
    %33 = vector.load %arg6[%c0_39, %c0_40] : memref<256x128xf32, #tpu.memory_space<vmem>>, vector<256x128xf32>
    tpu.vector_store %arg6[%c0_39, %c0_40], %32 {strides = array<i32>} : memref<256x128xf32, #tpu.memory_space<vmem>>, vector<256x128xf32>,
    %c0_41 = arith.constant 0 : index
    %c1_42 = arith.constant 1 : index
    %c1_43 = arith.constant 1 : index
    %c0_44 = arith.constant 0 : index
    %34 = vector.load %arg1[%c0_41, %c1_42, %c1_43, %c0_44] : memref<1x18x18x128xbf16, #tpu.memory_space<vmem>>, vector<1x16x16x128xbf16>
    %35 = vector.shape_cast %34 : vector<1x16x16x128xbf16> to vector<16x16x128xbf16>
    %36 = vector.shape_cast %35 : vector<16x16x128xbf16> to vector<256x128xbf16>
    %c4 = arith.constant 4 : index
    %c0_45 = arith.constant 0 : index
    %c0_46 = arith.constant 0 : index
    %37 = vector.load %arg2[%c4, %c0_45, %c0_46] : memref<9x128x128xbf16, #tpu.memory_space<vmem>>, vector<1x128x128xbf16>
    %38 = vector.shape_cast %37 : vector<1x128x128xbf16> to vector<128x128xbf16>
    %cst_47 = arith.constant dense<0.000000e+00> : vector<256x128xf32>
    %39 = tpu.matmul %36, %38, %cst_47 {dimension_numbers = #tpu.dot_dimension_numbers<[1], [0], [0], [1], [0, 0, 1, 1], [], []>} : vector<256x128xbf16>, vector<128x128xbf16>, vector<256x128xf32> -> vector<256x128xf32>
    %c0_48 = arith.constant 0 : index
    %c0_49 = arith.constant 0 : index
    %40 = vector.load %arg6[%c0_48, %c0_49] : memref<256x128xf32, #tpu.memory_space<vmem>>, vector<256x128xf32>
    %41 = arith.addf %40, %39 : vector<256x128xf32>
    %c0_50 = arith.constant 0 : index
    %c0_51 = arith.constant 0 : index
    %42 = vector.load %arg6[%c0_50, %c0_51] : memref<256x128xf32, #tpu.memory_space<vmem>>, vector<256x128xf32>
    tpu.vector_store %arg6[%c0_50, %c0_51], %41 {strides = array<i32>} : memref<256x128xf32, #tpu.memory_space<vmem>>, vector<256x128xf32>,
    %c0_52 = arith.constant 0 : index
    %c1_53 = arith.constant 1 : index
    %c2_54 = arith.constant 2 : index
    %c0_55 = arith.constant 0 : index
    %43 = vector.load %arg1[%c0_52, %c1_53, %c2_54, %c0_55] : memref<1x18x18x128xbf16, #tpu.memory_space<vmem>>, vector<1x16x16x128xbf16>
    %44 = vector.shape_cast %43 : vector<1x16x16x128xbf16> to vector<16x16x128xbf16>
    %45 = vector.shape_cast %44 : vector<16x16x128xbf16> to vector<256x128xbf16>
    %c5 = arith.constant 5 : index
    %c0_56 = arith.constant 0 : index
    %c0_57 = arith.constant 0 : index
    %46 = vector.load %arg2[%c5, %c0_56, %c0_57] : memref<9x128x128xbf16, #tpu.memory_space<vmem>>, vector<1x128x128xbf16>
    %47 = vector.shape_cast %46 : vector<1x128x128xbf16> to vector<128x128xbf16>
    %cst_58 = arith.constant dense<0.000000e+00> : vector<256x128xf32>
    %48 = tpu.matmul %45, %47, %cst_58 {dimension_numbers = #tpu.dot_dimension_numbers<[1], [0], [0], [1], [0, 0, 1, 1], [], []>} : vector<256x128xbf16>, vector<128x128xbf16>, vector<256x128xf32> -> vector<256x128xf32>
    %c0_59 = arith.constant 0 : index
    %c0_60 = arith.constant 0 : index
    %49 = vector.load %arg6[%c0_59, %c0_60] : memref<256x128xf32, #tpu.memory_space<vmem>>, vector<256x128xf32>
    %50 = arith.addf %49, %48 : vector<256x128xf32>
    %c0_61 = arith.constant 0 : index
    %c0_62 = arith.constant 0 : index
    %51 = vector.load %arg6[%c0_61, %c0_62] : memref<256x128xf32, #tpu.memory_space<vmem>>, vector<256x128xf32>
    tpu.vector_store %arg6[%c0_61, %c0_62], %50 {strides = array<i32>} : memref<256x128xf32, #tpu.memory_space<vmem>>, vector<256x128xf32>,
    %c0_63 = arith.constant 0 : index
    %c2_64 = arith.constant 2 : index
    %c0_65 = arith.constant 0 : index
    %c0_66 = arith.constant 0 : index
    %52 = vector.load %arg1[%c0_63, %c2_64, %c0_65, %c0_66] : memref<1x18x18x128xbf16, #tpu.memory_space<vmem>>, vector<1x16x16x128xbf16>
    %53 = vector.shape_cast %52 : vector<1x16x16x128xbf16> to vector<16x16x128xbf16>
    %54 = vector.shape_cast %53 : vector<16x16x128xbf16> to vector<256x128xbf16>
    %c6 = arith.constant 6 : index
    %c0_67 = arith.constant 0 : index
    %c0_68 = arith.constant 0 : index
    %55 = vector.load %arg2[%c6, %c0_67, %c0_68] : memref<9x128x128xbf16, #tpu.memory_space<vmem>>, vector<1x128x128xbf16>
    %56 = vector.shape_cast %55 : vector<1x128x128xbf16> to vector<128x128xbf16>
    %cst_69 = arith.constant dense<0.000000e+00> : vector<256x128xf32>
    %57 = tpu.matmul %54, %56, %cst_69 {dimension_numbers = #tpu.dot_dimension_numbers<[1], [0], [0], [1], [0, 0, 1, 1], [], []>} : vector<256x128xbf16>, vector<128x128xbf16>, vector<256x128xf32> -> vector<256x128xf32>
    %c0_70 = arith.constant 0 : index
    %c0_71 = arith.constant 0 : index
    %58 = vector.load %arg6[%c0_70, %c0_71] : memref<256x128xf32, #tpu.memory_space<vmem>>, vector<256x128xf32>
    %59 = arith.addf %58, %57 : vector<256x128xf32>
    %c0_72 = arith.constant 0 : index
    %c0_73 = arith.constant 0 : index
    %60 = vector.load %arg6[%c0_72, %c0_73] : memref<256x128xf32, #tpu.memory_space<vmem>>, vector<256x128xf32>
    tpu.vector_store %arg6[%c0_72, %c0_73], %59 {strides = array<i32>} : memref<256x128xf32, #tpu.memory_space<vmem>>, vector<256x128xf32>,
    %c0_74 = arith.constant 0 : index
    %c2_75 = arith.constant 2 : index
    %c1_76 = arith.constant 1 : index
    %c0_77 = arith.constant 0 : index
    %61 = vector.load %arg1[%c0_74, %c2_75, %c1_76, %c0_77] : memref<1x18x18x128xbf16, #tpu.memory_space<vmem>>, vector<1x16x16x128xbf16>
    %62 = vector.shape_cast %61 : vector<1x16x16x128xbf16> to vector<16x16x128xbf16>
    %63 = vector.shape_cast %62 : vector<16x16x128xbf16> to vector<256x128xbf16>
    %c7 = arith.constant 7 : index
    %c0_78 = arith.constant 0 : index
    %c0_79 = arith.constant 0 : index
    %64 = vector.load %arg2[%c7, %c0_78, %c0_79] : memref<9x128x128xbf16, #tpu.memory_space<vmem>>, vector<1x128x128xbf16>
    %65 = vector.shape_cast %64 : vector<1x128x128xbf16> to vector<128x128xbf16>
    %cst_80 = arith.constant dense<0.000000e+00> : vector<256x128xf32>
    %66 = tpu.matmul %63, %65, %cst_80 {dimension_numbers = #tpu.dot_dimension_numbers<[1], [0], [0], [1], [0, 0, 1, 1], [], []>} : vector<256x128xbf16>, vector<128x128xbf16>, vector<256x128xf32> -> vector<256x128xf32>
    %c0_81 = arith.constant 0 : index
    %c0_82 = arith.constant 0 : index
    %67 = vector.load %arg6[%c0_81, %c0_82] : memref<256x128xf32, #tpu.memory_space<vmem>>, vector<256x128xf32>
    %68 = arith.addf %67, %66 : vector<256x128xf32>
    %c0_83 = arith.constant 0 : index
    %c0_84 = arith.constant 0 : index
    %69 = vector.load %arg6[%c0_83, %c0_84] : memref<256x128xf32, #tpu.memory_space<vmem>>, vector<256x128xf32>
    tpu.vector_store %arg6[%c0_83, %c0_84], %68 {strides = array<i32>} : memref<256x128xf32, #tpu.memory_space<vmem>>, vector<256x128xf32>,
    %c0_85 = arith.constant 0 : index
    %c2_86 = arith.constant 2 : index
    %c2_87 = arith.constant 2 : index
    %c0_88 = arith.constant 0 : index
    %70 = vector.load %arg1[%c0_85, %c2_86, %c2_87, %c0_88] : memref<1x18x18x128xbf16, #tpu.memory_space<vmem>>, vector<1x16x16x128xbf16>
    %71 = vector.shape_cast %70 : vector<1x16x16x128xbf16> to vector<16x16x128xbf16>
    %72 = vector.shape_cast %71 : vector<16x16x128xbf16> to vector<256x128xbf16>
    %c8 = arith.constant 8 : index
    %c0_89 = arith.constant 0 : index
    %c0_90 = arith.constant 0 : index
    %73 = vector.load %arg2[%c8, %c0_89, %c0_90] : memref<9x128x128xbf16, #tpu.memory_space<vmem>>, vector<1x128x128xbf16>
    %74 = vector.shape_cast %73 : vector<1x128x128xbf16> to vector<128x128xbf16>
    %cst_91 = arith.constant dense<0.000000e+00> : vector<256x128xf32>
    %75 = tpu.matmul %72, %74, %cst_91 {dimension_numbers = #tpu.dot_dimension_numbers<[1], [0], [0], [1], [0, 0, 1, 1], [], []>} : vector<256x128xbf16>, vector<128x128xbf16>, vector<256x128xf32> -> vector<256x128xf32>
    %c0_92 = arith.constant 0 : index
    %c0_93 = arith.constant 0 : index
    %76 = vector.load %arg6[%c0_92, %c0_93] : memref<256x128xf32, #tpu.memory_space<vmem>>, vector<256x128xf32>
    %77 = arith.addf %76, %75 : vector<256x128xf32>
    %c0_94 = arith.constant 0 : index
    %c0_95 = arith.constant 0 : index
    %78 = vector.load %arg6[%c0_94, %c0_95] : memref<256x128xf32, #tpu.memory_space<vmem>>, vector<256x128xf32>
    tpu.vector_store %arg6[%c0_94, %c0_95], %77 {strides = array<i32>} : memref<256x128xf32, #tpu.memory_space<vmem>>, vector<256x128xf32>,
    %c0_96 = arith.constant 0 : index
    %c0_97 = arith.constant 0 : index
    %79 = vector.load %arg6[%c0_96, %c0_97] : memref<256x128xf32, #tpu.memory_space<vmem>>, vector<256x128xf32>
    %80 = arith.truncf %79 : vector<256x128xf32> to vector<256x128xbf16>
    %c0_98 = arith.constant 0 : index
    %c0_99 = arith.constant 0 : index
    %c0_100 = arith.constant 0 : index
    %81 = vector.load %arg3[%c0_98, %c0_99, %c0_100] : memref<1x256x128xbf16, #tpu.memory_space<vmem>>, vector<1x256x128xbf16>
    %82 = vector.shape_cast %81 : vector<1x256x128xbf16> to vector<256x128xbf16>
    %83 = vector.shape_cast %80 : vector<256x128xbf16> to vector<1x256x128xbf16>
    tpu.vector_store %arg3[%c0_98, %c0_99, %c0_100], %83 {strides = array<i32>} : memref<1x256x128xbf16, #tpu.memory_space<vmem>>, vector<1x256x128xbf16>,
    %cst_101 = arith.constant dense<0.000000e+00> : vector<128xf32>
    %84 = vector.multi_reduction <add>, %79, %cst_101 [0] : vector<256x128xf32> to vector<128xf32>
    %85 = vector.shape_cast %84 : vector<128xf32> to vector<1x128xf32>
    %c0_102 = arith.constant 0 : index
    %c0_103 = arith.constant 0 : index
    %c0_104 = arith.constant 0 : index
    %86 = vector.load %arg4[%c0_102, %c0_103, %c0_104] : memref<1x1x128xf32, #tpu.memory_space<vmem>>, vector<1x1x128xf32>
    %87 = vector.shape_cast %86 : vector<1x1x128xf32> to vector<1x128xf32>
    %88 = vector.shape_cast %85 : vector<1x128xf32> to vector<1x1x128xf32>
    tpu.vector_store %arg4[%c0_102, %c0_103, %c0_104], %88 {strides = array<i32>} : memref<1x1x128xf32, #tpu.memory_space<vmem>>, vector<1x1x128xf32>,
    %89 = arith.mulf %79, %79 : vector<256x128xf32>
    %cst_105 = arith.constant dense<0.000000e+00> : vector<128xf32>
    %90 = vector.multi_reduction <add>, %89, %cst_105 [0] : vector<256x128xf32> to vector<128xf32>
    %91 = vector.shape_cast %90 : vector<128xf32> to vector<1x128xf32>
    %c0_106 = arith.constant 0 : index
    %c0_107 = arith.constant 0 : index
    %c0_108 = arith.constant 0 : index
    %92 = vector.load %arg5[%c0_106, %c0_107, %c0_108] : memref<1x1x128xf32, #tpu.memory_space<vmem>>, vector<1x1x128xf32>
    %93 = vector.shape_cast %92 : vector<1x1x128xf32> to vector<1x128xf32>
    %94 = vector.shape_cast %91 : vector<1x128xf32> to vector<1x1x128xf32>
    tpu.vector_store %arg5[%c0_106, %c0_107, %c0_108], %94 {strides = array<i32>} : memref<1x1x128xf32, #tpu.memory_space<vmem>>, vector<1x1x128xf32>,
    return
  }
  func.func @transform_0(%arg0: i32) -> (i32, i32, i32, i32) {
    %c0_i32 = arith.constant 0 : i32
    %c0_i32_0 = arith.constant 0 : i32
    %c0_i32_1 = arith.constant 0 : i32
    %c0_i32_2 = arith.constant 0 : i32
    return %arg0, %c0_i32, %c0_i32_0, %c0_i32_1 : i32, i32, i32, i32
  }
  func.func @transform_1(%arg0: i32) -> (i32, i32, i32) {
    %c0_i32 = arith.constant 0 : i32
    %c0_i32_0 = arith.constant 0 : i32
    %c0_i32_1 = arith.constant 0 : i32
    %c0_i32_2 = arith.constant 0 : i32
    return %c0_i32, %c0_i32_0, %c0_i32_1 : i32, i32, i32
  }
  func.func @transform_2(%arg0: i32) -> (i32, i32, i32) {
    %c0_i32 = arith.constant 0 : i32
    %c0_i32_0 = arith.constant 0 : i32
    %c0_i32_1 = arith.constant 0 : i32
    return %arg0, %c0_i32, %c0_i32_0 : i32, i32, i32
  }
  func.func @transform_3(%arg0: i32) -> (i32, i32, i32) {
    %c0_i32 = arith.constant 0 : i32
    %c0_i32_0 = arith.constant 0 : i32
    %c0_i32_1 = arith.constant 0 : i32
    return %arg0, %c0_i32, %c0_i32_0 : i32, i32, i32
  }
  func.func @transform_4(%arg0: i32) -> (i32, i32, i32) {
    %c0_i32 = arith.constant 0 : i32
    %c0_i32_0 = arith.constant 0 : i32
    %c0_i32_1 = arith.constant 0 : i32
    return %arg0, %c0_i32, %c0_i32_0 : i32, i32, i32
  }
}

</mosaic_0001>

<llo_original>
// kernel: tpu_custom_call.1
$region0: #{tpu_custom_call.1}
  #allocation0 [shape = 'u32[]', space=smem, size = 0x4, offset = 0x4, fixed_abs, tag = 'smem constant byte address 0x4 - core index']
  #allocation1 [shape = 'u32[144,128]{1,0:T(1,128)}', space=vmem, size = 0x12000, scoped, tag = 'internal scratch']
  #allocation2 [shape = 'f32[256,128]{1,0:T(8,128)}', space=vmem, size = 0x20000, scoped, tag = 'scratch operand']
  %s0 = inlined_call_operand.vmem [shape: bf16[2,18,18,128], index: 0, kind: input, shape index: {}]
  %s1 = inlined_call_operand.vmem [shape: bf16[9,128,128], index: 1, kind: input, shape index: {}]
  %s2 = inlined_call_operand.hbm [shape: bf16[2,256,128], index: 2, kind: output, shape index: {0}]
  %s3 = inlined_call_operand.hbm [shape: f32[2,1,128], index: 3, kind: output, shape index: {1}]
  %s4 = inlined_call_operand.hbm [shape: f32[2,1,128], index: 4, kind: output, shape index: {2}]
  %5 = xla_tuple %s2, %s3, %s4
  %s6 = sld [smem:[#allocation0]]
  $region57: #{tpu_custom_call.1} parent=0
    _
  %s8 = ssub.s32 1, %s6
  %s9 = scalar_select 0, %s8, %s6
  $region1: #{tpu_custom_call.1} parent=0
    #allocation3 [shape = 'u8[131072]{0}', space=vmem, size = 0x20000, scoped, tag = 'output window, operand 0']
    #allocation4 [shape = 's32[2]{0}', space=sflag, size = 0x8, scoped, tag = 'scoped memory for tpu_custom_call.1']
    #allocation5 [shape = 'u8[1024]{0}', space=vmem, size = 0x400, scoped, tag = 'output window, operand 1']
    #allocation6 [shape = 's32[2]{0}', space=sflag, size = 0x8, scoped, tag = 'scoped memory for tpu_custom_call.1']
    #allocation7 [shape = 'u8[1024]{0}', space=vmem, size = 0x400, scoped, tag = 'output window, operand 2']
    %10 = vsyncpa [#allocation4], 0
    %s11 = scalar_lea.sflag [#allocation4], 1
    %12 = vsyncpa %s11, 0
    %13 = vsyncpa [#allocation6], 0
    %s14 = scalar_lea.sflag [#allocation6], 1
    %15 = vsyncpa %s14, 0
    loop: start=0, step=1, limit=4
    $region2: #{tpu_custom_call.1} parent=1 // loop_pre_header
      _
    $region3: #{tpu_custom_call.1} parent=1 // loop_header
      %s17 = sphi 0, %s21
      %p18 = scmp.ge.s32.totalorder %s17, 4
      %s27 = sphi 0, %s29
      %s30 = sphi 0, %s27
      %s31 = sphi 0, %s30
      %s47 = sphi 0, %s31
      %s51 = sphi 0, %s51
      %s53 = sphi 0, %s51
      %s54 = sphi 0, %s53
      %s68 = sphi 0, %s54
      %s74 = sphi 0, %s76
      %s77 = sphi 0, %s74
      %s78 = sphi 0, %s77
      %s94 = sphi 0, %s78
      %s100 = sphi 0, %s102
      %s103 = sphi 0, %s100
      %s104 = sphi 0, %s103
      %s120 = sphi 0, %s104
      %s126 = sphi 0, %s128
      %s129 = sphi 0, %s126
      %s130 = sphi 0, %s129
      %s146 = sphi 0, %s130
    $region4: #{tpu_custom_call.1} parent=1 // loop_header_branch
      %20 = sbr.rel (%p18) target = $region8
    $region5: #{tpu_custom_call.1} parent=1 // loop_body
      %s22 = ssub.s32 %s17, 1
      %s23 = ssub.s32 %s17, 2
      %s24 = sadd.s32 %s17, 1
      %s25 = ssub.s32 %s17, %s24
      %p26 = scmp.eq.s32.totalorder %s25, 0
      %s28 = sadd.s32 %s27, 1
      %s29 = scalar_select %p26, %s27, %s28
      %p32 = pneg %p26
      %p33 = scmp.eq.s32.totalorder %s17, 1
      %p34 = por %p32, %p33
      %p35 = scmp.ne.s32.totalorder %s27, %s30
      %p36 = scmp.eq.s32.totalorder %s17, 0
      %p37 = por %p35, %p36
      %p38 = scmp.ne.s32.totalorder %s27, %s30
      %p39 = scmp.eq.s32.totalorder %s22, 1
      %p40 = por %p38, %p39
      %p41 = scmp.ne.s32.totalorder %s30, %s31
      %p42 = scmp.eq.s32.totalorder %s22, 0
      %p43 = por %p41, %p42
      %p44 = scmp.ne.s32.totalorder %s30, %s31
      %p45 = scmp.eq.s32.totalorder %s23, 1
      %p46 = por %p44, %p45
      %p48 = scmp.ne.s32.totalorder %s31, %s47
      %p49 = scmp.eq.s32.totalorder %s23, 0
      %p50 = por %p48, %p49
      %s52 = sadd.s32 %s51, 1
      %p55 = scmp.eq.s32.totalorder %s17, 1
      %p56 = scmp.ne.s32.totalorder %s51, %s53
      %p57 = scmp.eq.s32.totalorder %s17, 0
      %p58 = por %p56, %p57
      %p59 = scmp.ne.s32.totalorder %s51, %s53
      %p60 = scmp.eq.s32.totalorder %s22, 1
      %p61 = por %p59, %p60
      %p62 = scmp.ne.s32.totalorder %s53, %s54
      %p63 = scmp.eq.s32.totalorder %s22, 0
      %p64 = por %p62, %p63
      %p65 = scmp.ne.s32.totalorder %s53, %s54
      %p66 = scmp.eq.s32.totalorder %s23, 1
      %p67 = por %p65, %p66
      %p69 = scmp.ne.s32.totalorder %s54, %s68
      %p70 = scmp.eq.s32.totalorder %s23, 0
      %p71 = por %p69, %p70
      %s72 = ssub.s32 %s17, %s24
      %p73 = scmp.eq.s32.totalorder %s72, 0
      %s75 = sadd.s32 %s74, 1
      %s76 = scalar_select %p73, %s74, %s75
      %p79 = pneg %p73
      %p80 = scmp.eq.s32.totalorder %s17, 1
      %p81 = por %p79, %p80
      %p82 = scmp.ne.s32.totalorder %s74, %s77
      %p83 = scmp.eq.s32.totalorder %s17, 0
      %p84 = por %p82, %p83
      %p85 = scmp.ne.s32.totalorder %s74, %s77
      %p86 = scmp.eq.s32.totalorder %s22, 1
      %p87 = por %p85, %p86
      %p88 = scmp.ne.s32.totalorder %s77, %s78
      %p89 = scmp.eq.s32.totalorder %s22, 0
      %p90 = por %p88, %p89
      %p91 = scmp.ne.s32.totalorder %s77, %s78
      %p92 = scmp.eq.s32.totalorder %s23, 1
      %p93 = por %p91, %p92
      %p95 = scmp.ne.s32.totalorder %s78, %s94
      %p96 = scmp.eq.s32.totalorder %s23, 0
      %p97 = por %p95, %p96
      %s98 = ssub.s32 %s17, %s24
      %p99 = scmp.eq.s32.totalorder %s98, 0
      %s101 = sadd.s32 %s100, 1
      %s102 = scalar_select %p99, %s100, %s101
      %p105 = pneg %p99
      %p106 = scmp.eq.s32.totalorder %s17, 1
      %p107 = por %p105, %p106
      %p108 = scmp.ne.s32.totalorder %s100, %s103
      %p109 = scmp.eq.s32.totalorder %s17, 0
      %p110 = por %p108, %p109
      %p111 = scmp.ne.s32.totalorder %s100, %s103
      %p112 = scmp.eq.s32.totalorder %s22, 1
      %p113 = por %p111, %p112
      %p114 = scmp.ne.s32.totalorder %s103, %s104
      %p115 = scmp.eq.s32.totalorder %s22, 0
      %p116 = por %p114, %p115
      %p117 = scmp.ne.s32.totalorder %s103, %s104
      %p118 = scmp.eq.s32.totalorder %s23, 1
      %p119 = por %p117, %p118
      %p121 = scmp.ne.s32.totalorder %s104, %s120
      %p122 = scmp.eq.s32.totalorder %s23, 0
      %p123 = por %p121, %p122
      %s124 = ssub.s32 %s17, %s24
      %p125 = scmp.eq.s32.totalorder %s124, 0
      %s127 = sadd.s32 %s126, 1
      %s128 = scalar_select %p125, %s126, %s127
      %p131 = pneg %p125
      %p132 = scmp.eq.s32.totalorder %s17, 1
      %p133 = por %p131, %p132
      %p134 = scmp.ne.s32.totalorder %s126, %s129
      %p135 = scmp.eq.s32.totalorder %s17, 0
      %p136 = por %p134, %p135
      %p137 = scmp.ne.s32.totalorder %s126, %s129
      %p138 = scmp.eq.s32.totalorder %s22, 1
      %p139 = por %p137, %p138
      %p140 = scmp.ne.s32.totalorder %s129, %s130
      %p141 = scmp.eq.s32.totalorder %s22, 0
      %p142 = por %p140, %p141
      %p143 = scmp.ne.s32.totalorder %s129, %s130
      %p144 = scmp.eq.s32.totalorder %s23, 1
      %p145 = por %p143, %p144
      %p147 = scmp.ne.s32.totalorder %s130, %s146
      %p148 = scmp.eq.s32.totalorder %s23, 0
      %p149 = por %p147, %p148
      %p150 = scmp.le.s32.totalorder 1, %s17
      %p151 = scmp.lt.s32.totalorder %s17, 3
      %p152 = pnand %p150, %p151
      %p153 = pneg %p152
      // Predicated region
      $region9: #{tpu_custom_call.1} parent=5 // pred_check
        _
      $region10: #{tpu_custom_call.1} parent=5 // pred_check_branch
        %155 = sbr.rel (%p152) target = $region12
      $region11: #{tpu_custom_call.1} parent=5 // pred_region
        %s156 = ssub.s32 %s17, 1
        // Predicated region
        $region13: #{tpu_custom_call.1} parent=11 // pred_check
          %p157 = pneg %p64
        $region14: #{tpu_custom_call.1} parent=11 // pred_check_branch
          %159 = sbr.rel (%p157) target = $region16
        $region15: #{tpu_custom_call.1} parent=11 // pred_region
          _
        $region16: #{tpu_custom_call.1} parent=11 // pred_fallthru
          _
      $region12: #{tpu_custom_call.1} parent=5 // pred_fallthru
        _
      %p160 = scmp.lt.s32.totalorder %s17, 2
      // Predicated region
      $region17: #{tpu_custom_call.1} parent=5 // pred_check
        %p161 = pneg %p160
      $region18: #{tpu_custom_call.1} parent=5 // pred_check_branch
        %163 = sbr.rel (%p161) target = $region20
      $region19: #{tpu_custom_call.1} parent=5 // pred_region
        // Predicated region
        $region21: #{tpu_custom_call.1} parent=19 // pred_check
          %p164 = pneg %p37
        $region22: #{tpu_custom_call.1} parent=19 // pred_check_branch
          %166 = sbr.rel (%p164) target = $region24
        $region23: #{tpu_custom_call.1} parent=19 // pred_region
          %p167 = scmp.lt.s32.totalorder %s17, 1
          %s168 = scalar_select %p167, %s17, 1
          %s169 = smul.addr %s168, 54
          %s170 = smul.addr %s169, 4
          %s171 = scalar_lea.vmem %s0, %s170
        $region24: #{tpu_custom_call.1} parent=19 // pred_fallthru
          _
      $region20: #{tpu_custom_call.1} parent=5 // pred_fallthru
        _
      %p172 = scmp.le.s32.totalorder 1, %s17
      %p173 = scmp.lt.s32.totalorder %s17, 3
      %p174 = pnand %p172, %p173
      %p175 = pneg %p174
      // Predicated region
      $region25: #{tpu_custom_call.1} parent=5 // pred_check
        _
      $region26: #{tpu_custom_call.1} parent=5 // pred_check_branch
        %177 = sbr.rel (%p174) target = $region28
      $region27: #{tpu_custom_call.1} parent=5 // pred_region
        %s178 = ssub.s32 %s17, 1
        %p179 = scmp.lt.s32.totalorder %s22, 1
        %s180 = scalar_select %p179, %s22, 1
        %s181 = smul.addr %s180, 54
        %s182 = smul.addr %s181, 4
        %s183 = scalar_lea.vmem %s0, %s182
        %p184 = pneg %p43
        %p185 = pneg %p40
        %p186 = pneg %p64
        %p187 = pneg %p61
        %p188 = pneg %p90
        %p189 = pneg %p87
        %s190 = sand.u32 %s77, 1
        %s191 = scalar_lea.sflag [#allocation4], %s190
        %s192 = sand.u32 %s77, 1
        %s193 = smul.addr %s192, 128
        %s194 = scalar_lea.vmem [#allocation3], %s193
        %p195 = pneg %p116
        %p196 = pneg %p113
        %s197 = sand.u32 %s22, 1
        %s198 = scalar_lea.sflag [#allocation6], %s197
        %s199 = sand.u32 %s103, 1
        %s200 = scalar_lea.vmem [#allocation5], %s199
        %p201 = pneg %p142
        %p202 = pneg %p139
        %s203 = sand.u32 %s22, 1
        %s204 = scalar_lea.sflag [#allocation6], %s203
        %s205 = sand.u32 %s129, 1
        %s206 = scalar_lea.vmem [#allocation7], %s205
        %p207 = scmp.lt.s32.totalorder %s22, 1
        %s208 = scalar_select %p207, %s22, 1
        %s209 = smul.addr %s208, 54
        %s210 = smul.addr %s209, 4
        %s211 = scalar_lea.vmem %s0, %s210
        %v213 = vld [vmem:[%s211] sm:$0xf]
        %v214 = vld [vmem:[%s211 + $0x4] sm:$0xf]
        %v215 = vld [vmem:[%s211 + $0xc] sm:$0xf]
        %v216 = vld [vmem:[%s211 + $0x10] sm:$0xf]
        %v217 = vld [vmem:[%s211 + $0x18] sm:$0xf]
        %v218 = vld [vmem:[%s211 + $0x1c] sm:$0xf]
        %v219 = vld [vmem:[%s211 + $0x24] sm:$0xf]
        %v220 = vld [vmem:[%s211 + $0x28] sm:$0xf]
        %v221 = vld [vmem:[%s211 + $0x30] sm:$0xf]
        %v222 = vld [vmem:[%s211 + $0x34] sm:$0xf]
        %v223 = vld [vmem:[%s211 + $0x3c] sm:$0xf]
        %v224 = vld [vmem:[%s211 + $0x40] sm:$0xf]
        %v225 = vld [vmem:[%s211 + $0x48] sm:$0xf]
        %v226 = vld [vmem:[%s211 + $0x4c] sm:$0xf]
        %v227 = vld [vmem:[%s211 + $0x54] sm:$0xf]
        %v228 = vld [vmem:[%s211 + $0x58] sm:$0xf]
        %v229 = vld [vmem:[%s211 + $0x60] sm:$0xf]
        %v230 = vld [vmem:[%s211 + $0x64] sm:$0xf]
        %v231 = vld [vmem:[%s211 + $0x6c] sm:$0xf]
        %v232 = vld [vmem:[%s211 + $0x70] sm:$0xf]
        %v233 = vld [vmem:[%s211 + $0x78] sm:$0xf]
        %v234 = vld [vmem:[%s211 + $0x7c] sm:$0xf]
        %v235 = vld [vmem:[%s211 + $0x84] sm:$0xf]
        %v236 = vld [vmem:[%s211 + $0x88] sm:$0xf]
        %v237 = vld [vmem:[%s211 + $0x90] sm:$0xf]
        %v238 = vld [vmem:[%s211 + $0x94] sm:$0xf]
        %v239 = vld [vmem:[%s211 + $0x9c] sm:$0xf]
        %v240 = vld [vmem:[%s211 + $0xa0] sm:$0xf]
        %v241 = vld [vmem:[%s211 + $0xa8] sm:$0xf]
        %v242 = vld [vmem:[%s211 + $0xac] sm:$0xf]
        %v243 = vld [vmem:[%s211 + $0xb4] sm:$0xf]
        %v244 = vld [vmem:[%s211 + $0xb8] sm:$0xf]
        %v245 = vld [vmem:[%s1] sm:$0xf]
        %v246 = vld [vmem:[%s1 + $0x4] sm:$0xf]
        %v247 = vld [vmem:[%s1 + $0x8] sm:$0xf]
        %v248 = vld [vmem:[%s1 + $0xc] sm:$0xf]
        %v249 = vld [vmem:[%s1 + $0x10] sm:$0xf]
        %v250 = vld [vmem:[%s1 + $0x14] sm:$0xf]
        %v251 = vld [vmem:[%s1 + $0x18] sm:$0xf]
        %v252 = vld [vmem:[%s1 + $0x1c] sm:$0xf]
        %v253 = vld [vmem:[%s1 + $0x20] sm:$0xf]
        %v254 = vld [vmem:[%s1 + $0x24] sm:$0xf]
        %v255 = vld [vmem:[%s1 + $0x28] sm:$0xf]
        %v256 = vld [vmem:[%s1 + $0x2c] sm:$0xf]
        %v257 = vld [vmem:[%s1 + $0x30] sm:$0xf]
        %v258 = vld [vmem:[%s1 + $0x34] sm:$0xf]
        %v259 = vld [vmem:[%s1 + $0x38] sm:$0xf]
        %v260 = vld [vmem:[%s1 + $0x3c] sm:$0xf]
        %v293 = vunpack.c.l.b16 %v213
        %v294 = vunpack.c.l.b16 %v214
        %v295 = vunpack.c.l.b16 %v215
        %v296 = vunpack.c.l.b16 %v216
        %v297 = vunpack.c.l.b16 %v217
        %v298 = vunpack.c.l.b16 %v218
        %v299 = vunpack.c.l.b16 %v219
        %v300 = vunpack.c.l.b16 %v220
        %v301 = vunpack.c.l.b16 %v221
        %v302 = vunpack.c.l.b16 %v222
        %v303 = vunpack.c.l.b16 %v223
        %v304 = vunpack.c.l.b16 %v224
        %v305 = vunpack.c.l.b16 %v225
        %v306 = vunpack.c.l.b16 %v226
        %v307 = vunpack.c.l.b16 %v227
        %v308 = vunpack.c.l.b16 %v228
        %v309 = vunpack.c.l.b16 %v229
        %v310 = vunpack.c.l.b16 %v230
        %v311 = vunpack.c.l.b16 %v231
        %v312 = vunpack.c.l.b16 %v232
        %v313 = vunpack.c.l.b16 %v233
        %v314 = vunpack.c.l.b16 %v234
        %v315 = vunpack.c.l.b16 %v235
        %v316 = vunpack.c.l.b16 %v236
        %v317 = vunpack.c.l.b16 %v237
        %v318 = vunpack.c.l.b16 %v238
        %v319 = vunpack.c.l.b16 %v239
        %v320 = vunpack.c.l.b16 %v240
        %v321 = vunpack.c.l.b16 %v241
        %v322 = vunpack.c.l.b16 %v242
        %v323 = vunpack.c.l.b16 %v243
        %v324 = vunpack.c.l.b16 %v244
        %v325 = vpack.c.b16 %v294, %v293
        %v326 = vpack.c.b16 %v296, %v295
        %v327 = vpack.c.b16 %v298, %v297
        %v328 = vpack.c.b16 %v300, %v299
        %v329 = vpack.c.b16 %v302, %v301
        %v330 = vpack.c.b16 %v304, %v303
        %v331 = vpack.c.b16 %v306, %v305
        %v332 = vpack.c.b16 %v308, %v307
        %v333 = vpack.c.b16 %v310, %v309
        %v334 = vpack.c.b16 %v312, %v311
        %v335 = vpack.c.b16 %v314, %v313
        %v336 = vpack.c.b16 %v316, %v315
        %v337 = vpack.c.b16 %v318, %v317
        %v338 = vpack.c.b16 %v320, %v319
        %v339 = vpack.c.b16 %v322, %v321
        %v340 = vpack.c.b16 %v324, %v323
        %v373 = vunpack.c.l.b16 %v245
        %v374 = vunpack.c.l.b16 %v246
        %v375 = vunpack.c.l.b16 %v247
        %v376 = vunpack.c.l.b16 %v248
        %v377 = vunpack.c.l.b16 %v249
        %v378 = vunpack.c.l.b16 %v250
        %v379 = vunpack.c.l.b16 %v251
        %v380 = vunpack.c.l.b16 %v252
        %v381 = vunpack.c.l.b16 %v253
        %v382 = vunpack.c.l.b16 %v254
        %v383 = vunpack.c.l.b16 %v255
        %v384 = vunpack.c.l.b16 %v256
        %v385 = vunpack.c.l.b16 %v257
        %v386 = vunpack.c.l.b16 %v258
        %v387 = vunpack.c.l.b16 %v259
        %v388 = vunpack.c.l.b16 %v260
        %v389 = vpack.c.b16 %v374, %v373
        %v390 = vpack.c.b16 %v376, %v375
        %v391 = vpack.c.b16 %v378, %v377
        %v392 = vpack.c.b16 %v380, %v379
        %v393 = vpack.c.b16 %v382, %v381
        %v394 = vpack.c.b16 %v384, %v383
        %v395 = vpack.c.b16 %v386, %v385
        %v396 = vpack.c.b16 %v388, %v387
        %405 = vmatprep.subr.bf16.mxu0 0
        %406 = vmatpush1.bf16.msra.mxu0 %v389
        %407 = vmatprep.subr.bf16.mxu0 0
        %408 = vmatpush1.bf16.msra.mxu0 %v390
        %409 = vmatprep.subr.bf16.mxu0 0
        %410 = vmatpush1.bf16.msra.mxu0 %v391
        %411 = vmatprep.subr.bf16.mxu0 0
        %412 = vmatpush1.bf16.msra.mxu0 %v392
        %413 = vmatprep.subr.bf16.mxu0 0
        %414 = vmatpush1.bf16.msra.mxu0 %v393
        %415 = vmatprep.subr.bf16.mxu0 0
        %416 = vmatpush1.bf16.msra.mxu0 %v394
        %417 = vmatprep.subr.bf16.mxu0 0
        %418 = vmatpush1.bf16.msra.mxu0 %v395
        %419 = vmatprep.subr.bf16.mxu0 0
        %420 = vmatpush1.bf16.msra.mxu0 %v396
        %421 = vmatprep.subr.bf16.mxu0 0
        %422 = vmatpush1.bf16.msra.mxu0 0
        %423 = vmatprep.subr.bf16.mxu0 0
        %424 = vmatpush1.bf16.msra.mxu0 0
        %425 = vmatprep.subr.bf16.mxu0 0
        %426 = vmatpush1.bf16.msra.mxu0 0
        %427 = vmatprep.subr.bf16.mxu0 0
        %428 = vmatpush1.bf16.msra.mxu0 0
        %429 = vmatprep.subr.bf16.mxu0 0
        %430 = vmatpush1.bf16.msra.mxu0 0
        %431 = vmatprep.subr.bf16.mxu0 0
        %432 = vmatpush1.bf16.msra.mxu0 0
        %433 = vmatprep.subr.bf16.mxu0 0
        %434 = vmatpush1.bf16.msra.mxu0 0
        %435 = vmatprep.subr.bf16.mxu0 0
        %436 = vmatpush1.bf16.msra.mxu0 0
        %437 = vmatprep.mubr.bf16.mxu0 0
        %438 = vmatmul.mubr.bf16.gmra.mrb[0].mxu0 %v325
        %v439 = vpop.f32.mrb[0].mxu0
        %v440 = vadd.f32 0.0, %v439
        %v441 = vpop.f32.mrb[0].mxu0
        %v442 = vpop.f32.mrb[0].mxu0
        %v443 = vadd.f32 0.0, %v442
        %v444 = vpop.f32.mrb[0].mxu0
        %445 = vmatprep.mubr.bf16.mxu0 0
        %446 = vmatmul.mubr.bf16.gmra.mrb[0].mxu0 %v326
        %v447 = vpop.f32.mrb[0].mxu0
        %v448 = vadd.f32 0.0, %v447
        %v449 = vpop.f32.mrb[0].mxu0
        %v450 = vpop.f32.mrb[0].mxu0
        %v451 = vadd.f32 0.0, %v450
        %v452 = vpop.f32.mrb[0].mxu0
        %453 = vmatprep.mubr.bf16.mxu0 0
        %454 = vmatmul.mubr.bf16.gmra.mrb[0].mxu0 %v327
        %v455 = vpop.f32.mrb[0].mxu0
        %v456 = vadd.f32 0.0, %v455
        %v457 = vpop.f32.mrb[0].mxu0
        %v458 = vpop.f32.mrb[0].mxu0
        %v459 = vadd.f32 0.0, %v458
        %v460 = vpop.f32.mrb[0].mxu0
        %461 = vmatprep.mubr.bf16.mxu0 0
        %462 = vmatmul.mubr.bf16.gmra.mrb[0].mxu0 %v328
        %v463 = vpop.f32.mrb[0].mxu0
        %v464 = vadd.f32 0.0, %v463
        %v465 = vpop.f32.mrb[0].mxu0
        %v466 = vpop.f32.mrb[0].mxu0
        %v467 = vadd.f32 0.0, %v466
        %v468 = vpop.f32.mrb[0].mxu0
        %469 = vmatprep.mubr.bf16.mxu0 0
        %470 = vmatmul.mubr.bf16.gmra.mrb[0].mxu0 %v329
        %v471 = vpop.f32.mrb[0].mxu0
        %v472 = vadd.f32 0.0, %v471
        %v473 = vpop.f32.mrb[0].mxu0
        %v474 = vpop.f32.mrb[0].mxu0
        %v475 = vadd.f32 0.0, %v474
        %v476 = vpop.f32.mrb[0].mxu0
        %477 = vmatprep.mubr.bf16.mxu0 0
        %478 = vmatmul.mubr.bf16.gmra.mrb[0].mxu0 %v330
        %v479 = vpop.f32.mrb[0].mxu0
        %v480 = vadd.f32 0.0, %v479
        %v481 = vpop.f32.mrb[0].mxu0
        %v482 = vpop.f32.mrb[0].mxu0
        %v483 = vadd.f32 0.0, %v482
        %v484 = vpop.f32.mrb[0].mxu0
        %485 = vmatprep.mubr.bf16.mxu0 0
        %486 = vmatmul.mubr.bf16.gmra.mrb[0].mxu0 %v331
        %v487 = vpop.f32.mrb[0].mxu0
        %v488 = vadd.f32 0.0, %v487
        %v489 = vpop.f32.mrb[0].mxu0
        %v490 = vpop.f32.mrb[0].mxu0
        %v491 = vadd.f32 0.0, %v490
        %v492 = vpop.f32.mrb[0].mxu0
        %493 = vmatprep.mubr.bf16.mxu0 0
        %494 = vmatmul.mubr.bf16.gmra.mrb[0].mxu0 %v332
        %v495 = vpop.f32.mrb[0].mxu0
        %v496 = vadd.f32 0.0, %v495
        %v497 = vpop.f32.mrb[0].mxu0
        %v498 = vpop.f32.mrb[0].mxu0
        %v499 = vadd.f32 0.0, %v498
        %v500 = vpop.f32.mrb[0].mxu0
        %501 = vmatprep.mubr.bf16.mxu0 0
        %502 = vmatmul.mubr.bf16.gmra.mrb[0].mxu0 %v333
        %v503 = vpop.f32.mrb[0].mxu0
        %v504 = vadd.f32 0.0, %v503
        %v505 = vpop.f32.mrb[0].mxu0
        %v506 = vpop.f32.mrb[0].mxu0
        %v507 = vadd.f32 0.0, %v506
        %v508 = vpop.f32.mrb[0].mxu0
        %509 = vmatprep.mubr.bf16.mxu0 0
        %510 = vmatmul.mubr.bf16.gmra.mrb[0].mxu0 %v334
        %v511 = vpop.f32.mrb[0].mxu0
        %v512 = vadd.f32 0.0, %v511
        %v513 = vpop.f32.mrb[0].mxu0
        %v514 = vpop.f32.mrb[0].mxu0
        %v515 = vadd.f32 0.0, %v514
        %v516 = vpop.f32.mrb[0].mxu0
        %517 = vmatprep.mubr.bf16.mxu0 0
        %518 = vmatmul.mubr.bf16.gmra.mrb[0].mxu0 %v335
        %v519 = vpop.f32.mrb[0].mxu0
        %v520 = vadd.f32 0.0, %v519
        %v521 = vpop.f32.mrb[0].mxu0
        %v522 = vpop.f32.mrb[0].mxu0
        %v523 = vadd.f32 0.0, %v522
        %v524 = vpop.f32.mrb[0].mxu0
        %525 = vmatprep.mubr.bf16.mxu0 0
        %526 = vmatmul.mubr.bf16.gmra.mrb[0].mxu0 %v336
        %v527 = vpop.f32.mrb[0].mxu0
        %v528 = vadd.f32 0.0, %v527
        %v529 = vpop.f32.mrb[0].mxu0
        %v530 = vpop.f32.mrb[0].mxu0
        %v531 = vadd.f32 0.0, %v530
        %v532 = vpop.f32.mrb[0].mxu0
        %533 = vmatprep.mubr.bf16.mxu0 0
        %534 = vmatmul.mubr.bf16.gmra.mrb[0].mxu0 %v337
        %v535 = vpop.f32.mrb[0].mxu0
        %v536 = vadd.f32 0.0, %v535
        %v537 = vpop.f32.mrb[0].mxu0
        %v538 = vpop.f32.mrb[0].mxu0
        %v539 = vadd.f32 0.0, %v538
        %v540 = vpop.f32.mrb[0].mxu0
        %541 = vmatprep.mubr.bf16.mxu0 0
        %542 = vmatmul.mubr.bf16.gmra.mrb[0].mxu0 %v338
        %v543 = vpop.f32.mrb[0].mxu0
        %v544 = vadd.f32 0.0, %v543
        %v545 = vpop.f32.mrb[0].mxu0
        %v546 = vpop.f32.mrb[0].mxu0
        %v547 = vadd.f32 0.0, %v546
        %v548 = vpop.f32.mrb[0].mxu0
        %549 = vmatprep.mubr.bf16.mxu0 0
        %550 = vmatmul.mubr.bf16.gmra.mrb[0].mxu0 %v339
        %v551 = vpop.f32.mrb[0].mxu0
        %v552 = vadd.f32 0.0, %v551
        %v553 = vpop.f32.mrb[0].mxu0
        %v554 = vpop.f32.mrb[0].mxu0
        %v555 = vadd.f32 0.0, %v554
        %v556 = vpop.f32.mrb[0].mxu0
        %557 = vmatprep.mubr.bf16.mxu0 0
        %558 = vmatmul.mubr.bf16.gmra.mrb[0].mxu0 %v340
        %v559 = vpop.f32.mrb[0].mxu0
        %v560 = vadd.f32 0.0, %v559
        %v561 = vpop.f32.mrb[0].mxu0
        %v562 = vpop.f32.mrb[0].mxu0
        %v563 = vadd.f32 0.0, %v562
        %v564 = vpop.f32.mrb[0].mxu0
        %565 = vdwg.mxu0
        %566 = vst [vmem:[#allocation2] sm:$0xff] %v440
        %567 = vst [vmem:[#allocation2 + $0x8] sm:$0xff] %v443
        %568 = vst [vmem:[#allocation2 + $0x10] sm:$0xff] %v448
        %569 = vst [vmem:[#allocation2 + $0x18] sm:$0xff] %v451
        %570 = vst [vmem:[#allocation2 + $0x20] sm:$0xff] %v456
        %571 = vst [vmem:[#allocation2 + $0x28] sm:$0xff] %v459
        %572 = vst [vmem:[#allocation2 + $0x30] sm:$0xff] %v464
        %573 = vst [vmem:[#allocation2 + $0x38] sm:$0xff] %v467
        %574 = vst [vmem:[#allocation2 + $0x40] sm:$0xff] %v472
        %575 = vst [vmem:[#allocation2 + $0x48] sm:$0xff] %v475
        %576 = vst [vmem:[#allocation2 + $0x50] sm:$0xff] %v480
        %577 = vst [vmem:[#allocation2 + $0x58] sm:$0xff] %v483
        %578 = vst [vmem:[#allocation2 + $0x60] sm:$0xff] %v488
        %579 = vst [vmem:[#allocation2 + $0x68] sm:$0xff] %v491
        %580 = vst [vmem:[#allocation2 + $0x70] sm:$0xff] %v496
        %581 = vst [vmem:[#allocation2 + $0x78] sm:$0xff] %v499
        %582 = vst [vmem:[#allocation2 + $0x80] sm:$0xff] %v504
        %583 = vst [vmem:[#allocation2 + $0x88] sm:$0xff] %v507
        %584 = vst [vmem:[#allocation2 + $0x90] sm:$0xff] %v512
        %585 = vst [vmem:[#allocation2 + $0x98] sm:$0xff] %v515
        %586 = vst [vmem:[#allocation2 + $0xa0] sm:$0xff] %v520
        %587 = vst [vmem:[#allocation2 + $0xa8] sm:$0xff] %v523
        %588 = vst [vmem:[#allocation2 + $0xb0] sm:$0xff] %v528
        %589 = vst [vmem:[#allocation2 + $0xb8] sm:$0xff] %v531
        %590 = vst [vmem:[#allocation2 + $0xc0] sm:$0xff] %v536
        %591 = vst [vmem:[#allocation2 + $0xc8] sm:$0xff] %v539
        %592 = vst [vmem:[#allocation2 + $0xd0] sm:$0xff] %v544
        %593 = vst [vmem:[#allocation2 + $0xd8] sm:$0xff] %v547
        %594 = vst [vmem:[#allocation2 + $0xe0] sm:$0xff] %v552
        %595 = vst [vmem:[#allocation2 + $0xe8] sm:$0xff] %v555
        %596 = vst [vmem:[#allocation2 + $0xf0] sm:$0xff] %v560
        %597 = vst [vmem:[#allocation2 + $0xf8] sm:$0xff] %v563
        %v598 = vld [vmem:[%s211] sm:$0xf]
        %v599 = vld [vmem:[%s211 + $0x4] sm:$0xf]
        %v600 = vld [vmem:[%s211 + $0x8] sm:$0x1]
        %v601 = vld [vmem:[%s211 + $0xc] sm:$0xf]
        %v602 = vld [vmem:[%s211 + $0x10] sm:$0xf]
        %v603 = vld [vmem:[%s211 + $0x14] sm:$0x1]
        %v604 = vld [vmem:[%s211 + $0x18] sm:$0xf]
        %v605 = vld [vmem:[%s211 + $0x1c] sm:$0xf]
        %v606 = vld [vmem:[%s211 + $0x20] sm:$0x1]
        %v607 = vld [vmem:[%s211 + $0x24] sm:$0xf]
        %v608 = vld [vmem:[%s211 + $0x28] sm:$0xf]
        %v609 = vld [vmem:[%s211 + $0x2c] sm:$0x1]
        %v610 = vld [vmem:[%s211 + $0x30] sm:$0xf]
        %v611 = vld [vmem:[%s211 + $0x34] sm:$0xf]
        %v612 = vld [vmem:[%s211 + $0x38] sm:$0x1]
        %v613 = vld [vmem:[%s211 + $0x3c] sm:$0xf]
        %v614 = vld [vmem:[%s211 + $0x40] sm:$0xf]
        %v615 = vld [vmem:[%s211 + $0x44] sm:$0x1]
        %v616 = vld [vmem:[%s211 + $0x48] sm:$0xf]
        %v617 = vld [vmem:[%s211 + $0x4c] sm:$0xf]
        %v618 = vld [vmem:[%s211 + $0x50] sm:$0x1]
        %v619 = vld [vmem:[%s211 + $0x54] sm:$0xf]
        %v620 = vld [vmem:[%s211 + $0x58] sm:$0xf]
        %v621 = vld [vmem:[%s211 + $0x5c] sm:$0x1]
        %v622 = vld [vmem:[%s211 + $0x60] sm:$0xf]
        %v623 = vld [vmem:[%s211 + $0x64] sm:$0xf]
        %v624 = vld [vmem:[%s211 + $0x68] sm:$0x1]
        %v625 = vld [vmem:[%s211 + $0x6c] sm:$0xf]
        %v626 = vld [vmem:[%s211 + $0x70] sm:$0xf]
        %v627 = vld [vmem:[%s211 + $0x74] sm:$0x1]
        %v628 = vld [vmem:[%s211 + $0x78] sm:$0xf]
        %v629 = vld [vmem:[%s211 + $0x7c] sm:$0xf]
        %v630 = vld [vmem:[%s211 + $0x80] sm:$0x1]
        %v631 = vld [vmem:[%s211 + $0x84] sm:$0xf]
        %v632 = vld [vmem:[%s211 + $0x88] sm:$0xf]
        %v633 = vld [vmem:[%s211 + $0x8c] sm:$0x1]
        %v634 = vld [vmem:[%s211 + $0x90] sm:$0xf]
        %v635 = vld [vmem:[%s211 + $0x94] sm:$0xf]
        %v636 = vld [vmem:[%s211 + $0x98] sm:$0x1]
        %v637 = vld [vmem:[%s211 + $0x9c] sm:$0xf]
        %v638 = vld [vmem:[%s211 + $0xa0] sm:$0xf]
        %v639 = vld [vmem:[%s211 + $0xa4] sm:$0x1]
        %v640 = vld [vmem:[%s211 + $0xa8] sm:$0xf]
        %v641 = vld [vmem:[%s211 + $0xac] sm:$0xf]
        %v642 = vld [vmem:[%s211 + $0xb0] sm:$0x1]
        %v643 = vld [vmem:[%s211 + $0xb4] sm:$0xf]
        %v644 = vld [vmem:[%s211 + $0xb8] sm:$0xf]
        %v645 = vld [vmem:[%s211 + $0xbc] sm:$0x1]
        %vm646 = vsmask.f32 3328
        %vm647 = vsmask.f32 7440
        %vm648 = vmor %vm646, %vm647
        %v650 = vshrl.u32 %v598, 16
        %v652 = vrot.slane %v650, 4
        %v653 = vshll.u32 %v598, 16
        %v655 = vrot.slane %v653, 5
        %v656 = vor.u32 %v652, %v655
        %v657 = vrot.slane %v656, 4
        %v659 = vshll.u32 %v599, 16
        %v661 = vrot.slane %v659, 5
        %v662 = vsel %vm648, %v657, %v661
        %v663 = vshrl.u32 %v599, 16
        %v665 = vrot.slane %v663, 4
        %v666 = vor.u32 %v665, %v661
        %v667 = vrot.slane %v666, 4
        %v669 = vshll.u32 %v600, 16
        %v671 = vrot.slane %v669, 5
        %v672 = vsel %vm648, %v667, %v671
        %v674 = vshrl.u32 %v601, 16
        %v676 = vrot.slane %v674, 4
        %v677 = vshll.u32 %v601, 16
        %v679 = vrot.slane %v677, 5
        %v680 = vor.u32 %v676, %v679
        %v681 = vrot.slane %v680, 4
        %v683 = vshll.u32 %v602, 16
        %v685 = vrot.slane %v683, 5
        %v686 = vsel %vm648, %v681, %v685
        %v687 = vshrl.u32 %v602, 16
        %v689 = vrot.slane %v687, 4
        %v690 = vor.u32 %v689, %v685
        %v691 = vrot.slane %v690, 4
        %v693 = vshll.u32 %v603, 16
        %v695 = vrot.slane %v693, 5
        %v696 = vsel %vm648, %v691, %v695
        %v698 = vshrl.u32 %v604, 16
        %v700 = vrot.slane %v698, 4
        %v701 = vshll.u32 %v604, 16
        %v703 = vrot.slane %v701, 5
        %v704 = vor.u32 %v700, %v703
        %v705 = vrot.slane %v704, 4
        %v707 = vshll.u32 %v605, 16
        %v709 = vrot.slane %v707, 5
        %v710 = vsel %vm648, %v705, %v709
        %v711 = vshrl.u32 %v605, 16
        %v713 = vrot.slane %v711, 4
        %v714 = vor.u32 %v713, %v709
        %v715 = vrot.slane %v714, 4
        %v717 = vshll.u32 %v606, 16
        %v719 = vrot.slane %v717, 5
        %v720 = vsel %vm648, %v715, %v719
        %v722 = vshrl.u32 %v607, 16
        %v724 = vrot.slane %v722, 4
        %v725 = vshll.u32 %v607, 16
        %v727 = vrot.slane %v725, 5
        %v728 = vor.u32 %v724, %v727
        %v729 = vrot.slane %v728, 4
        %v731 = vshll.u32 %v608, 16
        %v733 = vrot.slane %v731, 5
        %v734 = vsel %vm648, %v729, %v733
        %v735 = vshrl.u32 %v608, 16
        %v737 = vrot.slane %v735, 4
        %v738 = vor.u32 %v737, %v733
        %v739 = vrot.slane %v738, 4
        %v741 = vshll.u32 %v609, 16
        %v743 = vrot.slane %v741, 5
        %v744 = vsel %vm648, %v739, %v743
        %v746 = vshrl.u32 %v610, 16
        %v748 = vrot.slane %v746, 4
        %v749 = vshll.u32 %v610, 16
        %v751 = vrot.slane %v749, 5
        %v752 = vor.u32 %v748, %v751
        %v753 = vrot.slane %v752, 4
        %v755 = vshll.u32 %v611, 16
        %v757 = vrot.slane %v755, 5
        %v758 = vsel %vm648, %v753, %v757
        %v759 = vshrl.u32 %v611, 16
        %v761 = vrot.slane %v759, 4
        %v762 = vor.u32 %v761, %v757
        %v763 = vrot.slane %v762, 4
        %v765 = vshll.u32 %v612, 16
        %v767 = vrot.slane %v765, 5
        %v768 = vsel %vm648, %v763, %v767
        %v770 = vshrl.u32 %v613, 16
        %v772 = vrot.slane %v770, 4
        %v773 = vshll.u32 %v613, 16
        %v775 = vrot.slane %v773, 5
        %v776 = vor.u32 %v772, %v775
        %v777 = vrot.slane %v776, 4
        %v779 = vshll.u32 %v614, 16
        %v781 = vrot.slane %v779, 5
        %v782 = vsel %vm648, %v777, %v781
        %v783 = vshrl.u32 %v614, 16
        %v785 = vrot.slane %v783, 4
        %v786 = vor.u32 %v785, %v781
        %v787 = vrot.slane %v786, 4
        %v789 = vshll.u32 %v615, 16
        %v791 = vrot.slane %v789, 5
        %v792 = vsel %vm648, %v787, %v791
        %v794 = vshrl.u32 %v616, 16
        %v796 = vrot.slane %v794, 4
        %v797 = vshll.u32 %v616, 16
        %v799 = vrot.slane %v797, 5
        %v800 = vor.u32 %v796, %v799
        %v801 = vrot.slane %v800, 4
        %v803 = vshll.u32 %v617, 16
        %v805 = vrot.slane %v803, 5
        %v806 = vsel %vm648, %v801, %v805
        %v807 = vshrl.u32 %v617, 16
        %v809 = vrot.slane %v807, 4
        %v810 = vor.u32 %v809, %v805
        %v811 = vrot.slane %v810, 4
        %v813 = vshll.u32 %v618, 16
        %v815 = vrot.slane %v813, 5
        %v816 = vsel %vm648, %v811, %v815
        %v818 = vshrl.u32 %v619, 16
        %v820 = vrot.slane %v818, 4
        %v821 = vshll.u32 %v619, 16
        %v823 = vrot.slane %v821, 5
        %v824 = vor.u32 %v820, %v823
        %v825 = vrot.slane %v824, 4
        %v827 = vshll.u32 %v620, 16
        %v829 = vrot.slane %v827, 5
        %v830 = vsel %vm648, %v825, %v829
        %v831 = vshrl.u32 %v620, 16
        %v833 = vrot.slane %v831, 4
        %v834 = vor.u32 %v833, %v829
        %v835 = vrot.slane %v834, 4
        %v837 = vshll.u32 %v621, 16
        %v839 = vrot.slane %v837, 5
        %v840 = vsel %vm648, %v835, %v839
        %v842 = vshrl.u32 %v622, 16
        %v844 = vrot.slane %v842, 4
        %v845 = vshll.u32 %v622, 16
        %v847 = vrot.slane %v845, 5
        %v848 = vor.u32 %v844, %v847
        %v849 = vrot.slane %v848, 4
        %v851 = vshll.u32 %v623, 16
        %v853 = vrot.slane %v851, 5
        %v854 = vsel %vm648, %v849, %v853
        %v855 = vshrl.u32 %v623, 16
        %v857 = vrot.slane %v855, 4
        %v858 = vor.u32 %v857, %v853
        %v859 = vrot.slane %v858, 4
        %v861 = vshll.u32 %v624, 16
        %v863 = vrot.slane %v861, 5
        %v864 = vsel %vm648, %v859, %v863
        %v866 = vshrl.u32 %v625, 16
        %v868 = vrot.slane %v866, 4
        %v869 = vshll.u32 %v625, 16
        %v871 = vrot.slane %v869, 5
        %v872 = vor.u32 %v868, %v871
        %v873 = vrot.slane %v872, 4
        %v875 = vshll.u32 %v626, 16
        %v877 = vrot.slane %v875, 5
        %v878 = vsel %vm648, %v873, %v877
        %v879 = vshrl.u32 %v626, 16
        %v881 = vrot.slane %v879, 4
        %v882 = vor.u32 %v881, %v877
        %v883 = vrot.slane %v882, 4
        %v885 = vshll.u32 %v627, 16
        %v887 = vrot.slane %v885, 5
        %v888 = vsel %vm648, %v883, %v887
        %v890 = vshrl.u32 %v628, 16
        %v892 = vrot.slane %v890, 4
        %v893 = vshll.u32 %v628, 16
        %v895 = vrot.slane %v893, 5
        %v896 = vor.u32 %v892, %v895
        %v897 = vrot.slane %v896, 4
        %v899 = vshll.u32 %v629, 16
        %v901 = vrot.slane %v899, 5
        %v902 = vsel %vm648, %v897, %v901
        %v903 = vshrl.u32 %v629, 16
        %v905 = vrot.slane %v903, 4
        %v906 = vor.u32 %v905, %v901
        %v907 = vrot.slane %v906, 4
        %v909 = vshll.u32 %v630, 16
        %v911 = vrot.slane %v909, 5
        %v912 = vsel %vm648, %v907, %v911
        %v914 = vshrl.u32 %v631, 16
        %v916 = vrot.slane %v914, 4
        %v917 = vshll.u32 %v631, 16
        %v919 = vrot.slane %v917, 5
        %v920 = vor.u32 %v916, %v919
        %v921 = vrot.slane %v920, 4
        %v923 = vshll.u32 %v632, 16
        %v925 = vrot.slane %v923, 5
        %v926 = vsel %vm648, %v921, %v925
        %v927 = vshrl.u32 %v632, 16
        %v929 = vrot.slane %v927, 4
        %v930 = vor.u32 %v929, %v925
        %v931 = vrot.slane %v930, 4
        %v933 = vshll.u32 %v633, 16
        %v935 = vrot.slane %v933, 5
        %v936 = vsel %vm648, %v931, %v935
        %v938 = vshrl.u32 %v634, 16
        %v940 = vrot.slane %v938, 4
        %v941 = vshll.u32 %v634, 16
        %v943 = vrot.slane %v941, 5
        %v944 = vor.u32 %v940, %v943
        %v945 = vrot.slane %v944, 4
        %v947 = vshll.u32 %v635, 16
        %v949 = vrot.slane %v947, 5
        %v950 = vsel %vm648, %v945, %v949
        %v951 = vshrl.u32 %v635, 16
        %v953 = vrot.slane %v951, 4
        %v954 = vor.u32 %v953, %v949
        %v955 = vrot.slane %v954, 4
        %v957 = vshll.u32 %v636, 16
        %v959 = vrot.slane %v957, 5
        %v960 = vsel %vm648, %v955, %v959
        %v962 = vshrl.u32 %v637, 16
        %v964 = vrot.slane %v962, 4
        %v965 = vshll.u32 %v637, 16
        %v967 = vrot.slane %v965, 5
        %v968 = vor.u32 %v964, %v967
        %v969 = vrot.slane %v968, 4
        %v971 = vshll.u32 %v638, 16
        %v973 = vrot.slane %v971, 5
        %v974 = vsel %vm648, %v969, %v973
        %v975 = vshrl.u32 %v638, 16
        %v977 = vrot.slane %v975, 4
        %v978 = vor.u32 %v977, %v973
        %v979 = vrot.slane %v978, 4
        %v981 = vshll.u32 %v639, 16
        %v983 = vrot.slane %v981, 5
        %v984 = vsel %vm648, %v979, %v983
        %v986 = vshrl.u32 %v640, 16
        %v988 = vrot.slane %v986, 4
        %v989 = vshll.u32 %v640, 16
        %v991 = vrot.slane %v989, 5
        %v992 = vor.u32 %v988, %v991
        %v993 = vrot.slane %v992, 4
        %v995 = vshll.u32 %v641, 16
        %v997 = vrot.slane %v995, 5
        %v998 = vsel %vm648, %v993, %v997
        %v999 = vshrl.u32 %v641, 16
        %v1001 = vrot.slane %v999, 4
        %v1002 = vor.u32 %v1001, %v997
        %v1003 = vrot.slane %v1002, 4
        %v1005 = vshll.u32 %v642, 16
        %v1007 = vrot.slane %v1005, 5
        %v1008 = vsel %vm648, %v1003, %v1007
        %v1010 = vshrl.u32 %v643, 16
        %v1012 = vrot.slane %v1010, 4
        %v1013 = vshll.u32 %v643, 16
        %v1015 = vrot.slane %v1013, 5
        %v1016 = vor.u32 %v1012, %v1015
        %v1017 = vrot.slane %v1016, 4
        %v1019 = vshll.u32 %v644, 16
        %v1021 = vrot.slane %v1019, 5
        %v1022 = vsel %vm648, %v1017, %v1021
        %v1023 = vshrl.u32 %v644, 16
        %v1025 = vrot.slane %v1023, 4
        %v1026 = vor.u32 %v1025, %v1021
        %v1027 = vrot.slane %v1026, 4
        %v1029 = vshll.u32 %v645, 16
        %v1031 = vrot.slane %v1029, 5
        %v1032 = vsel %vm648, %v1027, %v1031
        %s1033 = scalar_lea.vmem %s1, 64
        %v1034 = vld [vmem:[%s1033] sm:$0xf]
        %v1035 = vld [vmem:[%s1033 + $0x4] sm:$0xf]
        %v1036 = vld [vmem:[%s1033 + $0x8] sm:$0xf]
        %v1037 = vld [vmem:[%s1033 + $0xc] sm:$0xf]
        %v1038 = vld [vmem:[%s1033 + $0x10] sm:$0xf]
        %v1039 = vld [vmem:[%s1033 + $0x14] sm:$0xf]
        %v1040 = vld [vmem:[%s1033 + $0x18] sm:$0xf]
        %v1041 = vld [vmem:[%s1033 + $0x1c] sm:$0xf]
        %v1042 = vld [vmem:[%s1033 + $0x20] sm:$0xf]
        %v1043 = vld [vmem:[%s1033 + $0x24] sm:$0xf]
        %v1044 = vld [vmem:[%s1033 + $0x28] sm:$0xf]
        %v1045 = vld [vmem:[%s1033 + $0x2c] sm:$0xf]
        %v1046 = vld [vmem:[%s1033 + $0x30] sm:$0xf]
        %v1047 = vld [vmem:[%s1033 + $0x34] sm:$0xf]
        %v1048 = vld [vmem:[%s1033 + $0x38] sm:$0xf]
        %v1049 = vld [vmem:[%s1033 + $0x3c] sm:$0xf]
        %v1050 = vunpack.c.l.b16 %v662
        %v1051 = vunpack.c.l.b16 %v672
        %v1052 = vunpack.c.l.b16 %v686
        %v1053 = vunpack.c.l.b16 %v696
        %v1054 = vunpack.c.l.b16 %v710
        %v1055 = vunpack.c.l.b16 %v720
        %v1056 = vunpack.c.l.b16 %v734
        %v1057 = vunpack.c.l.b16 %v744
        %v1058 = vunpack.c.l.b16 %v758
        %v1059 = vunpack.c.l.b16 %v768
        %v1060 = vunpack.c.l.b16 %v782
        %v1061 = vunpack.c.l.b16 %v792
        %v1062 = vunpack.c.l.b16 %v806
        %v1063 = vunpack.c.l.b16 %v816
        %v1064 = vunpack.c.l.b16 %v830
        %v1065 = vunpack.c.l.b16 %v840
        %v1066 = vunpack.c.l.b16 %v854
        %v1067 = vunpack.c.l.b16 %v864
        %v1068 = vunpack.c.l.b16 %v878
        %v1069 = vunpack.c.l.b16 %v888
        %v1070 = vunpack.c.l.b16 %v902
        %v1071 = vunpack.c.l.b16 %v912
        %v1072 = vunpack.c.l.b16 %v926
        %v1073 = vunpack.c.l.b16 %v936
        %v1074 = vunpack.c.l.b16 %v950
        %v1075 = vunpack.c.l.b16 %v960
        %v1076 = vunpack.c.l.b16 %v974
        %v1077 = vunpack.c.l.b16 %v984
        %v1078 = vunpack.c.l.b16 %v998
        %v1079 = vunpack.c.l.b16 %v1008
        %v1080 = vunpack.c.l.b16 %v1022
        %v1081 = vunpack.c.l.b16 %v1032
        %v1082 = vpack.c.b16 %v1051, %v1050
        %v1083 = vpack.c.b16 %v1053, %v1052
        %v1084 = vpack.c.b16 %v1055, %v1054
        %v1085 = vpack.c.b16 %v1057, %v1056
        %v1086 = vpack.c.b16 %v1059, %v1058
        %v1087 = vpack.c.b16 %v1061, %v1060
        %v1088 = vpack.c.b16 %v1063, %v1062
        %v1089 = vpack.c.b16 %v1065, %v1064
        %v1090 = vpack.c.b16 %v1067, %v1066
        %v1091 = vpack.c.b16 %v1069, %v1068
        %v1092 = vpack.c.b16 %v1071, %v1070
        %v1093 = vpack.c.b16 %v1073, %v1072
        %v1094 = vpack.c.b16 %v1075, %v1074
        %v1095 = vpack.c.b16 %v1077, %v1076
        %v1096 = vpack.c.b16 %v1079, %v1078
        %v1097 = vpack.c.b16 %v1081, %v1080
        %v1130 = vunpack.c.l.b16 %v1034
        %v1131 = vunpack.c.l.b16 %v1035
        %v1132 = vunpack.c.l.b16 %v1036
        %v1133 = vunpack.c.l.b16 %v1037
        %v1134 = vunpack.c.l.b16 %v1038
        %v1135 = vunpack.c.l.b16 %v1039
        %v1136 = vunpack.c.l.b16 %v1040
        %v1137 = vunpack.c.l.b16 %v1041
        %v1138 = vunpack.c.l.b16 %v1042
        %v1139 = vunpack.c.l.b16 %v1043
        %v1140 = vunpack.c.l.b16 %v1044
        %v1141 = vunpack.c.l.b16 %v1045
        %v1142 = vunpack.c.l.b16 %v1046
        %v1143 = vunpack.c.l.b16 %v1047
        %v1144 = vunpack.c.l.b16 %v1048
        %v1145 = vunpack.c.l.b16 %v1049
        %v1146 = vpack.c.b16 %v1131, %v1130
        %v1147 = vpack.c.b16 %v1133, %v1132
        %v1148 = vpack.c.b16 %v1135, %v1134
        %v1149 = vpack.c.b16 %v1137, %v1136
        %v1150 = vpack.c.b16 %v1139, %v1138
        %v1151 = vpack.c.b16 %v1141, %v1140
        %v1152 = vpack.c.b16 %v1143, %v1142
        %v1153 = vpack.c.b16 %v1145, %v1144
        %1162 = vmatprep.subr.bf16.mxu0 0
        %1163 = vmatpush1.bf16.msra.mxu0 %v1146
        %1164 = vmatprep.subr.bf16.mxu0 0
        %1165 = vmatpush1.bf16.msra.mxu0 %v1147
        %1166 = vmatprep.subr.bf16.mxu0 0
        %1167 = vmatpush1.bf16.msra.mxu0 %v1148
        %1168 = vmatprep.subr.bf16.mxu0 0
        %1169 = vmatpush1.bf16.msra.mxu0 %v1149
        %1170 = vmatprep.subr.bf16.mxu0 0
        %1171 = vmatpush1.bf16.msra.mxu0 %v1150
        %1172 = vmatprep.subr.bf16.mxu0 0
        %1173 = vmatpush1.bf16.msra.mxu0 %v1151
        %1174 = vmatprep.subr.bf16.mxu0 0
        %1175 = vmatpush1.bf16.msra.mxu0 %v1152
        %1176 = vmatprep.subr.bf16.mxu0 0
        %1177 = vmatpush1.bf16.msra.mxu0 %v1153
        %1178 = vmatprep.subr.bf16.mxu0 0
        %1179 = vmatpush1.bf16.msra.mxu0 0
        %1180 = vmatprep.subr.bf16.mxu0 0
        %1181 = vmatpush1.bf16.msra.mxu0 0
        %1182 = vmatprep.subr.bf16.mxu0 0
        %1183 = vmatpush1.bf16.msra.mxu0 0
        %1184 = vmatprep.subr.bf16.mxu0 0
        %1185 = vmatpush1.bf16.msra.mxu0 0
        %1186 = vmatprep.subr.bf16.mxu0 0
        %1187 = vmatpush1.bf16.msra.mxu0 0
        %1188 = vmatprep.subr.bf16.mxu0 0
        %1189 = vmatpush1.bf16.msra.mxu0 0
        %1190 = vmatprep.subr.bf16.mxu0 0
        %1191 = vmatpush1.bf16.msra.mxu0 0
        %1192 = vmatprep.subr.bf16.mxu0 0
        %1193 = vmatpush1.bf16.msra.mxu0 0
        %1194 = vmatprep.mubr.bf16.mxu0 0
        %1195 = vmatmul.mubr.bf16.gmra.mrb[0].mxu0 %v1082
        %v1196 = vpop.f32.mrb[0].mxu0
        %v1197 = vadd.f32 0.0, %v1196
        %v1198 = vpop.f32.mrb[0].mxu0
        %v1199 = vpop.f32.mrb[0].mxu0
        %v1200 = vadd.f32 0.0, %v1199
        %v1201 = vpop.f32.mrb[0].mxu0
        %1202 = vmatprep.mubr.bf16.mxu0 0
        %1203 = vmatmul.mubr.bf16.gmra.mrb[0].mxu0 %v1083
        %v1204 = vpop.f32.mrb[0].mxu0
        %v1205 = vadd.f32 0.0, %v1204
        %v1206 = vpop.f32.mrb[0].mxu0
        %v1207 = vpop.f32.mrb[0].mxu0
        %v1208 = vadd.f32 0.0, %v1207
        %v1209 = vpop.f32.mrb[0].mxu0
        %1210 = vmatprep.mubr.bf16.mxu0 0
        %1211 = vmatmul.mubr.bf16.gmra.mrb[0].mxu0 %v1084
        %v1212 = vpop.f32.mrb[0].mxu0
        %v1213 = vadd.f32 0.0, %v1212
        %v1214 = vpop.f32.mrb[0].mxu0
        %v1215 = vpop.f32.mrb[0].mxu0
        %v1216 = vadd.f32 0.0, %v1215
        %v1217 = vpop.f32.mrb[0].mxu0
        %1218 = vmatprep.mubr.bf16.mxu0 0
        %1219 = vmatmul.mubr.bf16.gmra.mrb[0].mxu0 %v1085
        %v1220 = vpop.f32.mrb[0].mxu0
        %v1221 = vadd.f32 0.0, %v1220
        %v1222 = vpop.f32.mrb[0].mxu0
        %v1223 = vpop.f32.mrb[0].mxu0
        %v1224 = vadd.f32 0.0, %v1223
        %v1225 = vpop.f32.mrb[0].mxu0
        %1226 = vmatprep.mubr.bf16.mxu0 0
        %1227 = vmatmul.mubr.bf16.gmra.mrb[0].mxu0 %v1086
        %v1228 = vpop.f32.mrb[0].mxu0
        %v1229 = vadd.f32 0.0, %v1228
        %v1230 = vpop.f32.mrb[0].mxu0
        %v1231 = vpop.f32.mrb[0].mxu0
        %v1232 = vadd.f32 0.0, %v1231
        %v1233 = vpop.f32.mrb[0].mxu0
        %1234 = vmatprep.mubr.bf16.mxu0 0
        %1235 = vmatmul.mubr.bf16.gmra.mrb[0].mxu0 %v1087
        %v1236 = vpop.f32.mrb[0].mxu0
        %v1237 = vadd.f32 0.0, %v1236
        %v1238 = vpop.f32.mrb[0].mxu0
        %v1239 = vpop.f32.mrb[0].mxu0
        %v1240 = vadd.f32 0.0, %v1239
        %v1241 = vpop.f32.mrb[0].mxu0
        %1242 = vmatprep.mubr.bf16.mxu0 0
        %1243 = vmatmul.mubr.bf16.gmra.mrb[0].mxu0 %v1088
        %v1244 = vpop.f32.mrb[0].mxu0
        %v1245 = vadd.f32 0.0, %v1244
        %v1246 = vpop.f32.mrb[0].mxu0
        %v1247 = vpop.f32.mrb[0].mxu0
        %v1248 = vadd.f32 0.0, %v1247
        %v1249 = vpop.f32.mrb[0].mxu0
        %1250 = vmatprep.mubr.bf16.mxu0 0
        %1251 = vmatmul.mubr.bf16.gmra.mrb[0].mxu0 %v1089
        %v1252 = vpop.f32.mrb[0].mxu0
        %v1253 = vadd.f32 0.0, %v1252
        %v1254 = vpop.f32.mrb[0].mxu0
        %v1255 = vpop.f32.mrb[0].mxu0
        %v1256 = vadd.f32 0.0, %v1255
        %v1257 = vpop.f32.mrb[0].mxu0
        %1258 = vmatprep.mubr.bf16.mxu0 0
        %1259 = vmatmul.mubr.bf16.gmra.mrb[0].mxu0 %v1090
        %v1260 = vpop.f32.mrb[0].mxu0
        %v1261 = vadd.f32 0.0, %v1260
        %v1262 = vpop.f32.mrb[0].mxu0
        %v1263 = vpop.f32.mrb[0].mxu0
        %v1264 = vadd.f32 0.0, %v1263
        %v1265 = vpop.f32.mrb[0].mxu0
        %1266 = vmatprep.mubr.bf16.mxu0 0
        %1267 = vmatmul.mubr.bf16.gmra.mrb[0].mxu0 %v1091
        %v1268 = vpop.f32.mrb[0].mxu0
        %v1269 = vadd.f32 0.0, %v1268
        %v1270 = vpop.f32.mrb[0].mxu0
        %v1271 = vpop.f32.mrb[0].mxu0
        %v1272 = vadd.f32 0.0, %v1271
        %v1273 = vpop.f32.mrb[0].mxu0
        %1274 = vmatprep.mubr.bf16.mxu0 0
        %1275 = vmatmul.mubr.bf16.gmra.mrb[0].mxu0 %v1092
        %v1276 = vpop.f32.mrb[0].mxu0
        %v1277 = vadd.f32 0.0, %v1276
        %v1278 = vpop.f32.mrb[0].mxu0
        %v1279 = vpop.f32.mrb[0].mxu0
        %v1280 = vadd.f32 0.0, %v1279
        %v1281 = vpop.f32.mrb[0].mxu0
        %1282 = vmatprep.mubr.bf16.mxu0 0
        %1283 = vmatmul.mubr.bf16.gmra.mrb[0].mxu0 %v1093
        %v1284 = vpop.f32.mrb[0].mxu0
        %v1285 = vadd.f32 0.0, %v1284
        %v1286 = vpop.f32.mrb[0].mxu0
        %v1287 = vpop.f32.mrb[0].mxu0
        %v1288 = vadd.f32 0.0, %v1287
        %v1289 = vpop.f32.mrb[0].mxu0
        %1290 = vmatprep.mubr.bf16.mxu0 0
        %1291 = vmatmul.mubr.bf16.gmra.mrb[0].mxu0 %v1094
        %v1292 = vpop.f32.mrb[0].mxu0
        %v1293 = vadd.f32 0.0, %v1292
        %v1294 = vpop.f32.mrb[0].mxu0
        %v1295 = vpop.f32.mrb[0].mxu0
        %v1296 = vadd.f32 0.0, %v1295
        %v1297 = vpop.f32.mrb[0].mxu0
        %1298 = vmatprep.mubr.bf16.mxu0 0
        %1299 = vmatmul.mubr.bf16.gmra.mrb[0].mxu0 %v1095
        %v1300 = vpop.f32.mrb[0].mxu0
        %v1301 = vadd.f32 0.0, %v1300
        %v1302 = vpop.f32.mrb[0].mxu0
        %v1303 = vpop.f32.mrb[0].mxu0
        %v1304 = vadd.f32 0.0, %v1303
        %v1305 = vpop.f32.mrb[0].mxu0
        %1306 = vmatprep.mubr.bf16.mxu0 0
        %1307 = vmatmul.mubr.bf16.gmra.mrb[0].mxu0 %v1096
        %v1308 = vpop.f32.mrb[0].mxu0
        %v1309 = vadd.f32 0.0, %v1308
        %v1310 = vpop.f32.mrb[0].mxu0
        %v1311 = vpop.f32.mrb[0].mxu0
        %v1312 = vadd.f32 0.0, %v1311
        %v1313 = vpop.f32.mrb[0].mxu0
        %1314 = vmatprep.mubr.bf16.mxu0 0
        %1315 = vmatmul.mubr.bf16.gmra.mrb[0].mxu0 %v1097
        %v1316 = vpop.f32.mrb[0].mxu0
        %v1317 = vadd.f32 0.0, %v1316
        %v1318 = vpop.f32.mrb[0].mxu0
        %v1319 = vpop.f32.mrb[0].mxu0
        %v1320 = vadd.f32 0.0, %v1319
        %v1321 = vpop.f32.mrb[0].mxu0
        %1322 = vdwg.mxu0
        %v1323 = vld [vmem:[#allocation2] sm:$0xff]
        %v1324 = vld [vmem:[#allocation2 + $0x8] sm:$0xff]
        %v1325 = vld [vmem:[#allocation2 + $0x10] sm:$0xff]
        %v1326 = vld [vmem:[#allocation2 + $0x18] sm:$0xff]
        %v1327 = vld [vmem:[#allocation2 + $0x20] sm:$0xff]
        %v1328 = vld [vmem:[#allocation2 + $0x28] sm:$0xff]
        %v1329 = vld [vmem:[#allocation2 + $0x30] sm:$0xff]
        %v1330 = vld [vmem:[#allocation2 + $0x38] sm:$0xff]
        %v1331 = vld [vmem:[#allocation2 + $0x40] sm:$0xff]
        %v1332 = vld [vmem:[#allocation2 + $0x48] sm:$0xff]
        %v1333 = vld [vmem:[#allocation2 + $0x50] sm:$0xff]
        %v1334 = vld [vmem:[#allocation2 + $0x58] sm:$0xff]
        %v1335 = vld [vmem:[#allocation2 + $0x60] sm:$0xff]
        %v1336 = vld [vmem:[#allocation2 + $0x68] sm:$0xff]
        %v1337 = vld [vmem:[#allocation2 + $0x70] sm:$0xff]
        %v1338 = vld [vmem:[#allocation2 + $0x78] sm:$0xff]
        %v1339 = vld [vmem:[#allocation2 + $0x80] sm:$0xff]
        %v1340 = vld [vmem:[#allocation2 + $0x88] sm:$0xff]
        %v1341 = vld [vmem:[#allocation2 + $0x90] sm:$0xff]
        %v1342 = vld [vmem:[#allocation2 + $0x98] sm:$0xff]
        %v1343 = vld [vmem:[#allocation2 + $0xa0] sm:$0xff]
        %v1344 = vld [vmem:[#allocation2 + $0xa8] sm:$0xff]
        %v1345 = vld [vmem:[#allocation2 + $0xb0] sm:$0xff]
        %v1346 = vld [vmem:[#allocation2 + $0xb8] sm:$0xff]
        %v1347 = vld [vmem:[#allocation2 + $0xc0] sm:$0xff]
        %v1348 = vld [vmem:[#allocation2 + $0xc8] sm:$0xff]
        %v1349 = vld [vmem:[#allocation2 + $0xd0] sm:$0xff]
        %v1350 = vld [vmem:[#allocation2 + $0xd8] sm:$0xff]
        %v1351 = vld [vmem:[#allocation2 + $0xe0] sm:$0xff]
        %v1352 = vld [vmem:[#allocation2 + $0xe8] sm:$0xff]
        %v1353 = vld [vmem:[#allocation2 + $0xf0] sm:$0xff]
        %v1354 = vld [vmem:[#allocation2 + $0xf8] sm:$0xff]
        %v1355 = vadd.f32 %v1323, %v1197
        %v1356 = vadd.f32 %v1324, %v1200
        %v1357 = vadd.f32 %v1325, %v1205
        %v1358 = vadd.f32 %v1326, %v1208
        %v1359 = vadd.f32 %v1327, %v1213
        %v1360 = vadd.f32 %v1328, %v1216
        %v1361 = vadd.f32 %v1329, %v1221
        %v1362 = vadd.f32 %v1330, %v1224
        %v1363 = vadd.f32 %v1331, %v1229
        %v1364 = vadd.f32 %v1332, %v1232
        %v1365 = vadd.f32 %v1333, %v1237
        %v1366 = vadd.f32 %v1334, %v1240
        %v1367 = vadd.f32 %v1335, %v1245
        %v1368 = vadd.f32 %v1336, %v1248
        %v1369 = vadd.f32 %v1337, %v1253
        %v1370 = vadd.f32 %v1338, %v1256
        %v1371 = vadd.f32 %v1339, %v1261
        %v1372 = vadd.f32 %v1340, %v1264
        %v1373 = vadd.f32 %v1341, %v1269
        %v1374 = vadd.f32 %v1342, %v1272
        %v1375 = vadd.f32 %v1343, %v1277
        %v1376 = vadd.f32 %v1344, %v1280
        %v1377 = vadd.f32 %v1345, %v1285
        %v1378 = vadd.f32 %v1346, %v1288
        %v1379 = vadd.f32 %v1347, %v1293
        %v1380 = vadd.f32 %v1348, %v1296
        %v1381 = vadd.f32 %v1349, %v1301
        %v1382 = vadd.f32 %v1350, %v1304
        %v1383 = vadd.f32 %v1351, %v1309
        %v1384 = vadd.f32 %v1352, %v1312
        %v1385 = vadd.f32 %v1353, %v1317
        %v1386 = vadd.f32 %v1354, %v1320
        %1387 = vst [vmem:[#allocation2] sm:$0xff] %v1355
        %1388 = vst [vmem:[#allocation2 + $0x8] sm:$0xff] %v1356
        %1389 = vst [vmem:[#allocation2 + $0x10] sm:$0xff] %v1357
        %1390 = vst [vmem:[#allocation2 + $0x18] sm:$0xff] %v1358
        %1391 = vst [vmem:[#allocation2 + $0x20] sm:$0xff] %v1359
        %1392 = vst [vmem:[#allocation2 + $0x28] sm:$0xff] %v1360
        %1393 = vst [vmem:[#allocation2 + $0x30] sm:$0xff] %v1361
        %1394 = vst [vmem:[#allocation2 + $0x38] sm:$0xff] %v1362
        %1395 = vst [vmem:[#allocation2 + $0x40] sm:$0xff] %v1363
        %1396 = vst [vmem:[#allocation2 + $0x48] sm:$0xff] %v1364
        %1397 = vst [vmem:[#allocation2 + $0x50] sm:$0xff] %v1365
        %1398 = vst [vmem:[#allocation2 + $0x58] sm:$0xff] %v1366
        %1399 = vst [vmem:[#allocation2 + $0x60] sm:$0xff] %v1367
        %1400 = vst [vmem:[#allocation2 + $0x68] sm:$0xff] %v1368
        %1401 = vst [vmem:[#allocation2 + $0x70] sm:$0xff] %v1369
        %1402 = vst [vmem:[#allocation2 + $0x78] sm:$0xff] %v1370
        %1403 = vst [vmem:[#allocation2 + $0x80] sm:$0xff] %v1371
        %1404 = vst [vmem:[#allocation2 + $0x88] sm:$0xff] %v1372
        %1405 = vst [vmem:[#allocation2 + $0x90] sm:$0xff] %v1373
        %1406 = vst [vmem:[#allocation2 + $0x98] sm:$0xff] %v1374
        %1407 = vst [vmem:[#allocation2 + $0xa0] sm:$0xff] %v1375
        %1408 = vst [vmem:[#allocation2 + $0xa8] sm:$0xff] %v1376
        %1409 = vst [vmem:[#allocation2 + $0xb0] sm:$0xff] %v1377
        %1410 = vst [vmem:[#allocation2 + $0xb8] sm:$0xff] %v1378
        %1411 = vst [vmem:[#allocation2 + $0xc0] sm:$0xff] %v1379
        %1412 = vst [vmem:[#allocation2 + $0xc8] sm:$0xff] %v1380
        %1413 = vst [vmem:[#allocation2 + $0xd0] sm:$0xff] %v1381
        %1414 = vst [vmem:[#allocation2 + $0xd8] sm:$0xff] %v1382
        %1415 = vst [vmem:[#allocation2 + $0xe0] sm:$0xff] %v1383
        %1416 = vst [vmem:[#allocation2 + $0xe8] sm:$0xff] %v1384
        %1417 = vst [vmem:[#allocation2 + $0xf0] sm:$0xff] %v1385
        %1418 = vst [vmem:[#allocation2 + $0xf8] sm:$0xff] %v1386
        %v1419 = vld [vmem:[%s211] sm:$0xe]
        %v1420 = vld [vmem:[%s211 + $0x4] sm:$0xf]
        %v1421 = vld [vmem:[%s211 + $0x8] sm:$0x1]
        %v1422 = vld [vmem:[%s211 + $0xc] sm:$0xe]
        %v1423 = vld [vmem:[%s211 + $0x10] sm:$0xf]
        %v1424 = vld [vmem:[%s211 + $0x14] sm:$0x1]
        %v1425 = vld [vmem:[%s211 + $0x18] sm:$0xe]
        %v1426 = vld [vmem:[%s211 + $0x1c] sm:$0xf]
        %v1427 = vld [vmem:[%s211 + $0x20] sm:$0x1]
        %v1428 = vld [vmem:[%s211 + $0x24] sm:$0xe]
        %v1429 = vld [vmem:[%s211 + $0x28] sm:$0xf]
        %v1430 = vld [vmem:[%s211 + $0x2c] sm:$0x1]
        %v1431 = vld [vmem:[%s211 + $0x30] sm:$0xe]
        %v1432 = vld [vmem:[%s211 + $0x34] sm:$0xf]
        %v1433 = vld [vmem:[%s211 + $0x38] sm:$0x1]
        %v1434 = vld [vmem:[%s211 + $0x3c] sm:$0xe]
        %v1435 = vld [vmem:[%s211 + $0x40] sm:$0xf]
        %v1436 = vld [vmem:[%s211 + $0x44] sm:$0x1]
        %v1437 = vld [vmem:[%s211 + $0x48] sm:$0xe]
        %v1438 = vld [vmem:[%s211 + $0x4c] sm:$0xf]
        %v1439 = vld [vmem:[%s211 + $0x50] sm:$0x1]
        %v1440 = vld [vmem:[%s211 + $0x54] sm:$0xe]
        %v1441 = vld [vmem:[%s211 + $0x58] sm:$0xf]
        %v1442 = vld [vmem:[%s211 + $0x5c] sm:$0x1]
        %v1443 = vld [vmem:[%s211 + $0x60] sm:$0xe]
        %v1444 = vld [vmem:[%s211 + $0x64] sm:$0xf]
        %v1445 = vld [vmem:[%s211 + $0x68] sm:$0x1]
        %v1446 = vld [vmem:[%s211 + $0x6c] sm:$0xe]
        %v1447 = vld [vmem:[%s211 + $0x70] sm:$0xf]
        %v1448 = vld [vmem:[%s211 + $0x74] sm:$0x1]
        %v1449 = vld [vmem:[%s211 + $0x78] sm:$0xe]
        %v1450 = vld [vmem:[%s211 + $0x7c] sm:$0xf]
        %v1451 = vld [vmem:[%s211 + $0x80] sm:$0x1]
        %v1452 = vld [vmem:[%s211 + $0x84] sm:$0xe]
        %v1453 = vld [vmem:[%s211 + $0x88] sm:$0xf]
        %v1454 = vld [vmem:[%s211 + $0x8c] sm:$0x1]
        %v1455 = vld [vmem:[%s211 + $0x90] sm:$0xe]
        %v1456 = vld [vmem:[%s211 + $0x94] sm:$0xf]
        %v1457 = vld [vmem:[%s211 + $0x98] sm:$0x1]
        %v1458 = vld [vmem:[%s211 + $0x9c] sm:$0xe]
        %v1459 = vld [vmem:[%s211 + $0xa0] sm:$0xf]
        %v1460 = vld [vmem:[%s211 + $0xa4] sm:$0x1]
        %v1461 = vld [vmem:[%s211 + $0xa8] sm:$0xe]
        %v1462 = vld [vmem:[%s211 + $0xac] sm:$0xf]
        %v1463 = vld [vmem:[%s211 + $0xb0] sm:$0x1]
        %v1464 = vld [vmem:[%s211 + $0xb4] sm:$0xe]
        %v1465 = vld [vmem:[%s211 + $0xb8] sm:$0xf]
        %v1466 = vld [vmem:[%s211 + $0xbc] sm:$0x1]
        %vm1515 = vcmask 1042432
        %vm1516 = vcmask 1046532
        %vm1517 = vmor %vm1515, %vm1516
        %v1518 = vrot.slane %v1419, 5
        %v1519 = vrot.slane %v1518, 4
        %v1520 = vrot.slane %v1420, 5
        %v1521 = vsel %vm1517, %v1519, %v1520
        %v1522 = vrot.slane %v1520, 4
        %v1523 = vrot.slane %v1421, 5
        %v1524 = vsel %vm1517, %v1522, %v1523
        %v1525 = vrot.slane %v1422, 5
        %v1526 = vrot.slane %v1525, 4
        %v1527 = vrot.slane %v1423, 5
        %v1528 = vsel %vm1517, %v1526, %v1527
        %v1529 = vrot.slane %v1527, 4
        %v1530 = vrot.slane %v1424, 5
        %v1531 = vsel %vm1517, %v1529, %v1530
        %v1532 = vrot.slane %v1425, 5
        %v1533 = vrot.slane %v1532, 4
        %v1534 = vrot.slane %v1426, 5
        %v1535 = vsel %vm1517, %v1533, %v1534
        %v1536 = vrot.slane %v1534, 4
        %v1537 = vrot.slane %v1427, 5
        %v1538 = vsel %vm1517, %v1536, %v1537
        %v1539 = vrot.slane %v1428, 5
        %v1540 = vrot.slane %v1539, 4
        %v1541 = vrot.slane %v1429, 5
        %v1542 = vsel %vm1517, %v1540, %v1541
        %v1543 = vrot.slane %v1541, 4
        %v1544 = vrot.slane %v1430, 5
        %v1545 = vsel %vm1517, %v1543, %v1544
        %v1546 = vrot.slane %v1431, 5
        %v1547 = vrot.slane %v1546, 4
        %v1548 = vrot.slane %v1432, 5
        %v1549 = vsel %vm1517, %v1547, %v1548
        %v1550 = vrot.slane %v1548, 4
        %v1551 = vrot.slane %v1433, 5
        %v1552 = vsel %vm1517, %v1550, %v1551
        %v1553 = vrot.slane %v1434, 5
        %v1554 = vrot.slane %v1553, 4
        %v1555 = vrot.slane %v1435, 5
        %v1556 = vsel %vm1517, %v1554, %v1555
        %v1557 = vrot.slane %v1555, 4
        %v1558 = vrot.slane %v1436, 5
        %v1559 = vsel %vm1517, %v1557, %v1558
        %v1560 = vrot.slane %v1437, 5
        %v1561 = vrot.slane %v1560, 4
        %v1562 = vrot.slane %v1438, 5
        %v1563 = vsel %vm1517, %v1561, %v1562
        %v1564 = vrot.slane %v1562, 4
        %v1565 = vrot.slane %v1439, 5
        %v1566 = vsel %vm1517, %v1564, %v1565
        %v1567 = vrot.slane %v1440, 5
        %v1568 = vrot.slane %v1567, 4
        %v1569 = vrot.slane %v1441, 5
        %v1570 = vsel %vm1517, %v1568, %v1569
        %v1571 = vrot.slane %v1569, 4
        %v1572 = vrot.slane %v1442, 5
        %v1573 = vsel %vm1517, %v1571, %v1572
        %v1574 = vrot.slane %v1443, 5
        %v1575 = vrot.slane %v1574, 4
        %v1576 = vrot.slane %v1444, 5
        %v1577 = vsel %vm1517, %v1575, %v1576
        %v1578 = vrot.slane %v1576, 4
        %v1579 = vrot.slane %v1445, 5
        %v1580 = vsel %vm1517, %v1578, %v1579
        %v1581 = vrot.slane %v1446, 5
        %v1582 = vrot.slane %v1581, 4
        %v1583 = vrot.slane %v1447, 5
        %v1584 = vsel %vm1517, %v1582, %v1583
        %v1585 = vrot.slane %v1583, 4
        %v1586 = vrot.slane %v1448, 5
        %v1587 = vsel %vm1517, %v1585, %v1586
        %v1588 = vrot.slane %v1449, 5
        %v1589 = vrot.slane %v1588, 4
        %v1590 = vrot.slane %v1450, 5
        %v1591 = vsel %vm1517, %v1589, %v1590
        %v1592 = vrot.slane %v1590, 4
        %v1593 = vrot.slane %v1451, 5
        %v1594 = vsel %vm1517, %v1592, %v1593
        %v1595 = vrot.slane %v1452, 5
        %v1596 = vrot.slane %v1595, 4
        %v1597 = vrot.slane %v1453, 5
        %v1598 = vsel %vm1517, %v1596, %v1597
        %v1599 = vrot.slane %v1597, 4
        %v1600 = vrot.slane %v1454, 5
        %v1601 = vsel %vm1517, %v1599, %v1600
        %v1602 = vrot.slane %v1455, 5
        %v1603 = vrot.slane %v1602, 4
        %v1604 = vrot.slane %v1456, 5
        %v1605 = vsel %vm1517, %v1603, %v1604
        %v1606 = vrot.slane %v1604, 4
        %v1607 = vrot.slane %v1457, 5
        %v1608 = vsel %vm1517, %v1606, %v1607
        %v1609 = vrot.slane %v1458, 5
        %v1610 = vrot.slane %v1609, 4
        %v1611 = vrot.slane %v1459, 5
        %v1612 = vsel %vm1517, %v1610, %v1611
        %v1613 = vrot.slane %v1611, 4
        %v1614 = vrot.slane %v1460, 5
        %v1615 = vsel %vm1517, %v1613, %v1614
        %v1616 = vrot.slane %v1461, 5
        %v1617 = vrot.slane %v1616, 4
        %v1618 = vrot.slane %v1462, 5
        %v1619 = vsel %vm1517, %v1617, %v1618
        %v1620 = vrot.slane %v1618, 4
        %v1621 = vrot.slane %v1463, 5
        %v1622 = vsel %vm1517, %v1620, %v1621
        %v1623 = vrot.slane %v1464, 5
        %v1624 = vrot.slane %v1623, 4
        %v1625 = vrot.slane %v1465, 5
        %v1626 = vsel %vm1517, %v1624, %v1625
        %v1627 = vrot.slane %v1625, 4
        %v1628 = vrot.slane %v1466, 5
        %v1629 = vsel %vm1517, %v1627, %v1628
        %s1630 = scalar_lea.vmem %s1, 128
        %v1631 = vld [vmem:[%s1630] sm:$0xf]
        %v1632 = vld [vmem:[%s1630 + $0x4] sm:$0xf]
        %v1633 = vld [vmem:[%s1630 + $0x8] sm:$0xf]
        %v1634 = vld [vmem:[%s1630 + $0xc] sm:$0xf]
        %v1635 = vld [vmem:[%s1630 + $0x10] sm:$0xf]
        %v1636 = vld [vmem:[%s1630 + $0x14] sm:$0xf]
        %v1637 = vld [vmem:[%s1630 + $0x18] sm:$0xf]
        %v1638 = vld [vmem:[%s1630 + $0x1c] sm:$0xf]
        %v1639 = vld [vmem:[%s1630 + $0x20] sm:$0xf]
        %v1640 = vld [vmem:[%s1630 + $0x24] sm:$0xf]
        %v1641 = vld [vmem:[%s1630 + $0x28] sm:$0xf]
        %v1642 = vld [vmem:[%s1630 + $0x2c] sm:$0xf]
        %v1643 = vld [vmem:[%s1630 + $0x30] sm:$0xf]
        %v1644 = vld [vmem:[%s1630 + $0x34] sm:$0xf]
        %v1645 = vld [vmem:[%s1630 + $0x38] sm:$0xf]
        %v1646 = vld [vmem:[%s1630 + $0x3c] sm:$0xf]
        %v1647 = vunpack.c.l.b16 %v1521
        %v1648 = vunpack.c.l.b16 %v1524
        %v1649 = vunpack.c.l.b16 %v1528
        %v1650 = vunpack.c.l.b16 %v1531
        %v1651 = vunpack.c.l.b16 %v1535
        %v1652 = vunpack.c.l.b16 %v1538
        %v1653 = vunpack.c.l.b16 %v1542
        %v1654 = vunpack.c.l.b16 %v1545
        %v1655 = vunpack.c.l.b16 %v1549
        %v1656 = vunpack.c.l.b16 %v1552
        %v1657 = vunpack.c.l.b16 %v1556
        %v1658 = vunpack.c.l.b16 %v1559
        %v1659 = vunpack.c.l.b16 %v1563
        %v1660 = vunpack.c.l.b16 %v1566
        %v1661 = vunpack.c.l.b16 %v1570
        %v1662 = vunpack.c.l.b16 %v1573
        %v1663 = vunpack.c.l.b16 %v1577
        %v1664 = vunpack.c.l.b16 %v1580
        %v1665 = vunpack.c.l.b16 %v1584
        %v1666 = vunpack.c.l.b16 %v1587
        %v1667 = vunpack.c.l.b16 %v1591
        %v1668 = vunpack.c.l.b16 %v1594
        %v1669 = vunpack.c.l.b16 %v1598
        %v1670 = vunpack.c.l.b16 %v1601
        %v1671 = vunpack.c.l.b16 %v1605
        %v1672 = vunpack.c.l.b16 %v1608
        %v1673 = vunpack.c.l.b16 %v1612
        %v1674 = vunpack.c.l.b16 %v1615
        %v1675 = vunpack.c.l.b16 %v1619
        %v1676 = vunpack.c.l.b16 %v1622
        %v1677 = vunpack.c.l.b16 %v1626
        %v1678 = vunpack.c.l.b16 %v1629
        %v1679 = vpack.c.b16 %v1648, %v1647
        %v1680 = vpack.c.b16 %v1650, %v1649
        %v1681 = vpack.c.b16 %v1652, %v1651
        %v1682 = vpack.c.b16 %v1654, %v1653
        %v1683 = vpack.c.b16 %v1656, %v1655
        %v1684 = vpack.c.b16 %v1658, %v1657
        %v1685 = vpack.c.b16 %v1660, %v1659
        %v1686 = vpack.c.b16 %v1662, %v1661
        %v1687 = vpack.c.b16 %v1664, %v1663
        %v1688 = vpack.c.b16 %v1666, %v1665
        %v1689 = vpack.c.b16 %v1668, %v1667
        %v1690 = vpack.c.b16 %v1670, %v1669
        %v1691 = vpack.c.b16 %v1672, %v1671
        %v1692 = vpack.c.b16 %v1674, %v1673
        %v1693 = vpack.c.b16 %v1676, %v1675
        %v1694 = vpack.c.b16 %v1678, %v1677
        %v1727 = vunpack.c.l.b16 %v1631
        %v1728 = vunpack.c.l.b16 %v1632
        %v1729 = vunpack.c.l.b16 %v1633
        %v1730 = vunpack.c.l.b16 %v1634
        %v1731 = vunpack.c.l.b16 %v1635
        %v1732 = vunpack.c.l.b16 %v1636
        %v1733 = vunpack.c.l.b16 %v1637
        %v1734 = vunpack.c.l.b16 %v1638
        %v1735 = vunpack.c.l.b16 %v1639
        %v1736 = vunpack.c.l.b16 %v1640
        %v1737 = vunpack.c.l.b16 %v1641
        %v1738 = vunpack.c.l.b16 %v1642
        %v1739 = vunpack.c.l.b16 %v1643
        %v1740 = vunpack.c.l.b16 %v1644
        %v1741 = vunpack.c.l.b16 %v1645
        %v1742 = vunpack.c.l.b16 %v1646
        %v1743 = vpack.c.b16 %v1728, %v1727
        %v1744 = vpack.c.b16 %v1730, %v1729
        %v1745 = vpack.c.b16 %v1732, %v1731
        %v1746 = vpack.c.b16 %v1734, %v1733
        %v1747 = vpack.c.b16 %v1736, %v1735
        %v1748 = vpack.c.b16 %v1738, %v1737
        %v1749 = vpack.c.b16 %v1740, %v1739
        %v1750 = vpack.c.b16 %v1742, %v1741
        %1759 = vmatprep.subr.bf16.mxu0 0
        %1760 = vmatpush1.bf16.msra.mxu0 %v1743
        %1761 = vmatprep.subr.bf16.mxu0 0
        %1762 = vmatpush1.bf16.msra.mxu0 %v1744
        %1763 = vmatprep.subr.bf16.mxu0 0
        %1764 = vmatpush1.bf16.msra.mxu0 %v1745
        %1765 = vmatprep.subr.bf16.mxu0 0
        %1766 = vmatpush1.bf16.msra.mxu0 %v1746
        %1767 = vmatprep.subr.bf16.mxu0 0
        %1768 = vmatpush1.bf16.msra.mxu0 %v1747
        %1769 = vmatprep.subr.bf16.mxu0 0
        %1770 = vmatpush1.bf16.msra.mxu0 %v1748
        %1771 = vmatprep.subr.bf16.mxu0 0
        %1772 = vmatpush1.bf16.msra.mxu0 %v1749
        %1773 = vmatprep.subr.bf16.mxu0 0
        %1774 = vmatpush1.bf16.msra.mxu0 %v1750
        %1775 = vmatprep.subr.bf16.mxu0 0
        %1776 = vmatpush1.bf16.msra.mxu0 0
        %1777 = vmatprep.subr.bf16.mxu0 0
        %1778 = vmatpush1.bf16.msra.mxu0 0
        %1779 = vmatprep.subr.bf16.mxu0 0
        %1780 = vmatpush1.bf16.msra.mxu0 0
        %1781 = vmatprep.subr.bf16.mxu0 0
        %1782 = vmatpush1.bf16.msra.mxu0 0
        %1783 = vmatprep.subr.bf16.mxu0 0
        %1784 = vmatpush1.bf16.msra.mxu0 0
        %1785 = vmatprep.subr.bf16.mxu0 0
        %1786 = vmatpush1.bf16.msra.mxu0 0
        %1787 = vmatprep.subr.bf16.mxu0 0
        %1788 = vmatpush1.bf16.msra.mxu0 0
        %1789 = vmatprep.subr.bf16.mxu0 0
        %1790 = vmatpush1.bf16.msra.mxu0 0
        %1791 = vmatprep.mubr.bf16.mxu0 0
        %1792 = vmatmul.mubr.bf16.gmra.mrb[0].mxu0 %v1679
        %v1793 = vpop.f32.mrb[0].mxu0
        %v1794 = vadd.f32 0.0, %v1793
        %v1795 = vpop.f32.mrb[0].mxu0
        %v1796 = vpop.f32.mrb[0].mxu0
        %v1797 = vadd.f32 0.0, %v1796
        %v1798 = vpop.f32.mrb[0].mxu0
        %1799 = vmatprep.mubr.bf16.mxu0 0
        %1800 = vmatmul.mubr.bf16.gmra.mrb[0].mxu0 %v1680
        %v1801 = vpop.f32.mrb[0].mxu0
        %v1802 = vadd.f32 0.0, %v1801
        %v1803 = vpop.f32.mrb[0].mxu0
        %v1804 = vpop.f32.mrb[0].mxu0
        %v1805 = vadd.f32 0.0, %v1804
        %v1806 = vpop.f32.mrb[0].mxu0
        %1807 = vmatprep.mubr.bf16.mxu0 0
        %1808 = vmatmul.mubr.bf16.gmra.mrb[0].mxu0 %v1681
        %v1809 = vpop.f32.mrb[0].mxu0
        %v1810 = vadd.f32 0.0, %v1809
        %v1811 = vpop.f32.mrb[0].mxu0
        %v1812 = vpop.f32.mrb[0].mxu0
        %v1813 = vadd.f32 0.0, %v1812
        %v1814 = vpop.f32.mrb[0].mxu0
        %1815 = vmatprep.mubr.bf16.mxu0 0
        %1816 = vmatmul.mubr.bf16.gmra.mrb[0].mxu0 %v1682
        %v1817 = vpop.f32.mrb[0].mxu0
        %v1818 = vadd.f32 0.0, %v1817
        %v1819 = vpop.f32.mrb[0].mxu0
        %v1820 = vpop.f32.mrb[0].mxu0
        %v1821 = vadd.f32 0.0, %v1820
        %v1822 = vpop.f32.mrb[0].mxu0
        %1823 = vmatprep.mubr.bf16.mxu0 0
        %1824 = vmatmul.mubr.bf16.gmra.mrb[0].mxu0 %v1683
        %v1825 = vpop.f32.mrb[0].mxu0
        %v1826 = vadd.f32 0.0, %v1825
        %v1827 = vpop.f32.mrb[0].mxu0
        %v1828 = vpop.f32.mrb[0].mxu0
        %v1829 = vadd.f32 0.0, %v1828
        %v1830 = vpop.f32.mrb[0].mxu0
        %1831 = vmatprep.mubr.bf16.mxu0 0
        %1832 = vmatmul.mubr.bf16.gmra.mrb[0].mxu0 %v1684
        %v1833 = vpop.f32.mrb[0].mxu0
        %v1834 = vadd.f32 0.0, %v1833
        %v1835 = vpop.f32.mrb[0].mxu0
        %v1836 = vpop.f32.mrb[0].mxu0
        %v1837 = vadd.f32 0.0, %v1836
        %v1838 = vpop.f32.mrb[0].mxu0
        %1839 = vmatprep.mubr.bf16.mxu0 0
        %1840 = vmatmul.mubr.bf16.gmra.mrb[0].mxu0 %v1685
        %v1841 = vpop.f32.mrb[0].mxu0
        %v1842 = vadd.f32 0.0, %v1841
        %v1843 = vpop.f32.mrb[0].mxu0
        %v1844 = vpop.f32.mrb[0].mxu0
        %v1845 = vadd.f32 0.0, %v1844
        %v1846 = vpop.f32.mrb[0].mxu0
        %1847 = vmatprep.mubr.bf16.mxu0 0
        %1848 = vmatmul.mubr.bf16.gmra.mrb[0].mxu0 %v1686
        %v1849 = vpop.f32.mrb[0].mxu0
        %v1850 = vadd.f32 0.0, %v1849
        %v1851 = vpop.f32.mrb[0].mxu0
        %v1852 = vpop.f32.mrb[0].mxu0
        %v1853 = vadd.f32 0.0, %v1852
        %v1854 = vpop.f32.mrb[0].mxu0
        %1855 = vmatprep.mubr.bf16.mxu0 0
        %1856 = vmatmul.mubr.bf16.gmra.mrb[0].mxu0 %v1687
        %v1857 = vpop.f32.mrb[0].mxu0
        %v1858 = vadd.f32 0.0, %v1857
        %v1859 = vpop.f32.mrb[0].mxu0
        %v1860 = vpop.f32.mrb[0].mxu0
        %v1861 = vadd.f32 0.0, %v1860
        %v1862 = vpop.f32.mrb[0].mxu0
        %1863 = vmatprep.mubr.bf16.mxu0 0
        %1864 = vmatmul.mubr.bf16.gmra.mrb[0].mxu0 %v1688
        %v1865 = vpop.f32.mrb[0].mxu0
        %v1866 = vadd.f32 0.0, %v1865
        %v1867 = vpop.f32.mrb[0].mxu0
        %v1868 = vpop.f32.mrb[0].mxu0
        %v1869 = vadd.f32 0.0, %v1868
        %v1870 = vpop.f32.mrb[0].mxu0
        %1871 = vmatprep.mubr.bf16.mxu0 0
        %1872 = vmatmul.mubr.bf16.gmra.mrb[0].mxu0 %v1689
        %v1873 = vpop.f32.mrb[0].mxu0
        %v1874 = vadd.f32 0.0, %v1873
        %v1875 = vpop.f32.mrb[0].mxu0
        %v1876 = vpop.f32.mrb[0].mxu0
        %v1877 = vadd.f32 0.0, %v1876
        %v1878 = vpop.f32.mrb[0].mxu0
        %1879 = vmatprep.mubr.bf16.mxu0 0
        %1880 = vmatmul.mubr.bf16.gmra.mrb[0].mxu0 %v1690
        %v1881 = vpop.f32.mrb[0].mxu0
        %v1882 = vadd.f32 0.0, %v1881
        %v1883 = vpop.f32.mrb[0].mxu0
        %v1884 = vpop.f32.mrb[0].mxu0
        %v1885 = vadd.f32 0.0, %v1884
        %v1886 = vpop.f32.mrb[0].mxu0
        %1887 = vmatprep.mubr.bf16.mxu0 0
        %1888 = vmatmul.mubr.bf16.gmra.mrb[0].mxu0 %v1691
        %v1889 = vpop.f32.mrb[0].mxu0
        %v1890 = vadd.f32 0.0, %v1889
        %v1891 = vpop.f32.mrb[0].mxu0
        %v1892 = vpop.f32.mrb[0].mxu0
        %v1893 = vadd.f32 0.0, %v1892
        %v1894 = vpop.f32.mrb[0].mxu0
        %1895 = vmatprep.mubr.bf16.mxu0 0
        %1896 = vmatmul.mubr.bf16.gmra.mrb[0].mxu0 %v1692
        %v1897 = vpop.f32.mrb[0].mxu0
        %v1898 = vadd.f32 0.0, %v1897
        %v1899 = vpop.f32.mrb[0].mxu0
        %v1900 = vpop.f32.mrb[0].mxu0
        %v1901 = vadd.f32 0.0, %v1900
        %v1902 = vpop.f32.mrb[0].mxu0
        %1903 = vmatprep.mubr.bf16.mxu0 0
        %1904 = vmatmul.mubr.bf16.gmra.mrb[0].mxu0 %v1693
        %v1905 = vpop.f32.mrb[0].mxu0
        %v1906 = vadd.f32 0.0, %v1905
        %v1907 = vpop.f32.mrb[0].mxu0
        %v1908 = vpop.f32.mrb[0].mxu0
        %v1909 = vadd.f32 0.0, %v1908
        %v1910 = vpop.f32.mrb[0].mxu0
        %1911 = vmatprep.mubr.bf16.mxu0 0
        %1912 = vmatmul.mubr.bf16.gmra.mrb[0].mxu0 %v1694
        %v1913 = vpop.f32.mrb[0].mxu0
        %v1914 = vadd.f32 0.0, %v1913
        %v1915 = vpop.f32.mrb[0].mxu0
        %v1916 = vpop.f32.mrb[0].mxu0
        %v1917 = vadd.f32 0.0, %v1916
        %v1918 = vpop.f32.mrb[0].mxu0
        %1919 = vdwg.mxu0
        %v1920 = vld [vmem:[#allocation2] sm:$0xff]
        %v1921 = vld [vmem:[#allocation2 + $0x8] sm:$0xff]
        %v1922 = vld [vmem:[#allocation2 + $0x10] sm:$0xff]
        %v1923 = vld [vmem:[#allocation2 + $0x18] sm:$0xff]
        %v1924 = vld [vmem:[#allocation2 + $0x20] sm:$0xff]
        %v1925 = vld [vmem:[#allocation2 + $0x28] sm:$0xff]
        %v1926 = vld [vmem:[#allocation2 + $0x30] sm:$0xff]
        %v1927 = vld [vmem:[#allocation2 + $0x38] sm:$0xff]
        %v1928 = vld [vmem:[#allocation2 + $0x40] sm:$0xff]
        %v1929 = vld [vmem:[#allocation2 + $0x48] sm:$0xff]
        %v1930 = vld [vmem:[#allocation2 + $0x50] sm:$0xff]
        %v1931 = vld [vmem:[#allocation2 + $0x58] sm:$0xff]
        %v1932 = vld [vmem:[#allocation2 + $0x60] sm:$0xff]
        %v1933 = vld [vmem:[#allocation2 + $0x68] sm:$0xff]
        %v1934 = vld [vmem:[#allocation2 + $0x70] sm:$0xff]
        %v1935 = vld [vmem:[#allocation2 + $0x78] sm:$0xff]
        %v1936 = vld [vmem:[#allocation2 + $0x80] sm:$0xff]
        %v1937 = vld [vmem:[#allocation2 + $0x88] sm:$0xff]
        %v1938 = vld [vmem:[#allocation2 + $0x90] sm:$0xff]
        %v1939 = vld [vmem:[#allocation2 + $0x98] sm:$0xff]
        %v1940 = vld [vmem:[#allocation2 + $0xa0] sm:$0xff]
        %v1941 = vld [vmem:[#allocation2 + $0xa8] sm:$0xff]
        %v1942 = vld [vmem:[#allocation2 + $0xb0] sm:$0xff]
        %v1943 = vld [vmem:[#allocation2 + $0xb8] sm:$0xff]
        %v1944 = vld [vmem:[#allocation2 + $0xc0] sm:$0xff]
        %v1945 = vld [vmem:[#allocation2 + $0xc8] sm:$0xff]
        %v1946 = vld [vmem:[#allocation2 + $0xd0] sm:$0xff]
        %v1947 = vld [vmem:[#allocation2 + $0xd8] sm:$0xff]
        %v1948 = vld [vmem:[#allocation2 + $0xe0] sm:$0xff]
        %v1949 = vld [vmem:[#allocation2 + $0xe8] sm:$0xff]
        %v1950 = vld [vmem:[#allocation2 + $0xf0] sm:$0xff]
        %v1951 = vld [vmem:[#allocation2 + $0xf8] sm:$0xff]
        %v1952 = vadd.f32 %v1920, %v1794
        %v1953 = vadd.f32 %v1921, %v1797
        %v1954 = vadd.f32 %v1922, %v1802
        %v1955 = vadd.f32 %v1923, %v1805
        %v1956 = vadd.f32 %v1924, %v1810
        %v1957 = vadd.f32 %v1925, %v1813
        %v1958 = vadd.f32 %v1926, %v1818
        %v1959 = vadd.f32 %v1927, %v1821
        %v1960 = vadd.f32 %v1928, %v1826
        %v1961 = vadd.f32 %v1929, %v1829
        %v1962 = vadd.f32 %v1930, %v1834
        %v1963 = vadd.f32 %v1931, %v1837
        %v1964 = vadd.f32 %v1932, %v1842
        %v1965 = vadd.f32 %v1933, %v1845
        %v1966 = vadd.f32 %v1934, %v1850
        %v1967 = vadd.f32 %v1935, %v1853
        %v1968 = vadd.f32 %v1936, %v1858
        %v1969 = vadd.f32 %v1937, %v1861
        %v1970 = vadd.f32 %v1938, %v1866
        %v1971 = vadd.f32 %v1939, %v1869
        %v1972 = vadd.f32 %v1940, %v1874
        %v1973 = vadd.f32 %v1941, %v1877
        %v1974 = vadd.f32 %v1942, %v1882
        %v1975 = vadd.f32 %v1943, %v1885
        %v1976 = vadd.f32 %v1944, %v1890
        %v1977 = vadd.f32 %v1945, %v1893
        %v1978 = vadd.f32 %v1946, %v1898
        %v1979 = vadd.f32 %v1947, %v1901
        %v1980 = vadd.f32 %v1948, %v1906
        %v1981 = vadd.f32 %v1949, %v1909
        %v1982 = vadd.f32 %v1950, %v1914
        %v1983 = vadd.f32 %v1951, %v1917
        %1984 = vst [vmem:[#allocation2] sm:$0xff] %v1952
        %1985 = vst [vmem:[#allocation2 + $0x8] sm:$0xff] %v1953
        %1986 = vst [vmem:[#allocation2 + $0x10] sm:$0xff] %v1954
        %1987 = vst [vmem:[#allocation2 + $0x18] sm:$0xff] %v1955
        %1988 = vst [vmem:[#allocation2 + $0x20] sm:$0xff] %v1956
        %1989 = vst [vmem:[#allocation2 + $0x28] sm:$0xff] %v1957
        %1990 = vst [vmem:[#allocation2 + $0x30] sm:$0xff] %v1958
        %1991 = vst [vmem:[#allocation2 + $0x38] sm:$0xff] %v1959
        %1992 = vst [vmem:[#allocation2 + $0x40] sm:$0xff] %v1960
        %1993 = vst [vmem:[#allocation2 + $0x48] sm:$0xff] %v1961
        %1994 = vst [vmem:[#allocation2 + $0x50] sm:$0xff] %v1962
        %1995 = vst [vmem:[#allocation2 + $0x58] sm:$0xff] %v1963
        %1996 = vst [vmem:[#allocation2 + $0x60] sm:$0xff] %v1964
        %1997 = vst [vmem:[#allocation2 + $0x68] sm:$0xff] %v1965
        %1998 = vst [vmem:[#allocation2 + $0x70] sm:$0xff] %v1966
        %1999 = vst [vmem:[#allocation2 + $0x78] sm:$0xff] %v1967
        %2000 = vst [vmem:[#allocation2 + $0x80] sm:$0xff] %v1968
        %2001 = vst [vmem:[#allocation2 + $0x88] sm:$0xff] %v1969
        %2002 = vst [vmem:[#allocation2 + $0x90] sm:$0xff] %v1970
        %2003 = vst [vmem:[#allocation2 + $0x98] sm:$0xff] %v1971
        %2004 = vst [vmem:[#allocation2 + $0xa0] sm:$0xff] %v1972
        %2005 = vst [vmem:[#allocation2 + $0xa8] sm:$0xff] %v1973
        %2006 = vst [vmem:[#allocation2 + $0xb0] sm:$0xff] %v1974
        %2007 = vst [vmem:[#allocation2 + $0xb8] sm:$0xff] %v1975
        %2008 = vst [vmem:[#allocation2 + $0xc0] sm:$0xff] %v1976
        %2009 = vst [vmem:[#allocation2 + $0xc8] sm:$0xff] %v1977
        %2010 = vst [vmem:[#allocation2 + $0xd0] sm:$0xff] %v1978
        %2011 = vst [vmem:[#allocation2 + $0xd8] sm:$0xff] %v1979
        %2012 = vst [vmem:[#allocation2 + $0xe0] sm:$0xff] %v1980
        %2013 = vst [vmem:[#allocation2 + $0xe8] sm:$0xff] %v1981
        %2014 = vst [vmem:[#allocation2 + $0xf0] sm:$0xff] %v1982
        %2015 = vst [vmem:[#allocation2 + $0xf8] sm:$0xff] %v1983
        %s2016 = scalar_lea.vmem %s211, 12
        %v2017 = vld [vmem:[%s2016] sm:$0xf]
        %v2018 = vld [vmem:[%s2016 + $0x4] sm:$0xf]
        %v2019 = vld [vmem:[%s2016 + $0xc] sm:$0xf]
        %v2020 = vld [vmem:[%s2016 + $0x10] sm:$0xf]
        %v2021 = vld [vmem:[%s2016 + $0x18] sm:$0xf]
        %v2022 = vld [vmem:[%s2016 + $0x1c] sm:$0xf]
        %v2023 = vld [vmem:[%s2016 + $0x24] sm:$0xf]
        %v2024 = vld [vmem:[%s2016 + $0x28] sm:$0xf]
        %v2025 = vld [vmem:[%s2016 + $0x30] sm:$0xf]
        %v2026 = vld [vmem:[%s2016 + $0x34] sm:$0xf]
        %v2027 = vld [vmem:[%s2016 + $0x3c] sm:$0xf]
        %v2028 = vld [vmem:[%s2016 + $0x40] sm:$0xf]
        %v2029 = vld [vmem:[%s2016 + $0x48] sm:$0xf]
        %v2030 = vld [vmem:[%s2016 + $0x4c] sm:$0xf]
        %v2031 = vld [vmem:[%s2016 + $0x54] sm:$0xf]
        %v2032 = vld [vmem:[%s2016 + $0x58] sm:$0xf]
        %v2033 = vld [vmem:[%s2016 + $0x60] sm:$0xf]
        %v2034 = vld [vmem:[%s2016 + $0x64] sm:$0xf]
        %v2035 = vld [vmem:[%s2016 + $0x6c] sm:$0xf]
        %v2036 = vld [vmem:[%s2016 + $0x70] sm:$0xf]
        %v2037 = vld [vmem:[%s2016 + $0x78] sm:$0xf]
        %v2038 = vld [vmem:[%s2016 + $0x7c] sm:$0xf]
        %v2039 = vld [vmem:[%s2016 + $0x84] sm:$0xf]
        %v2040 = vld [vmem:[%s2016 + $0x88] sm:$0xf]
        %v2041 = vld [vmem:[%s2016 + $0x90] sm:$0xf]
        %v2042 = vld [vmem:[%s2016 + $0x94] sm:$0xf]
        %v2043 = vld [vmem:[%s2016 + $0x9c] sm:$0xf]
        %v2044 = vld [vmem:[%s2016 + $0xa0] sm:$0xf]
        %v2045 = vld [vmem:[%s2016 + $0xa8] sm:$0xf]
        %v2046 = vld [vmem:[%s2016 + $0xac] sm:$0xf]
        %v2047 = vld [vmem:[%s2016 + $0xb4] sm:$0xf]
        %v2048 = vld [vmem:[%s2016 + $0xb8] sm:$0xf]
        %s2049 = scalar_lea.vmem %s1, 192
        %v2050 = vld [vmem:[%s2049] sm:$0xf]
        %v2051 = vld [vmem:[%s2049 + $0x4] sm:$0xf]
        %v2052 = vld [vmem:[%s2049 + $0x8] sm:$0xf]
        %v2053 = vld [vmem:[%s2049 + $0xc] sm:$0xf]
        %v2054 = vld [vmem:[%s2049 + $0x10] sm:$0xf]
        %v2055 = vld [vmem:[%s2049 + $0x14] sm:$0xf]
        %v2056 = vld [vmem:[%s2049 + $0x18] sm:$0xf]
        %v2057 = vld [vmem:[%s2049 + $0x1c] sm:$0xf]
        %v2058 = vld [vmem:[%s2049 + $0x20] sm:$0xf]
        %v2059 = vld [vmem:[%s2049 + $0x24] sm:$0xf]
        %v2060 = vld [vmem:[%s2049 + $0x28] sm:$0xf]
        %v2061 = vld [vmem:[%s2049 + $0x2c] sm:$0xf]
        %v2062 = vld [vmem:[%s2049 + $0x30] sm:$0xf]
        %v2063 = vld [vmem:[%s2049 + $0x34] sm:$0xf]
        %v2064 = vld [vmem:[%s2049 + $0x38] sm:$0xf]
        %v2065 = vld [vmem:[%s2049 + $0x3c] sm:$0xf]
        %v2098 = vunpack.c.l.b16 %v2017
        %v2099 = vunpack.c.l.b16 %v2018
        %v2100 = vunpack.c.l.b16 %v2019
        %v2101 = vunpack.c.l.b16 %v2020
        %v2102 = vunpack.c.l.b16 %v2021
        %v2103 = vunpack.c.l.b16 %v2022
        %v2104 = vunpack.c.l.b16 %v2023
        %v2105 = vunpack.c.l.b16 %v2024
        %v2106 = vunpack.c.l.b16 %v2025
        %v2107 = vunpack.c.l.b16 %v2026
        %v2108 = vunpack.c.l.b16 %v2027
        %v2109 = vunpack.c.l.b16 %v2028
        %v2110 = vunpack.c.l.b16 %v2029
        %v2111 = vunpack.c.l.b16 %v2030
        %v2112 = vunpack.c.l.b16 %v2031
        %v2113 = vunpack.c.l.b16 %v2032
        %v2114 = vunpack.c.l.b16 %v2033
        %v2115 = vunpack.c.l.b16 %v2034
        %v2116 = vunpack.c.l.b16 %v2035
        %v2117 = vunpack.c.l.b16 %v2036
        %v2118 = vunpack.c.l.b16 %v2037
        %v2119 = vunpack.c.l.b16 %v2038
        %v2120 = vunpack.c.l.b16 %v2039
        %v2121 = vunpack.c.l.b16 %v2040
        %v2122 = vunpack.c.l.b16 %v2041
        %v2123 = vunpack.c.l.b16 %v2042
        %v2124 = vunpack.c.l.b16 %v2043
        %v2125 = vunpack.c.l.b16 %v2044
        %v2126 = vunpack.c.l.b16 %v2045
        %v2127 = vunpack.c.l.b16 %v2046
        %v2128 = vunpack.c.l.b16 %v2047
        %v2129 = vunpack.c.l.b16 %v2048
        %v2130 = vpack.c.b16 %v2099, %v2098
        %v2131 = vpack.c.b16 %v2101, %v2100
        %v2132 = vpack.c.b16 %v2103, %v2102
        %v2133 = vpack.c.b16 %v2105, %v2104
        %v2134 = vpack.c.b16 %v2107, %v2106
        %v2135 = vpack.c.b16 %v2109, %v2108
        %v2136 = vpack.c.b16 %v2111, %v2110
        %v2137 = vpack.c.b16 %v2113, %v2112
        %v2138 = vpack.c.b16 %v2115, %v2114
        %v2139 = vpack.c.b16 %v2117, %v2116
        %v2140 = vpack.c.b16 %v2119, %v2118
        %v2141 = vpack.c.b16 %v2121, %v2120
        %v2142 = vpack.c.b16 %v2123, %v2122
        %v2143 = vpack.c.b16 %v2125, %v2124
        %v2144 = vpack.c.b16 %v2127, %v2126
        %v2145 = vpack.c.b16 %v2129, %v2128
        %v2178 = vunpack.c.l.b16 %v2050
        %v2179 = vunpack.c.l.b16 %v2051
        %v2180 = vunpack.c.l.b16 %v2052
        %v2181 = vunpack.c.l.b16 %v2053
        %v2182 = vunpack.c.l.b16 %v2054
        %v2183 = vunpack.c.l.b16 %v2055
        %v2184 = vunpack.c.l.b16 %v2056
        %v2185 = vunpack.c.l.b16 %v2057
        %v2186 = vunpack.c.l.b16 %v2058
        %v2187 = vunpack.c.l.b16 %v2059
        %v2188 = vunpack.c.l.b16 %v2060
        %v2189 = vunpack.c.l.b16 %v2061
        %v2190 = vunpack.c.l.b16 %v2062
        %v2191 = vunpack.c.l.b16 %v2063
        %v2192 = vunpack.c.l.b16 %v2064
        %v2193 = vunpack.c.l.b16 %v2065
        %v2194 = vpack.c.b16 %v2179, %v2178
        %v2195 = vpack.c.b16 %v2181, %v2180
        %v2196 = vpack.c.b16 %v2183, %v2182
        %v2197 = vpack.c.b16 %v2185, %v2184
        %v2198 = vpack.c.b16 %v2187, %v2186
        %v2199 = vpack.c.b16 %v2189, %v2188
        %v2200 = vpack.c.b16 %v2191, %v2190
        %v2201 = vpack.c.b16 %v2193, %v2192
        %2210 = vmatprep.subr.bf16.mxu0 0
        %2211 = vmatpush1.bf16.msra.mxu0 %v2194
        %2212 = vmatprep.subr.bf16.mxu0 0
        %2213 = vmatpush1.bf16.msra.mxu0 %v2195
        %2214 = vmatprep.subr.bf16.mxu0 0
        %2215 = vmatpush1.bf16.msra.mxu0 %v2196
        %2216 = vmatprep.subr.bf16.mxu0 0
        %2217 = vmatpush1.bf16.msra.mxu0 %v2197
        %2218 = vmatprep.subr.bf16.mxu0 0
        %2219 = vmatpush1.bf16.msra.mxu0 %v2198
        %2220 = vmatprep.subr.bf16.mxu0 0
        %2221 = vmatpush1.bf16.msra.mxu0 %v2199
        %2222 = vmatprep.subr.bf16.mxu0 0
        %2223 = vmatpush1.bf16.msra.mxu0 %v2200
        %2224 = vmatprep.subr.bf16.mxu0 0
        %2225 = vmatpush1.bf16.msra.mxu0 %v2201
        %2226 = vmatprep.subr.bf16.mxu0 0
        %2227 = vmatpush1.bf16.msra.mxu0 0
        %2228 = vmatprep.subr.bf16.mxu0 0
        %2229 = vmatpush1.bf16.msra.mxu0 0
        %2230 = vmatprep.subr.bf16.mxu0 0
        %2231 = vmatpush1.bf16.msra.mxu0 0
        %2232 = vmatprep.subr.bf16.mxu0 0
        %2233 = vmatpush1.bf16.msra.mxu0 0
        %2234 = vmatprep.subr.bf16.mxu0 0
        %2235 = vmatpush1.bf16.msra.mxu0 0
        %2236 = vmatprep.subr.bf16.mxu0 0
        %2237 = vmatpush1.bf16.msra.mxu0 0
        %2238 = vmatprep.subr.bf16.mxu0 0
        %2239 = vmatpush1.bf16.msra.mxu0 0
        %2240 = vmatprep.subr.bf16.mxu0 0
        %2241 = vmatpush1.bf16.msra.mxu0 0
        %2242 = vmatprep.mubr.bf16.mxu0 0
        %2243 = vmatmul.mubr.bf16.gmra.mrb[0].mxu0 %v2130
        %v2244 = vpop.f32.mrb[0].mxu0
        %v2245 = vadd.f32 0.0, %v2244
        %v2246 = vpop.f32.mrb[0].mxu0
        %v2247 = vpop.f32.mrb[0].mxu0
        %v2248 = vadd.f32 0.0, %v2247
        %v2249 = vpop.f32.mrb[0].mxu0
        %2250 = vmatprep.mubr.bf16.mxu0 0
        %2251 = vmatmul.mubr.bf16.gmra.mrb[0].mxu0 %v2131
        %v2252 = vpop.f32.mrb[0].mxu0
        %v2253 = vadd.f32 0.0, %v2252
        %v2254 = vpop.f32.mrb[0].mxu0
        %v2255 = vpop.f32.mrb[0].mxu0
        %v2256 = vadd.f32 0.0, %v2255
        %v2257 = vpop.f32.mrb[0].mxu0
        %2258 = vmatprep.mubr.bf16.mxu0 0
        %2259 = vmatmul.mubr.bf16.gmra.mrb[0].mxu0 %v2132
        %v2260 = vpop.f32.mrb[0].mxu0
        %v2261 = vadd.f32 0.0, %v2260
        %v2262 = vpop.f32.mrb[0].mxu0
        %v2263 = vpop.f32.mrb[0].mxu0
        %v2264 = vadd.f32 0.0, %v2263
        %v2265 = vpop.f32.mrb[0].mxu0
        %2266 = vmatprep.mubr.bf16.mxu0 0
        %2267 = vmatmul.mubr.bf16.gmra.mrb[0].mxu0 %v2133
        %v2268 = vpop.f32.mrb[0].mxu0
        %v2269 = vadd.f32 0.0, %v2268
        %v2270 = vpop.f32.mrb[0].mxu0
        %v2271 = vpop.f32.mrb[0].mxu0
        %v2272 = vadd.f32 0.0, %v2271
        %v2273 = vpop.f32.mrb[0].mxu0
        %2274 = vmatprep.mubr.bf16.mxu0 0
        %2275 = vmatmul.mubr.bf16.gmra.mrb[0].mxu0 %v2134
        %v2276 = vpop.f32.mrb[0].mxu0
        %v2277 = vadd.f32 0.0, %v2276
        %v2278 = vpop.f32.mrb[0].mxu0
        %v2279 = vpop.f32.mrb[0].mxu0
        %v2280 = vadd.f32 0.0, %v2279
        %v2281 = vpop.f32.mrb[0].mxu0
        %2282 = vmatprep.mubr.bf16.mxu0 0
        %2283 = vmatmul.mubr.bf16.gmra.mrb[0].mxu0 %v2135
        %v2284 = vpop.f32.mrb[0].mxu0
        %v2285 = vadd.f32 0.0, %v2284
        %v2286 = vpop.f32.mrb[0].mxu0
        %v2287 = vpop.f32.mrb[0].mxu0
        %v2288 = vadd.f32 0.0, %v2287
        %v2289 = vpop.f32.mrb[0].mxu0
        %2290 = vmatprep.mubr.bf16.mxu0 0
        %2291 = vmatmul.mubr.bf16.gmra.mrb[0].mxu0 %v2136
        %v2292 = vpop.f32.mrb[0].mxu0
        %v2293 = vadd.f32 0.0, %v2292
        %v2294 = vpop.f32.mrb[0].mxu0
        %v2295 = vpop.f32.mrb[0].mxu0
        %v2296 = vadd.f32 0.0, %v2295
        %v2297 = vpop.f32.mrb[0].mxu0
        %2298 = vmatprep.mubr.bf16.mxu0 0
        %2299 = vmatmul.mubr.bf16.gmra.mrb[0].mxu0 %v2137
        %v2300 = vpop.f32.mrb[0].mxu0
        %v2301 = vadd.f32 0.0, %v2300
        %v2302 = vpop.f32.mrb[0].mxu0
        %v2303 = vpop.f32.mrb[0].mxu0
        %v2304 = vadd.f32 0.0, %v2303
        %v2305 = vpop.f32.mrb[0].mxu0
        %2306 = vmatprep.mubr.bf16.mxu0 0
        %2307 = vmatmul.mubr.bf16.gmra.mrb[0].mxu0 %v2138
        %v2308 = vpop.f32.mrb[0].mxu0
        %v2309 = vadd.f32 0.0, %v2308
        %v2310 = vpop.f32.mrb[0].mxu0
        %v2311 = vpop.f32.mrb[0].mxu0
        %v2312 = vadd.f32 0.0, %v2311
        %v2313 = vpop.f32.mrb[0].mxu0
        %2314 = vmatprep.mubr.bf16.mxu0 0
        %2315 = vmatmul.mubr.bf16.gmra.mrb[0].mxu0 %v2139
        %v2316 = vpop.f32.mrb[0].mxu0
        %v2317 = vadd.f32 0.0, %v2316
        %v2318 = vpop.f32.mrb[0].mxu0
        %v2319 = vpop.f32.mrb[0].mxu0
        %v2320 = vadd.f32 0.0, %v2319
        %v2321 = vpop.f32.mrb[0].mxu0
        %2322 = vmatprep.mubr.bf16.mxu0 0
        %2323 = vmatmul.mubr.bf16.gmra.mrb[0].mxu0 %v2140
        %v2324 = vpop.f32.mrb[0].mxu0
        %v2325 = vadd.f32 0.0, %v2324
        %v2326 = vpop.f32.mrb[0].mxu0
        %v2327 = vpop.f32.mrb[0].mxu0
        %v2328 = vadd.f32 0.0, %v2327
        %v2329 = vpop.f32.mrb[0].mxu0
        %2330 = vmatprep.mubr.bf16.mxu0 0
        %2331 = vmatmul.mubr.bf16.gmra.mrb[0].mxu0 %v2141
        %v2332 = vpop.f32.mrb[0].mxu0
        %v2333 = vadd.f32 0.0, %v2332
        %v2334 = vpop.f32.mrb[0].mxu0
        %v2335 = vpop.f32.mrb[0].mxu0
        %v2336 = vadd.f32 0.0, %v2335
        %v2337 = vpop.f32.mrb[0].mxu0
        %2338 = vmatprep.mubr.bf16.mxu0 0
        %2339 = vmatmul.mubr.bf16.gmra.mrb[0].mxu0 %v2142
        %v2340 = vpop.f32.mrb[0].mxu0
        %v2341 = vadd.f32 0.0, %v2340
        %v2342 = vpop.f32.mrb[0].mxu0
        %v2343 = vpop.f32.mrb[0].mxu0
        %v2344 = vadd.f32 0.0, %v2343
        %v2345 = vpop.f32.mrb[0].mxu0
        %2346 = vmatprep.mubr.bf16.mxu0 0
        %2347 = vmatmul.mubr.bf16.gmra.mrb[0].mxu0 %v2143
        %v2348 = vpop.f32.mrb[0].mxu0
        %v2349 = vadd.f32 0.0, %v2348
        %v2350 = vpop.f32.mrb[0].mxu0
        %v2351 = vpop.f32.mrb[0].mxu0
        %v2352 = vadd.f32 0.0, %v2351
        %v2353 = vpop.f32.mrb[0].mxu0
        %2354 = vmatprep.mubr.bf16.mxu0 0
        %2355 = vmatmul.mubr.bf16.gmra.mrb[0].mxu0 %v2144
        %v2356 = vpop.f32.mrb[0].mxu0
        %v2357 = vadd.f32 0.0, %v2356
        %v2358 = vpop.f32.mrb[0].mxu0
        %v2359 = vpop.f32.mrb[0].mxu0
        %v2360 = vadd.f32 0.0, %v2359
        %v2361 = vpop.f32.mrb[0].mxu0
        %2362 = vmatprep.mubr.bf16.mxu0 0
        %2363 = vmatmul.mubr.bf16.gmra.mrb[0].mxu0 %v2145
        %v2364 = vpop.f32.mrb[0].mxu0
        %v2365 = vadd.f32 0.0, %v2364
        %v2366 = vpop.f32.mrb[0].mxu0
        %v2367 = vpop.f32.mrb[0].mxu0
        %v2368 = vadd.f32 0.0, %v2367
        %v2369 = vpop.f32.mrb[0].mxu0
        %2370 = vdwg.mxu0
        %v2371 = vld [vmem:[#allocation2] sm:$0xff]
        %v2372 = vld [vmem:[#allocation2 + $0x8] sm:$0xff]
        %v2373 = vld [vmem:[#allocation2 + $0x10] sm:$0xff]
        %v2374 = vld [vmem:[#allocation2 + $0x18] sm:$0xff]
        %v2375 = vld [vmem:[#allocation2 + $0x20] sm:$0xff]
        %v2376 = vld [vmem:[#allocation2 + $0x28] sm:$0xff]
        %v2377 = vld [vmem:[#allocation2 + $0x30] sm:$0xff]
        %v2378 = vld [vmem:[#allocation2 + $0x38] sm:$0xff]
        %v2379 = vld [vmem:[#allocation2 + $0x40] sm:$0xff]
        %v2380 = vld [vmem:[#allocation2 + $0x48] sm:$0xff]
        %v2381 = vld [vmem:[#allocation2 + $0x50] sm:$0xff]
        %v2382 = vld [vmem:[#allocation2 + $0x58] sm:$0xff]
        %v2383 = vld [vmem:[#allocation2 + $0x60] sm:$0xff]
        %v2384 = vld [vmem:[#allocation2 + $0x68] sm:$0xff]
        %v2385 = vld [vmem:[#allocation2 + $0x70] sm:$0xff]
        %v2386 = vld [vmem:[#allocation2 + $0x78] sm:$0xff]
        %v2387 = vld [vmem:[#allocation2 + $0x80] sm:$0xff]
        %v2388 = vld [vmem:[#allocation2 + $0x88] sm:$0xff]
        %v2389 = vld [vmem:[#allocation2 + $0x90] sm:$0xff]
        %v2390 = vld [vmem:[#allocation2 + $0x98] sm:$0xff]
        %v2391 = vld [vmem:[#allocation2 + $0xa0] sm:$0xff]
        %v2392 = vld [vmem:[#allocation2 + $0xa8] sm:$0xff]
        %v2393 = vld [vmem:[#allocation2 + $0xb0] sm:$0xff]
        %v2394 = vld [vmem:[#allocation2 + $0xb8] sm:$0xff]
        %v2395 = vld [vmem:[#allocation2 + $0xc0] sm:$0xff]
        %v2396 = vld [vmem:[#allocation2 + $0xc8] sm:$0xff]
        %v2397 = vld [vmem:[#allocation2 + $0xd0] sm:$0xff]
        %v2398 = vld [vmem:[#allocation2 + $0xd8] sm:$0xff]
        %v2399 = vld [vmem:[#allocation2 + $0xe0] sm:$0xff]
        %v2400 = vld [vmem:[#allocation2 + $0xe8] sm:$0xff]
        %v2401 = vld [vmem:[#allocation2 + $0xf0] sm:$0xff]
        %v2402 = vld [vmem:[#allocation2 + $0xf8] sm:$0xff]
        %v2403 = vadd.f32 %v2371, %v2245
        %v2404 = vadd.f32 %v2372, %v2248
        %v2405 = vadd.f32 %v2373, %v2253
        %v2406 = vadd.f32 %v2374, %v2256
        %v2407 = vadd.f32 %v2375, %v2261
        %v2408 = vadd.f32 %v2376, %v2264
        %v2409 = vadd.f32 %v2377, %v2269
        %v2410 = vadd.f32 %v2378, %v2272
        %v2411 = vadd.f32 %v2379, %v2277
        %v2412 = vadd.f32 %v2380, %v2280
        %v2413 = vadd.f32 %v2381, %v2285
        %v2414 = vadd.f32 %v2382, %v2288
        %v2415 = vadd.f32 %v2383, %v2293
        %v2416 = vadd.f32 %v2384, %v2296
        %v2417 = vadd.f32 %v2385, %v2301
        %v2418 = vadd.f32 %v2386, %v2304
        %v2419 = vadd.f32 %v2387, %v2309
        %v2420 = vadd.f32 %v2388, %v2312
        %v2421 = vadd.f32 %v2389, %v2317
        %v2422 = vadd.f32 %v2390, %v2320
        %v2423 = vadd.f32 %v2391, %v2325
        %v2424 = vadd.f32 %v2392, %v2328
        %v2425 = vadd.f32 %v2393, %v2333
        %v2426 = vadd.f32 %v2394, %v2336
        %v2427 = vadd.f32 %v2395, %v2341
        %v2428 = vadd.f32 %v2396, %v2344
        %v2429 = vadd.f32 %v2397, %v2349
        %v2430 = vadd.f32 %v2398, %v2352
        %v2431 = vadd.f32 %v2399, %v2357
        %v2432 = vadd.f32 %v2400, %v2360
        %v2433 = vadd.f32 %v2401, %v2365
        %v2434 = vadd.f32 %v2402, %v2368
        %2435 = vst [vmem:[#allocation2] sm:$0xff] %v2403
        %2436 = vst [vmem:[#allocation2 + $0x8] sm:$0xff] %v2404
        %2437 = vst [vmem:[#allocation2 + $0x10] sm:$0xff] %v2405
        %2438 = vst [vmem:[#allocation2 + $0x18] sm:$0xff] %v2406
        %2439 = vst [vmem:[#allocation2 + $0x20] sm:$0xff] %v2407
        %2440 = vst [vmem:[#allocation2 + $0x28] sm:$0xff] %v2408
        %2441 = vst [vmem:[#allocation2 + $0x30] sm:$0xff] %v2409
        %2442 = vst [vmem:[#allocation2 + $0x38] sm:$0xff] %v2410
        %2443 = vst [vmem:[#allocation2 + $0x40] sm:$0xff] %v2411
        %2444 = vst [vmem:[#allocation2 + $0x48] sm:$0xff] %v2412
        %2445 = vst [vmem:[#allocation2 + $0x50] sm:$0xff] %v2413
        %2446 = vst [vmem:[#allocation2 + $0x58] sm:$0xff] %v2414
        %2447 = vst [vmem:[#allocation2 + $0x60] sm:$0xff] %v2415
        %2448 = vst [vmem:[#allocation2 + $0x68] sm:$0xff] %v2416
        %2449 = vst [vmem:[#allocation2 + $0x70] sm:$0xff] %v2417
        %2450 = vst [vmem:[#allocation2 + $0x78] sm:$0xff] %v2418
        %2451 = vst [vmem:[#allocation2 + $0x80] sm:$0xff] %v2419
        %2452 = vst [vmem:[#allocation2 + $0x88] sm:$0xff] %v2420
        %2453 = vst [vmem:[#allocation2 + $0x90] sm:$0xff] %v2421
        %2454 = vst [vmem:[#allocation2 + $0x98] sm:$0xff] %v2422
        %2455 = vst [vmem:[#allocation2 + $0xa0] sm:$0xff] %v2423
        %2456 = vst [vmem:[#allocation2 + $0xa8] sm:$0xff] %v2424
        %2457 = vst [vmem:[#allocation2 + $0xb0] sm:$0xff] %v2425
        %2458 = vst [vmem:[#allocation2 + $0xb8] sm:$0xff] %v2426
        %2459 = vst [vmem:[#allocation2 + $0xc0] sm:$0xff] %v2427
        %2460 = vst [vmem:[#allocation2 + $0xc8] sm:$0xff] %v2428
        %2461 = vst [vmem:[#allocation2 + $0xd0] sm:$0xff] %v2429
        %2462 = vst [vmem:[#allocation2 + $0xd8] sm:$0xff] %v2430
        %2463 = vst [vmem:[#allocation2 + $0xe0] sm:$0xff] %v2431
        %2464 = vst [vmem:[#allocation2 + $0xe8] sm:$0xff] %v2432
        %2465 = vst [vmem:[#allocation2 + $0xf0] sm:$0xff] %v2433
        %2466 = vst [vmem:[#allocation2 + $0xf8] sm:$0xff] %v2434
        %v2467 = vld [vmem:[%s2016] sm:$0xf]
        %v2468 = vld [vmem:[%s2016 + $0x4] sm:$0xf]
        %v2469 = vld [vmem:[%s2016 + $0x8] sm:$0x1]
        %v2470 = vld [vmem:[%s2016 + $0xc] sm:$0xf]
        %v2471 = vld [vmem:[%s2016 + $0x10] sm:$0xf]
        %v2472 = vld [vmem:[%s2016 + $0x14] sm:$0x1]
        %v2473 = vld [vmem:[%s2016 + $0x18] sm:$0xf]
        %v2474 = vld [vmem:[%s2016 + $0x1c] sm:$0xf]
        %v2475 = vld [vmem:[%s2016 + $0x20] sm:$0x1]
        %v2476 = vld [vmem:[%s2016 + $0x24] sm:$0xf]
        %v2477 = vld [vmem:[%s2016 + $0x28] sm:$0xf]
        %v2478 = vld [vmem:[%s2016 + $0x2c] sm:$0x1]
        %v2479 = vld [vmem:[%s2016 + $0x30] sm:$0xf]
        %v2480 = vld [vmem:[%s2016 + $0x34] sm:$0xf]
        %v2481 = vld [vmem:[%s2016 + $0x38] sm:$0x1]
        %v2482 = vld [vmem:[%s2016 + $0x3c] sm:$0xf]
        %v2483 = vld [vmem:[%s2016 + $0x40] sm:$0xf]
        %v2484 = vld [vmem:[%s2016 + $0x44] sm:$0x1]
        %v2485 = vld [vmem:[%s2016 + $0x48] sm:$0xf]
        %v2486 = vld [vmem:[%s2016 + $0x4c] sm:$0xf]
        %v2487 = vld [vmem:[%s2016 + $0x50] sm:$0x1]
        %v2488 = vld [vmem:[%s2016 + $0x54] sm:$0xf]
        %v2489 = vld [vmem:[%s2016 + $0x58] sm:$0xf]
        %v2490 = vld [vmem:[%s2016 + $0x5c] sm:$0x1]
        %v2491 = vld [vmem:[%s2016 + $0x60] sm:$0xf]
        %v2492 = vld [vmem:[%s2016 + $0x64] sm:$0xf]
        %v2493 = vld [vmem:[%s2016 + $0x68] sm:$0x1]
        %v2494 = vld [vmem:[%s2016 + $0x6c] sm:$0xf]
        %v2495 = vld [vmem:[%s2016 + $0x70] sm:$0xf]
        %v2496 = vld [vmem:[%s2016 + $0x74] sm:$0x1]
        %v2497 = vld [vmem:[%s2016 + $0x78] sm:$0xf]
        %v2498 = vld [vmem:[%s2016 + $0x7c] sm:$0xf]
        %v2499 = vld [vmem:[%s2016 + $0x80] sm:$0x1]
        %v2500 = vld [vmem:[%s2016 + $0x84] sm:$0xf]
        %v2501 = vld [vmem:[%s2016 + $0x88] sm:$0xf]
        %v2502 = vld [vmem:[%s2016 + $0x8c] sm:$0x1]
        %v2503 = vld [vmem:[%s2016 + $0x90] sm:$0xf]
        %v2504 = vld [vmem:[%s2016 + $0x94] sm:$0xf]
        %v2505 = vld [vmem:[%s2016 + $0x98] sm:$0x1]
        %v2506 = vld [vmem:[%s2016 + $0x9c] sm:$0xf]
        %v2507 = vld [vmem:[%s2016 + $0xa0] sm:$0xf]
        %v2508 = vld [vmem:[%s2016 + $0xa4] sm:$0x1]
        %v2509 = vld [vmem:[%s2016 + $0xa8] sm:$0xf]
        %v2510 = vld [vmem:[%s2016 + $0xac] sm:$0xf]
        %v2511 = vld [vmem:[%s2016 + $0xb0] sm:$0x1]
        %v2512 = vld [vmem:[%s2016 + $0xb4] sm:$0xf]
        %v2513 = vld [vmem:[%s2016 + $0xb8] sm:$0xf]
        %v2514 = vld [vmem:[%s2016 + $0xbc] sm:$0x1]
        %v2516 = vshrl.u32 %v2467, 16
        %v2518 = vrot.slane %v2516, 4
        %v2519 = vshll.u32 %v2467, 16
        %v2521 = vrot.slane %v2519, 5
        %v2522 = vor.u32 %v2518, %v2521
        %v2523 = vrot.slane %v2522, 4
        %v2525 = vshll.u32 %v2468, 16
        %v2527 = vrot.slane %v2525, 5
        %v2528 = vsel %vm648, %v2523, %v2527
        %v2529 = vshrl.u32 %v2468, 16
        %v2531 = vrot.slane %v2529, 4
        %v2532 = vor.u32 %v2531, %v2527
        %v2533 = vrot.slane %v2532, 4
        %v2535 = vshll.u32 %v2469, 16
        %v2537 = vrot.slane %v2535, 5
        %v2538 = vsel %vm648, %v2533, %v2537
        %v2540 = vshrl.u32 %v2470, 16
        %v2542 = vrot.slane %v2540, 4
        %v2543 = vshll.u32 %v2470, 16
        %v2545 = vrot.slane %v2543, 5
        %v2546 = vor.u32 %v2542, %v2545
        %v2547 = vrot.slane %v2546, 4
        %v2549 = vshll.u32 %v2471, 16
        %v2551 = vrot.slane %v2549, 5
        %v2552 = vsel %vm648, %v2547, %v2551
        %v2553 = vshrl.u32 %v2471, 16
        %v2555 = vrot.slane %v2553, 4
        %v2556 = vor.u32 %v2555, %v2551
        %v2557 = vrot.slane %v2556, 4
        %v2559 = vshll.u32 %v2472, 16
        %v2561 = vrot.slane %v2559, 5
        %v2562 = vsel %vm648, %v2557, %v2561
        %v2564 = vshrl.u32 %v2473, 16
        %v2566 = vrot.slane %v2564, 4
        %v2567 = vshll.u32 %v2473, 16
        %v2569 = vrot.slane %v2567, 5
        %v2570 = vor.u32 %v2566, %v2569
        %v2571 = vrot.slane %v2570, 4
        %v2573 = vshll.u32 %v2474, 16
        %v2575 = vrot.slane %v2573, 5
        %v2576 = vsel %vm648, %v2571, %v2575
        %v2577 = vshrl.u32 %v2474, 16
        %v2579 = vrot.slane %v2577, 4
        %v2580 = vor.u32 %v2579, %v2575
        %v2581 = vrot.slane %v2580, 4
        %v2583 = vshll.u32 %v2475, 16
        %v2585 = vrot.slane %v2583, 5
        %v2586 = vsel %vm648, %v2581, %v2585
        %v2588 = vshrl.u32 %v2476, 16
        %v2590 = vrot.slane %v2588, 4
        %v2591 = vshll.u32 %v2476, 16
        %v2593 = vrot.slane %v2591, 5
        %v2594 = vor.u32 %v2590, %v2593
        %v2595 = vrot.slane %v2594, 4
        %v2597 = vshll.u32 %v2477, 16
        %v2599 = vrot.slane %v2597, 5
        %v2600 = vsel %vm648, %v2595, %v2599
        %v2601 = vshrl.u32 %v2477, 16
        %v2603 = vrot.slane %v2601, 4
        %v2604 = vor.u32 %v2603, %v2599
        %v2605 = vrot.slane %v2604, 4
        %v2607 = vshll.u32 %v2478, 16
        %v2609 = vrot.slane %v2607, 5
        %v2610 = vsel %vm648, %v2605, %v2609
        %v2612 = vshrl.u32 %v2479, 16
        %v2614 = vrot.slane %v2612, 4
        %v2615 = vshll.u32 %v2479, 16
        %v2617 = vrot.slane %v2615, 5
        %v2618 = vor.u32 %v2614, %v2617
        %v2619 = vrot.slane %v2618, 4
        %v2621 = vshll.u32 %v2480, 16
        %v2623 = vrot.slane %v2621, 5
        %v2624 = vsel %vm648, %v2619, %v2623
        %v2625 = vshrl.u32 %v2480, 16
        %v2627 = vrot.slane %v2625, 4
        %v2628 = vor.u32 %v2627, %v2623
        %v2629 = vrot.slane %v2628, 4
        %v2631 = vshll.u32 %v2481, 16
        %v2633 = vrot.slane %v2631, 5
        %v2634 = vsel %vm648, %v2629, %v2633
        %v2636 = vshrl.u32 %v2482, 16
        %v2638 = vrot.slane %v2636, 4
        %v2639 = vshll.u32 %v2482, 16
        %v2641 = vrot.slane %v2639, 5
        %v2642 = vor.u32 %v2638, %v2641
        %v2643 = vrot.slane %v2642, 4
        %v2645 = vshll.u32 %v2483, 16
        %v2647 = vrot.slane %v2645, 5
        %v2648 = vsel %vm648, %v2643, %v2647
        %v2649 = vshrl.u32 %v2483, 16
        %v2651 = vrot.slane %v2649, 4
        %v2652 = vor.u32 %v2651, %v2647
        %v2653 = vrot.slane %v2652, 4
        %v2655 = vshll.u32 %v2484, 16
        %v2657 = vrot.slane %v2655, 5
        %v2658 = vsel %vm648, %v2653, %v2657
        %v2660 = vshrl.u32 %v2485, 16
        %v2662 = vrot.slane %v2660, 4
        %v2663 = vshll.u32 %v2485, 16
        %v2665 = vrot.slane %v2663, 5
        %v2666 = vor.u32 %v2662, %v2665
        %v2667 = vrot.slane %v2666, 4
        %v2669 = vshll.u32 %v2486, 16
        %v2671 = vrot.slane %v2669, 5
        %v2672 = vsel %vm648, %v2667, %v2671
        %v2673 = vshrl.u32 %v2486, 16
        %v2675 = vrot.slane %v2673, 4
        %v2676 = vor.u32 %v2675, %v2671
        %v2677 = vrot.slane %v2676, 4
        %v2679 = vshll.u32 %v2487, 16
        %v2681 = vrot.slane %v2679, 5
        %v2682 = vsel %vm648, %v2677, %v2681
        %v2684 = vshrl.u32 %v2488, 16
        %v2686 = vrot.slane %v2684, 4
        %v2687 = vshll.u32 %v2488, 16
        %v2689 = vrot.slane %v2687, 5
        %v2690 = vor.u32 %v2686, %v2689
        %v2691 = vrot.slane %v2690, 4
        %v2693 = vshll.u32 %v2489, 16
        %v2695 = vrot.slane %v2693, 5
        %v2696 = vsel %vm648, %v2691, %v2695
        %v2697 = vshrl.u32 %v2489, 16
        %v2699 = vrot.slane %v2697, 4
        %v2700 = vor.u32 %v2699, %v2695
        %v2701 = vrot.slane %v2700, 4
        %v2703 = vshll.u32 %v2490, 16
        %v2705 = vrot.slane %v2703, 5
        %v2706 = vsel %vm648, %v2701, %v2705
        %v2708 = vshrl.u32 %v2491, 16
        %v2710 = vrot.slane %v2708, 4
        %v2711 = vshll.u32 %v2491, 16
        %v2713 = vrot.slane %v2711, 5
        %v2714 = vor.u32 %v2710, %v2713
        %v2715 = vrot.slane %v2714, 4
        %v2717 = vshll.u32 %v2492, 16
        %v2719 = vrot.slane %v2717, 5
        %v2720 = vsel %vm648, %v2715, %v2719
        %v2721 = vshrl.u32 %v2492, 16
        %v2723 = vrot.slane %v2721, 4
        %v2724 = vor.u32 %v2723, %v2719
        %v2725 = vrot.slane %v2724, 4
        %v2727 = vshll.u32 %v2493, 16
        %v2729 = vrot.slane %v2727, 5
        %v2730 = vsel %vm648, %v2725, %v2729
        %v2732 = vshrl.u32 %v2494, 16
        %v2734 = vrot.slane %v2732, 4
        %v2735 = vshll.u32 %v2494, 16
        %v2737 = vrot.slane %v2735, 5
        %v2738 = vor.u32 %v2734, %v2737
        %v2739 = vrot.slane %v2738, 4
        %v2741 = vshll.u32 %v2495, 16
        %v2743 = vrot.slane %v2741, 5
        %v2744 = vsel %vm648, %v2739, %v2743
        %v2745 = vshrl.u32 %v2495, 16
        %v2747 = vrot.slane %v2745, 4
        %v2748 = vor.u32 %v2747, %v2743
        %v2749 = vrot.slane %v2748, 4
        %v2751 = vshll.u32 %v2496, 16
        %v2753 = vrot.slane %v2751, 5
        %v2754 = vsel %vm648, %v2749, %v2753
        %v2756 = vshrl.u32 %v2497, 16
        %v2758 = vrot.slane %v2756, 4
        %v2759 = vshll.u32 %v2497, 16
        %v2761 = vrot.slane %v2759, 5
        %v2762 = vor.u32 %v2758, %v2761
        %v2763 = vrot.slane %v2762, 4
        %v2765 = vshll.u32 %v2498, 16
        %v2767 = vrot.slane %v2765, 5
        %v2768 = vsel %vm648, %v2763, %v2767
        %v2769 = vshrl.u32 %v2498, 16
        %v2771 = vrot.slane %v2769, 4
        %v2772 = vor.u32 %v2771, %v2767
        %v2773 = vrot.slane %v2772, 4
        %v2775 = vshll.u32 %v2499, 16
        %v2777 = vrot.slane %v2775, 5
        %v2778 = vsel %vm648, %v2773, %v2777
        %v2780 = vshrl.u32 %v2500, 16
        %v2782 = vrot.slane %v2780, 4
        %v2783 = vshll.u32 %v2500, 16
        %v2785 = vrot.slane %v2783, 5
        %v2786 = vor.u32 %v2782, %v2785
        %v2787 = vrot.slane %v2786, 4
        %v2789 = vshll.u32 %v2501, 16
        %v2791 = vrot.slane %v2789, 5
        %v2792 = vsel %vm648, %v2787, %v2791
        %v2793 = vshrl.u32 %v2501, 16
        %v2795 = vrot.slane %v2793, 4
        %v2796 = vor.u32 %v2795, %v2791
        %v2797 = vrot.slane %v2796, 4
        %v2799 = vshll.u32 %v2502, 16
        %v2801 = vrot.slane %v2799, 5
        %v2802 = vsel %vm648, %v2797, %v2801
        %v2804 = vshrl.u32 %v2503, 16
        %v2806 = vrot.slane %v2804, 4
        %v2807 = vshll.u32 %v2503, 16
        %v2809 = vrot.slane %v2807, 5
        %v2810 = vor.u32 %v2806, %v2809
        %v2811 = vrot.slane %v2810, 4
        %v2813 = vshll.u32 %v2504, 16
        %v2815 = vrot.slane %v2813, 5
        %v2816 = vsel %vm648, %v2811, %v2815
        %v2817 = vshrl.u32 %v2504, 16
        %v2819 = vrot.slane %v2817, 4
        %v2820 = vor.u32 %v2819, %v2815
        %v2821 = vrot.slane %v2820, 4
        %v2823 = vshll.u32 %v2505, 16
        %v2825 = vrot.slane %v2823, 5
        %v2826 = vsel %vm648, %v2821, %v2825
        %v2828 = vshrl.u32 %v2506, 16
        %v2830 = vrot.slane %v2828, 4
        %v2831 = vshll.u32 %v2506, 16
        %v2833 = vrot.slane %v2831, 5
        %v2834 = vor.u32 %v2830, %v2833
        %v2835 = vrot.slane %v2834, 4
        %v2837 = vshll.u32 %v2507, 16
        %v2839 = vrot.slane %v2837, 5
        %v2840 = vsel %vm648, %v2835, %v2839
        %v2841 = vshrl.u32 %v2507, 16
        %v2843 = vrot.slane %v2841, 4
        %v2844 = vor.u32 %v2843, %v2839
        %v2845 = vrot.slane %v2844, 4
        %v2847 = vshll.u32 %v2508, 16
        %v2849 = vrot.slane %v2847, 5
        %v2850 = vsel %vm648, %v2845, %v2849
        %v2852 = vshrl.u32 %v2509, 16
        %v2854 = vrot.slane %v2852, 4
        %v2855 = vshll.u32 %v2509, 16
        %v2857 = vrot.slane %v2855, 5
        %v2858 = vor.u32 %v2854, %v2857
        %v2859 = vrot.slane %v2858, 4
        %v2861 = vshll.u32 %v2510, 16
        %v2863 = vrot.slane %v2861, 5
        %v2864 = vsel %vm648, %v2859, %v2863
        %v2865 = vshrl.u32 %v2510, 16
        %v2867 = vrot.slane %v2865, 4
        %v2868 = vor.u32 %v2867, %v2863
        %v2869 = vrot.slane %v2868, 4
        %v2871 = vshll.u32 %v2511, 16
        %v2873 = vrot.slane %v2871, 5
        %v2874 = vsel %vm648, %v2869, %v2873
        %v2876 = vshrl.u32 %v2512, 16
        %v2878 = vrot.slane %v2876, 4
        %v2879 = vshll.u32 %v2512, 16
        %v2881 = vrot.slane %v2879, 5
        %v2882 = vor.u32 %v2878, %v2881
        %v2883 = vrot.slane %v2882, 4
        %v2885 = vshll.u32 %v2513, 16
        %v2887 = vrot.slane %v2885, 5
        %v2888 = vsel %vm648, %v2883, %v2887
        %v2889 = vshrl.u32 %v2513, 16
        %v2891 = vrot.slane %v2889, 4
        %v2892 = vor.u32 %v2891, %v2887
        %v2893 = vrot.slane %v2892, 4
        %v2895 = vshll.u32 %v2514, 16
        %v2897 = vrot.slane %v2895, 5
        %v2898 = vsel %vm648, %v2893, %v2897
        %s2899 = scalar_lea.vmem %s1, 256
        %v2900 = vld [vmem:[%s2899] sm:$0xf]
        %v2901 = vld [vmem:[%s2899 + $0x4] sm:$0xf]
        %v2902 = vld [vmem:[%s2899 + $0x8] sm:$0xf]
        %v2903 = vld [vmem:[%s2899 + $0xc] sm:$0xf]
        %v2904 = vld [vmem:[%s2899 + $0x10] sm:$0xf]
        %v2905 = vld [vmem:[%s2899 + $0x14] sm:$0xf]
        %v2906 = vld [vmem:[%s2899 + $0x18] sm:$0xf]
        %v2907 = vld [vmem:[%s2899 + $0x1c] sm:$0xf]
        %v2908 = vld [vmem:[%s2899 + $0x20] sm:$0xf]
        %v2909 = vld [vmem:[%s2899 + $0x24] sm:$0xf]
        %v2910 = vld [vmem:[%s2899 + $0x28] sm:$0xf]
        %v2911 = vld [vmem:[%s2899 + $0x2c] sm:$0xf]
        %v2912 = vld [vmem:[%s2899 + $0x30] sm:$0xf]
        %v2913 = vld [vmem:[%s2899 + $0x34] sm:$0xf]
        %v2914 = vld [vmem:[%s2899 + $0x38] sm:$0xf]
        %v2915 = vld [vmem:[%s2899 + $0x3c] sm:$0xf]
        %v2916 = vunpack.c.l.b16 %v2528
        %v2917 = vunpack.c.l.b16 %v2538
        %v2918 = vunpack.c.l.b16 %v2552
        %v2919 = vunpack.c.l.b16 %v2562
        %v2920 = vunpack.c.l.b16 %v2576
        %v2921 = vunpack.c.l.b16 %v2586
        %v2922 = vunpack.c.l.b16 %v2600
        %v2923 = vunpack.c.l.b16 %v2610
        %v2924 = vunpack.c.l.b16 %v2624
        %v2925 = vunpack.c.l.b16 %v2634
        %v2926 = vunpack.c.l.b16 %v2648
        %v2927 = vunpack.c.l.b16 %v2658
        %v2928 = vunpack.c.l.b16 %v2672
        %v2929 = vunpack.c.l.b16 %v2682
        %v2930 = vunpack.c.l.b16 %v2696
        %v2931 = vunpack.c.l.b16 %v2706
        %v2932 = vunpack.c.l.b16 %v2720
        %v2933 = vunpack.c.l.b16 %v2730
        %v2934 = vunpack.c.l.b16 %v2744
        %v2935 = vunpack.c.l.b16 %v2754
        %v2936 = vunpack.c.l.b16 %v2768
        %v2937 = vunpack.c.l.b16 %v2778
        %v2938 = vunpack.c.l.b16 %v2792
        %v2939 = vunpack.c.l.b16 %v2802
        %v2940 = vunpack.c.l.b16 %v2816
        %v2941 = vunpack.c.l.b16 %v2826
        %v2942 = vunpack.c.l.b16 %v2840
        %v2943 = vunpack.c.l.b16 %v2850
        %v2944 = vunpack.c.l.b16 %v2864
        %v2945 = vunpack.c.l.b16 %v2874
        %v2946 = vunpack.c.l.b16 %v2888
        %v2947 = vunpack.c.l.b16 %v2898
        %v2948 = vpack.c.b16 %v2917, %v2916
        %v2949 = vpack.c.b16 %v2919, %v2918
        %v2950 = vpack.c.b16 %v2921, %v2920
        %v2951 = vpack.c.b16 %v2923, %v2922
        %v2952 = vpack.c.b16 %v2925, %v2924
        %v2953 = vpack.c.b16 %v2927, %v2926
        %v2954 = vpack.c.b16 %v2929, %v2928
        %v2955 = vpack.c.b16 %v2931, %v2930
        %v2956 = vpack.c.b16 %v2933, %v2932
        %v2957 = vpack.c.b16 %v2935, %v2934
        %v2958 = vpack.c.b16 %v2937, %v2936
        %v2959 = vpack.c.b16 %v2939, %v2938
        %v2960 = vpack.c.b16 %v2941, %v2940
        %v2961 = vpack.c.b16 %v2943, %v2942
        %v2962 = vpack.c.b16 %v2945, %v2944
        %v2963 = vpack.c.b16 %v2947, %v2946
        %v2996 = vunpack.c.l.b16 %v2900
        %v2997 = vunpack.c.l.b16 %v2901
        %v2998 = vunpack.c.l.b16 %v2902
        %v2999 = vunpack.c.l.b16 %v2903
        %v3000 = vunpack.c.l.b16 %v2904
        %v3001 = vunpack.c.l.b16 %v2905
        %v3002 = vunpack.c.l.b16 %v2906
        %v3003 = vunpack.c.l.b16 %v2907
        %v3004 = vunpack.c.l.b16 %v2908
        %v3005 = vunpack.c.l.b16 %v2909
        %v3006 = vunpack.c.l.b16 %v2910
        %v3007 = vunpack.c.l.b16 %v2911
        %v3008 = vunpack.c.l.b16 %v2912
        %v3009 = vunpack.c.l.b16 %v2913
        %v3010 = vunpack.c.l.b16 %v2914
        %v3011 = vunpack.c.l.b16 %v2915
        %v3012 = vpack.c.b16 %v2997, %v2996
        %v3013 = vpack.c.b16 %v2999, %v2998
        %v3014 = vpack.c.b16 %v3001, %v3000
        %v3015 = vpack.c.b16 %v3003, %v3002
        %v3016 = vpack.c.b16 %v3005, %v3004
        %v3017 = vpack.c.b16 %v3007, %v3006
        %v3018 = vpack.c.b16 %v3009, %v3008
        %v3019 = vpack.c.b16 %v3011, %v3010
        %3028 = vmatprep.subr.bf16.mxu0 0
        %3029 = vmatpush1.bf16.msra.mxu0 %v3012
        %3030 = vmatprep.subr.bf16.mxu0 0
        %3031 = vmatpush1.bf16.msra.mxu0 %v3013
        %3032 = vmatprep.subr.bf16.mxu0 0
        %3033 = vmatpush1.bf16.msra.mxu0 %v3014
        %3034 = vmatprep.subr.bf16.mxu0 0
        %3035 = vmatpush1.bf16.msra.mxu0 %v3015
        %3036 = vmatprep.subr.bf16.mxu0 0
        %3037 = vmatpush1.bf16.msra.mxu0 %v3016
        %3038 = vmatprep.subr.bf16.mxu0 0
        %3039 = vmatpush1.bf16.msra.mxu0 %v3017
        %3040 = vmatprep.subr.bf16.mxu0 0
        %3041 = vmatpush1.bf16.msra.mxu0 %v3018
        %3042 = vmatprep.subr.bf16.mxu0 0
        %3043 = vmatpush1.bf16.msra.mxu0 %v3019
        %3044 = vmatprep.subr.bf16.mxu0 0
        %3045 = vmatpush1.bf16.msra.mxu0 0
        %3046 = vmatprep.subr.bf16.mxu0 0
        %3047 = vmatpush1.bf16.msra.mxu0 0
        %3048 = vmatprep.subr.bf16.mxu0 0
        %3049 = vmatpush1.bf16.msra.mxu0 0
        %3050 = vmatprep.subr.bf16.mxu0 0
        %3051 = vmatpush1.bf16.msra.mxu0 0
        %3052 = vmatprep.subr.bf16.mxu0 0
        %3053 = vmatpush1.bf16.msra.mxu0 0
        %3054 = vmatprep.subr.bf16.mxu0 0
        %3055 = vmatpush1.bf16.msra.mxu0 0
        %3056 = vmatprep.subr.bf16.mxu0 0
        %3057 = vmatpush1.bf16.msra.mxu0 0
        %3058 = vmatprep.subr.bf16.mxu0 0
        %3059 = vmatpush1.bf16.msra.mxu0 0
        %3060 = vmatprep.mubr.bf16.mxu0 0
        %3061 = vmatmul.mubr.bf16.gmra.mrb[0].mxu0 %v2948
        %v3062 = vpop.f32.mrb[0].mxu0
        %v3063 = vadd.f32 0.0, %v3062
        %v3064 = vpop.f32.mrb[0].mxu0
        %v3065 = vpop.f32.mrb[0].mxu0
        %v3066 = vadd.f32 0.0, %v3065
        %v3067 = vpop.f32.mrb[0].mxu0
        %3068 = vmatprep.mubr.bf16.mxu0 0
        %3069 = vmatmul.mubr.bf16.gmra.mrb[0].mxu0 %v2949
        %v3070 = vpop.f32.mrb[0].mxu0
        %v3071 = vadd.f32 0.0, %v3070
        %v3072 = vpop.f32.mrb[0].mxu0
        %v3073 = vpop.f32.mrb[0].mxu0
        %v3074 = vadd.f32 0.0, %v3073
        %v3075 = vpop.f32.mrb[0].mxu0
        %3076 = vmatprep.mubr.bf16.mxu0 0
        %3077 = vmatmul.mubr.bf16.gmra.mrb[0].mxu0 %v2950
        %v3078 = vpop.f32.mrb[0].mxu0
        %v3079 = vadd.f32 0.0, %v3078
        %v3080 = vpop.f32.mrb[0].mxu0
        %v3081 = vpop.f32.mrb[0].mxu0
        %v3082 = vadd.f32 0.0, %v3081
        %v3083 = vpop.f32.mrb[0].mxu0
        %3084 = vmatprep.mubr.bf16.mxu0 0
        %3085 = vmatmul.mubr.bf16.gmra.mrb[0].mxu0 %v2951
        %v3086 = vpop.f32.mrb[0].mxu0
        %v3087 = vadd.f32 0.0, %v3086
        %v3088 = vpop.f32.mrb[0].mxu0
        %v3089 = vpop.f32.mrb[0].mxu0
        %v3090 = vadd.f32 0.0, %v3089
        %v3091 = vpop.f32.mrb[0].mxu0
        %3092 = vmatprep.mubr.bf16.mxu0 0
        %3093 = vmatmul.mubr.bf16.gmra.mrb[0].mxu0 %v2952
        %v3094 = vpop.f32.mrb[0].mxu0
        %v3095 = vadd.f32 0.0, %v3094
        %v3096 = vpop.f32.mrb[0].mxu0
        %v3097 = vpop.f32.mrb[0].mxu0
        %v3098 = vadd.f32 0.0, %v3097
        %v3099 = vpop.f32.mrb[0].mxu0
        %3100 = vmatprep.mubr.bf16.mxu0 0
        %3101 = vmatmul.mubr.bf16.gmra.mrb[0].mxu0 %v2953
        %v3102 = vpop.f32.mrb[0].mxu0
        %v3103 = vadd.f32 0.0, %v3102
        %v3104 = vpop.f32.mrb[0].mxu0
        %v3105 = vpop.f32.mrb[0].mxu0
        %v3106 = vadd.f32 0.0, %v3105
        %v3107 = vpop.f32.mrb[0].mxu0
        %3108 = vmatprep.mubr.bf16.mxu0 0
        %3109 = vmatmul.mubr.bf16.gmra.mrb[0].mxu0 %v2954
        %v3110 = vpop.f32.mrb[0].mxu0
        %v3111 = vadd.f32 0.0, %v3110
        %v3112 = vpop.f32.mrb[0].mxu0
        %v3113 = vpop.f32.mrb[0].mxu0
        %v3114 = vadd.f32 0.0, %v3113
        %v3115 = vpop.f32.mrb[0].mxu0
        %3116 = vmatprep.mubr.bf16.mxu0 0
        %3117 = vmatmul.mubr.bf16.gmra.mrb[0].mxu0 %v2955
        %v3118 = vpop.f32.mrb[0].mxu0
        %v3119 = vadd.f32 0.0, %v3118
        %v3120 = vpop.f32.mrb[0].mxu0
        %v3121 = vpop.f32.mrb[0].mxu0
        %v3122 = vadd.f32 0.0, %v3121
        %v3123 = vpop.f32.mrb[0].mxu0
        %3124 = vmatprep.mubr.bf16.mxu0 0
        %3125 = vmatmul.mubr.bf16.gmra.mrb[0].mxu0 %v2956
        %v3126 = vpop.f32.mrb[0].mxu0
        %v3127 = vadd.f32 0.0, %v3126
        %v3128 = vpop.f32.mrb[0].mxu0
        %v3129 = vpop.f32.mrb[0].mxu0
        %v3130 = vadd.f32 0.0, %v3129
        %v3131 = vpop.f32.mrb[0].mxu0
        %3132 = vmatprep.mubr.bf16.mxu0 0
        %3133 = vmatmul.mubr.bf16.gmra.mrb[0].mxu0 %v2957
        %v3134 = vpop.f32.mrb[0].mxu0
        %v3135 = vadd.f32 0.0, %v3134
        %v3136 = vpop.f32.mrb[0].mxu0
        %v3137 = vpop.f32.mrb[0].mxu0
        %v3138 = vadd.f32 0.0, %v3137
        %v3139 = vpop.f32.mrb[0].mxu0
        %3140 = vmatprep.mubr.bf16.mxu0 0
        %3141 = vmatmul.mubr.bf16.gmra.mrb[0].mxu0 %v2958
        %v3142 = vpop.f32.mrb[0].mxu0
        %v3143 = vadd.f32 0.0, %v3142
        %v3144 = vpop.f32.mrb[0].mxu0
        %v3145 = vpop.f32.mrb[0].mxu0
        %v3146 = vadd.f32 0.0, %v3145
        %v3147 = vpop.f32.mrb[0].mxu0
        %3148 = vmatprep.mubr.bf16.mxu0 0
        %3149 = vmatmul.mubr.bf16.gmra.mrb[0].mxu0 %v2959
        %v3150 = vpop.f32.mrb[0].mxu0
        %v3151 = vadd.f32 0.0, %v3150
        %v3152 = vpop.f32.mrb[0].mxu0
        %v3153 = vpop.f32.mrb[0].mxu0
        %v3154 = vadd.f32 0.0, %v3153
        %v3155 = vpop.f32.mrb[0].mxu0
        %3156 = vmatprep.mubr.bf16.mxu0 0
        %3157 = vmatmul.mubr.bf16.gmra.mrb[0].mxu0 %v2960
        %v3158 = vpop.f32.mrb[0].mxu0
        %v3159 = vadd.f32 0.0, %v3158
        %v3160 = vpop.f32.mrb[0].mxu0
        %v3161 = vpop.f32.mrb[0].mxu0
        %v3162 = vadd.f32 0.0, %v3161
        %v3163 = vpop.f32.mrb[0].mxu0
        %3164 = vmatprep.mubr.bf16.mxu0 0
        %3165 = vmatmul.mubr.bf16.gmra.mrb[0].mxu0 %v2961
        %v3166 = vpop.f32.mrb[0].mxu0
        %v3167 = vadd.f32 0.0, %v3166
        %v3168 = vpop.f32.mrb[0].mxu0
        %v3169 = vpop.f32.mrb[0].mxu0
        %v3170 = vadd.f32 0.0, %v3169
        %v3171 = vpop.f32.mrb[0].mxu0
        %3172 = vmatprep.mubr.bf16.mxu0 0
        %3173 = vmatmul.mubr.bf16.gmra.mrb[0].mxu0 %v2962
        %v3174 = vpop.f32.mrb[0].mxu0
        %v3175 = vadd.f32 0.0, %v3174
        %v3176 = vpop.f32.mrb[0].mxu0
        %v3177 = vpop.f32.mrb[0].mxu0
        %v3178 = vadd.f32 0.0, %v3177
        %v3179 = vpop.f32.mrb[0].mxu0
        %3180 = vmatprep.mubr.bf16.mxu0 0
        %3181 = vmatmul.mubr.bf16.gmra.mrb[0].mxu0 %v2963
        %v3182 = vpop.f32.mrb[0].mxu0
        %v3183 = vadd.f32 0.0, %v3182
        %v3184 = vpop.f32.mrb[0].mxu0
        %v3185 = vpop.f32.mrb[0].mxu0
        %v3186 = vadd.f32 0.0, %v3185
        %v3187 = vpop.f32.mrb[0].mxu0
        %3188 = vdwg.mxu0
        %v3189 = vld [vmem:[#allocation2] sm:$0xff]
        %v3190 = vld [vmem:[#allocation2 + $0x8] sm:$0xff]
        %v3191 = vld [vmem:[#allocation2 + $0x10] sm:$0xff]
        %v3192 = vld [vmem:[#allocation2 + $0x18] sm:$0xff]
        %v3193 = vld [vmem:[#allocation2 + $0x20] sm:$0xff]
        %v3194 = vld [vmem:[#allocation2 + $0x28] sm:$0xff]
        %v3195 = vld [vmem:[#allocation2 + $0x30] sm:$0xff]
        %v3196 = vld [vmem:[#allocation2 + $0x38] sm:$0xff]
        %v3197 = vld [vmem:[#allocation2 + $0x40] sm:$0xff]
        %v3198 = vld [vmem:[#allocation2 + $0x48] sm:$0xff]
        %v3199 = vld [vmem:[#allocation2 + $0x50] sm:$0xff]
        %v3200 = vld [vmem:[#allocation2 + $0x58] sm:$0xff]
        %v3201 = vld [vmem:[#allocation2 + $0x60] sm:$0xff]
        %v3202 = vld [vmem:[#allocation2 + $0x68] sm:$0xff]
        %v3203 = vld [vmem:[#allocation2 + $0x70] sm:$0xff]
        %v3204 = vld [vmem:[#allocation2 + $0x78] sm:$0xff]
        %v3205 = vld [vmem:[#allocation2 + $0x80] sm:$0xff]
        %v3206 = vld [vmem:[#allocation2 + $0x88] sm:$0xff]
        %v3207 = vld [vmem:[#allocation2 + $0x90] sm:$0xff]
        %v3208 = vld [vmem:[#allocation2 + $0x98] sm:$0xff]
        %v3209 = vld [vmem:[#allocation2 + $0xa0] sm:$0xff]
        %v3210 = vld [vmem:[#allocation2 + $0xa8] sm:$0xff]
        %v3211 = vld [vmem:[#allocation2 + $0xb0] sm:$0xff]
        %v3212 = vld [vmem:[#allocation2 + $0xb8] sm:$0xff]
        %v3213 = vld [vmem:[#allocation2 + $0xc0] sm:$0xff]
        %v3214 = vld [vmem:[#allocation2 + $0xc8] sm:$0xff]
        %v3215 = vld [vmem:[#allocation2 + $0xd0] sm:$0xff]
        %v3216 = vld [vmem:[#allocation2 + $0xd8] sm:$0xff]
        %v3217 = vld [vmem:[#allocation2 + $0xe0] sm:$0xff]
        %v3218 = vld [vmem:[#allocation2 + $0xe8] sm:$0xff]
        %v3219 = vld [vmem:[#allocation2 + $0xf0] sm:$0xff]
        %v3220 = vld [vmem:[#allocation2 + $0xf8] sm:$0xff]
        %v3221 = vadd.f32 %v3189, %v3063
        %v3222 = vadd.f32 %v3190, %v3066
        %v3223 = vadd.f32 %v3191, %v3071
        %v3224 = vadd.f32 %v3192, %v3074
        %v3225 = vadd.f32 %v3193, %v3079
        %v3226 = vadd.f32 %v3194, %v3082
        %v3227 = vadd.f32 %v3195, %v3087
        %v3228 = vadd.f32 %v3196, %v3090
        %v3229 = vadd.f32 %v3197, %v3095
        %v3230 = vadd.f32 %v3198, %v3098
        %v3231 = vadd.f32 %v3199, %v3103
        %v3232 = vadd.f32 %v3200, %v3106
        %v3233 = vadd.f32 %v3201, %v3111
        %v3234 = vadd.f32 %v3202, %v3114
        %v3235 = vadd.f32 %v3203, %v3119
        %v3236 = vadd.f32 %v3204, %v3122
        %v3237 = vadd.f32 %v3205, %v3127
        %v3238 = vadd.f32 %v3206, %v3130
        %v3239 = vadd.f32 %v3207, %v3135
        %v3240 = vadd.f32 %v3208, %v3138
        %v3241 = vadd.f32 %v3209, %v3143
        %v3242 = vadd.f32 %v3210, %v3146
        %v3243 = vadd.f32 %v3211, %v3151
        %v3244 = vadd.f32 %v3212, %v3154
        %v3245 = vadd.f32 %v3213, %v3159
        %v3246 = vadd.f32 %v3214, %v3162
        %v3247 = vadd.f32 %v3215, %v3167
        %v3248 = vadd.f32 %v3216, %v3170
        %v3249 = vadd.f32 %v3217, %v3175
        %v3250 = vadd.f32 %v3218, %v3178
        %v3251 = vadd.f32 %v3219, %v3183
        %v3252 = vadd.f32 %v3220, %v3186
        %3253 = vst [vmem:[#allocation2] sm:$0xff] %v3221
        %3254 = vst [vmem:[#allocation2 + $0x8] sm:$0xff] %v3222
        %3255 = vst [vmem:[#allocation2 + $0x10] sm:$0xff] %v3223
        %3256 = vst [vmem:[#allocation2 + $0x18] sm:$0xff] %v3224
        %3257 = vst [vmem:[#allocation2 + $0x20] sm:$0xff] %v3225
        %3258 = vst [vmem:[#allocation2 + $0x28] sm:$0xff] %v3226
        %3259 = vst [vmem:[#allocation2 + $0x30] sm:$0xff] %v3227
        %3260 = vst [vmem:[#allocation2 + $0x38] sm:$0xff] %v3228
        %3261 = vst [vmem:[#allocation2 + $0x40] sm:$0xff] %v3229
        %3262 = vst [vmem:[#allocation2 + $0x48] sm:$0xff] %v3230
        %3263 = vst [vmem:[#allocation2 + $0x50] sm:$0xff] %v3231
        %3264 = vst [vmem:[#allocation2 + $0x58] sm:$0xff] %v3232
        %3265 = vst [vmem:[#allocation2 + $0x60] sm:$0xff] %v3233
        %3266 = vst [vmem:[#allocation2 + $0x68] sm:$0xff] %v3234
        %3267 = vst [vmem:[#allocation2 + $0x70] sm:$0xff] %v3235
        %3268 = vst [vmem:[#allocation2 + $0x78] sm:$0xff] %v3236
        %3269 = vst [vmem:[#allocation2 + $0x80] sm:$0xff] %v3237
        %3270 = vst [vmem:[#allocation2 + $0x88] sm:$0xff] %v3238
        %3271 = vst [vmem:[#allocation2 + $0x90] sm:$0xff] %v3239
        %3272 = vst [vmem:[#allocation2 + $0x98] sm:$0xff] %v3240
        %3273 = vst [vmem:[#allocation2 + $0xa0] sm:$0xff] %v3241
        %3274 = vst [vmem:[#allocation2 + $0xa8] sm:$0xff] %v3242
        %3275 = vst [vmem:[#allocation2 + $0xb0] sm:$0xff] %v3243
        %3276 = vst [vmem:[#allocation2 + $0xb8] sm:$0xff] %v3244
        %3277 = vst [vmem:[#allocation2 + $0xc0] sm:$0xff] %v3245
        %3278 = vst [vmem:[#allocation2 + $0xc8] sm:$0xff] %v3246
        %3279 = vst [vmem:[#allocation2 + $0xd0] sm:$0xff] %v3247
        %3280 = vst [vmem:[#allocation2 + $0xd8] sm:$0xff] %v3248
        %3281 = vst [vmem:[#allocation2 + $0xe0] sm:$0xff] %v3249
        %3282 = vst [vmem:[#allocation2 + $0xe8] sm:$0xff] %v3250
        %3283 = vst [vmem:[#allocation2 + $0xf0] sm:$0xff] %v3251
        %3284 = vst [vmem:[#allocation2 + $0xf8] sm:$0xff] %v3252
        %v3285 = vld [vmem:[%s2016] sm:$0xe]
        %v3286 = vld [vmem:[%s2016 + $0x4] sm:$0xf]
        %v3287 = vld [vmem:[%s2016 + $0x8] sm:$0x1]
        %v3288 = vld [vmem:[%s2016 + $0xc] sm:$0xe]
        %v3289 = vld [vmem:[%s2016 + $0x10] sm:$0xf]
        %v3290 = vld [vmem:[%s2016 + $0x14] sm:$0x1]
        %v3291 = vld [vmem:[%s2016 + $0x18] sm:$0xe]
        %v3292 = vld [vmem:[%s2016 + $0x1c] sm:$0xf]
        %v3293 = vld [vmem:[%s2016 + $0x20] sm:$0x1]
        %v3294 = vld [vmem:[%s2016 + $0x24] sm:$0xe]
        %v3295 = vld [vmem:[%s2016 + $0x28] sm:$0xf]
        %v3296 = vld [vmem:[%s2016 + $0x2c] sm:$0x1]
        %v3297 = vld [vmem:[%s2016 + $0x30] sm:$0xe]
        %v3298 = vld [vmem:[%s2016 + $0x34] sm:$0xf]
        %v3299 = vld [vmem:[%s2016 + $0x38] sm:$0x1]
        %v3300 = vld [vmem:[%s2016 + $0x3c] sm:$0xe]
        %v3301 = vld [vmem:[%s2016 + $0x40] sm:$0xf]
        %v3302 = vld [vmem:[%s2016 + $0x44] sm:$0x1]
        %v3303 = vld [vmem:[%s2016 + $0x48] sm:$0xe]
        %v3304 = vld [vmem:[%s2016 + $0x4c] sm:$0xf]
        %v3305 = vld [vmem:[%s2016 + $0x50] sm:$0x1]
        %v3306 = vld [vmem:[%s2016 + $0x54] sm:$0xe]
        %v3307 = vld [vmem:[%s2016 + $0x58] sm:$0xf]
        %v3308 = vld [vmem:[%s2016 + $0x5c] sm:$0x1]
        %v3309 = vld [vmem:[%s2016 + $0x60] sm:$0xe]
        %v3310 = vld [vmem:[%s2016 + $0x64] sm:$0xf]
        %v3311 = vld [vmem:[%s2016 + $0x68] sm:$0x1]
        %v3312 = vld [vmem:[%s2016 + $0x6c] sm:$0xe]
        %v3313 = vld [vmem:[%s2016 + $0x70] sm:$0xf]
        %v3314 = vld [vmem:[%s2016 + $0x74] sm:$0x1]
        %v3315 = vld [vmem:[%s2016 + $0x78] sm:$0xe]
        %v3316 = vld [vmem:[%s2016 + $0x7c] sm:$0xf]
        %v3317 = vld [vmem:[%s2016 + $0x80] sm:$0x1]
        %v3318 = vld [vmem:[%s2016 + $0x84] sm:$0xe]
        %v3319 = vld [vmem:[%s2016 + $0x88] sm:$0xf]
        %v3320 = vld [vmem:[%s2016 + $0x8c] sm:$0x1]
        %v3321 = vld [vmem:[%s2016 + $0x90] sm:$0xe]
        %v3322 = vld [vmem:[%s2016 + $0x94] sm:$0xf]
        %v3323 = vld [vmem:[%s2016 + $0x98] sm:$0x1]
        %v3324 = vld [vmem:[%s2016 + $0x9c] sm:$0xe]
        %v3325 = vld [vmem:[%s2016 + $0xa0] sm:$0xf]
        %v3326 = vld [vmem:[%s2016 + $0xa4] sm:$0x1]
        %v3327 = vld [vmem:[%s2016 + $0xa8] sm:$0xe]
        %v3328 = vld [vmem:[%s2016 + $0xac] sm:$0xf]
        %v3329 = vld [vmem:[%s2016 + $0xb0] sm:$0x1]
        %v3330 = vld [vmem:[%s2016 + $0xb4] sm:$0xe]
        %v3331 = vld [vmem:[%s2016 + $0xb8] sm:$0xf]
        %v3332 = vld [vmem:[%s2016 + $0xbc] sm:$0x1]
        %v3381 = vrot.slane %v3285, 5
        %v3382 = vrot.slane %v3381, 4
        %v3383 = vrot.slane %v3286, 5
        %v3384 = vsel %vm1517, %v3382, %v3383
        %v3385 = vrot.slane %v3383, 4
        %v3386 = vrot.slane %v3287, 5
        %v3387 = vsel %vm1517, %v3385, %v3386
        %v3388 = vrot.slane %v3288, 5
        %v3389 = vrot.slane %v3388, 4
        %v3390 = vrot.slane %v3289, 5
        %v3391 = vsel %vm1517, %v3389, %v3390
        %v3392 = vrot.slane %v3390, 4
        %v3393 = vrot.slane %v3290, 5
        %v3394 = vsel %vm1517, %v3392, %v3393
        %v3395 = vrot.slane %v3291, 5
        %v3396 = vrot.slane %v3395, 4
        %v3397 = vrot.slane %v3292, 5
        %v3398 = vsel %vm1517, %v3396, %v3397
        %v3399 = vrot.slane %v3397, 4
        %v3400 = vrot.slane %v3293, 5
        %v3401 = vsel %vm1517, %v3399, %v3400
        %v3402 = vrot.slane %v3294, 5
        %v3403 = vrot.slane %v3402, 4
        %v3404 = vrot.slane %v3295, 5
        %v3405 = vsel %vm1517, %v3403, %v3404
        %v3406 = vrot.slane %v3404, 4
        %v3407 = vrot.slane %v3296, 5
        %v3408 = vsel %vm1517, %v3406, %v3407
        %v3409 = vrot.slane %v3297, 5
        %v3410 = vrot.slane %v3409, 4
        %v3411 = vrot.slane %v3298, 5
        %v3412 = vsel %vm1517, %v3410, %v3411
        %v3413 = vrot.slane %v3411, 4
        %v3414 = vrot.slane %v3299, 5
        %v3415 = vsel %vm1517, %v3413, %v3414
        %v3416 = vrot.slane %v3300, 5
        %v3417 = vrot.slane %v3416, 4
        %v3418 = vrot.slane %v3301, 5
        %v3419 = vsel %vm1517, %v3417, %v3418
        %v3420 = vrot.slane %v3418, 4
        %v3421 = vrot.slane %v3302, 5
        %v3422 = vsel %vm1517, %v3420, %v3421
        %v3423 = vrot.slane %v3303, 5
        %v3424 = vrot.slane %v3423, 4
        %v3425 = vrot.slane %v3304, 5
        %v3426 = vsel %vm1517, %v3424, %v3425
        %v3427 = vrot.slane %v3425, 4
        %v3428 = vrot.slane %v3305, 5
        %v3429 = vsel %vm1517, %v3427, %v3428
        %v3430 = vrot.slane %v3306, 5
        %v3431 = vrot.slane %v3430, 4
        %v3432 = vrot.slane %v3307, 5
        %v3433 = vsel %vm1517, %v3431, %v3432
        %v3434 = vrot.slane %v3432, 4
        %v3435 = vrot.slane %v3308, 5
        %v3436 = vsel %vm1517, %v3434, %v3435
        %v3437 = vrot.slane %v3309, 5
        %v3438 = vrot.slane %v3437, 4
        %v3439 = vrot.slane %v3310, 5
        %v3440 = vsel %vm1517, %v3438, %v3439
        %v3441 = vrot.slane %v3439, 4
        %v3442 = vrot.slane %v3311, 5
        %v3443 = vsel %vm1517, %v3441, %v3442
        %v3444 = vrot.slane %v3312, 5
        %v3445 = vrot.slane %v3444, 4
        %v3446 = vrot.slane %v3313, 5
        %v3447 = vsel %vm1517, %v3445, %v3446
        %v3448 = vrot.slane %v3446, 4
        %v3449 = vrot.slane %v3314, 5
        %v3450 = vsel %vm1517, %v3448, %v3449
        %v3451 = vrot.slane %v3315, 5
        %v3452 = vrot.slane %v3451, 4
        %v3453 = vrot.slane %v3316, 5
        %v3454 = vsel %vm1517, %v3452, %v3453
        %v3455 = vrot.slane %v3453, 4
        %v3456 = vrot.slane %v3317, 5
        %v3457 = vsel %vm1517, %v3455, %v3456
        %v3458 = vrot.slane %v3318, 5
        %v3459 = vrot.slane %v3458, 4
        %v3460 = vrot.slane %v3319, 5
        %v3461 = vsel %vm1517, %v3459, %v3460
        %v3462 = vrot.slane %v3460, 4
        %v3463 = vrot.slane %v3320, 5
        %v3464 = vsel %vm1517, %v3462, %v3463
        %v3465 = vrot.slane %v3321, 5
        %v3466 = vrot.slane %v3465, 4
        %v3467 = vrot.slane %v3322, 5
        %v3468 = vsel %vm1517, %v3466, %v3467
        %v3469 = vrot.slane %v3467, 4
        %v3470 = vrot.slane %v3323, 5
        %v3471 = vsel %vm1517, %v3469, %v3470
        %v3472 = vrot.slane %v3324, 5
        %v3473 = vrot.slane %v3472, 4
        %v3474 = vrot.slane %v3325, 5
        %v3475 = vsel %vm1517, %v3473, %v3474
        %v3476 = vrot.slane %v3474, 4
        %v3477 = vrot.slane %v3326, 5
        %v3478 = vsel %vm1517, %v3476, %v3477
        %v3479 = vrot.slane %v3327, 5
        %v3480 = vrot.slane %v3479, 4
        %v3481 = vrot.slane %v3328, 5
        %v3482 = vsel %vm1517, %v3480, %v3481
        %v3483 = vrot.slane %v3481, 4
        %v3484 = vrot.slane %v3329, 5
        %v3485 = vsel %vm1517, %v3483, %v3484
        %v3486 = vrot.slane %v3330, 5
        %v3487 = vrot.slane %v3486, 4
        %v3488 = vrot.slane %v3331, 5
        %v3489 = vsel %vm1517, %v3487, %v3488
        %v3490 = vrot.slane %v3488, 4
        %v3491 = vrot.slane %v3332, 5
        %v3492 = vsel %vm1517, %v3490, %v3491
        %s3493 = scalar_lea.vmem %s1, 320
        %v3494 = vld [vmem:[%s3493] sm:$0xf]
        %v3495 = vld [vmem:[%s3493 + $0x4] sm:$0xf]
        %v3496 = vld [vmem:[%s3493 + $0x8] sm:$0xf]
        %v3497 = vld [vmem:[%s3493 + $0xc] sm:$0xf]
        %v3498 = vld [vmem:[%s3493 + $0x10] sm:$0xf]
        %v3499 = vld [vmem:[%s3493 + $0x14] sm:$0xf]
        %v3500 = vld [vmem:[%s3493 + $0x18] sm:$0xf]
        %v3501 = vld [vmem:[%s3493 + $0x1c] sm:$0xf]
        %v3502 = vld [vmem:[%s3493 + $0x20] sm:$0xf]
        %v3503 = vld [vmem:[%s3493 + $0x24] sm:$0xf]
        %v3504 = vld [vmem:[%s3493 + $0x28] sm:$0xf]
        %v3505 = vld [vmem:[%s3493 + $0x2c] sm:$0xf]
        %v3506 = vld [vmem:[%s3493 + $0x30] sm:$0xf]
        %v3507 = vld [vmem:[%s3493 + $0x34] sm:$0xf]
        %v3508 = vld [vmem:[%s3493 + $0x38] sm:$0xf]
        %v3509 = vld [vmem:[%s3493 + $0x3c] sm:$0xf]
        %v3510 = vunpack.c.l.b16 %v3384
        %v3511 = vunpack.c.l.b16 %v3387
        %v3512 = vunpack.c.l.b16 %v3391
        %v3513 = vunpack.c.l.b16 %v3394
        %v3514 = vunpack.c.l.b16 %v3398
        %v3515 = vunpack.c.l.b16 %v3401
        %v3516 = vunpack.c.l.b16 %v3405
        %v3517 = vunpack.c.l.b16 %v3408
        %v3518 = vunpack.c.l.b16 %v3412
        %v3519 = vunpack.c.l.b16 %v3415
        %v3520 = vunpack.c.l.b16 %v3419
        %v3521 = vunpack.c.l.b16 %v3422
        %v3522 = vunpack.c.l.b16 %v3426
        %v3523 = vunpack.c.l.b16 %v3429
        %v3524 = vunpack.c.l.b16 %v3433
        %v3525 = vunpack.c.l.b16 %v3436
        %v3526 = vunpack.c.l.b16 %v3440
        %v3527 = vunpack.c.l.b16 %v3443
        %v3528 = vunpack.c.l.b16 %v3447
        %v3529 = vunpack.c.l.b16 %v3450
        %v3530 = vunpack.c.l.b16 %v3454
        %v3531 = vunpack.c.l.b16 %v3457
        %v3532 = vunpack.c.l.b16 %v3461
        %v3533 = vunpack.c.l.b16 %v3464
        %v3534 = vunpack.c.l.b16 %v3468
        %v3535 = vunpack.c.l.b16 %v3471
        %v3536 = vunpack.c.l.b16 %v3475
        %v3537 = vunpack.c.l.b16 %v3478
        %v3538 = vunpack.c.l.b16 %v3482
        %v3539 = vunpack.c.l.b16 %v3485
        %v3540 = vunpack.c.l.b16 %v3489
        %v3541 = vunpack.c.l.b16 %v3492
        %v3542 = vpack.c.b16 %v3511, %v3510
        %v3543 = vpack.c.b16 %v3513, %v3512
        %v3544 = vpack.c.b16 %v3515, %v3514
        %v3545 = vpack.c.b16 %v3517, %v3516
        %v3546 = vpack.c.b16 %v3519, %v3518
        %v3547 = vpack.c.b16 %v3521, %v3520
        %v3548 = vpack.c.b16 %v3523, %v3522
        %v3549 = vpack.c.b16 %v3525, %v3524
        %v3550 = vpack.c.b16 %v3527, %v3526
        %v3551 = vpack.c.b16 %v3529, %v3528
        %v3552 = vpack.c.b16 %v3531, %v3530
        %v3553 = vpack.c.b16 %v3533, %v3532
        %v3554 = vpack.c.b16 %v3535, %v3534
        %v3555 = vpack.c.b16 %v3537, %v3536
        %v3556 = vpack.c.b16 %v3539, %v3538
        %v3557 = vpack.c.b16 %v3541, %v3540
        %v3590 = vunpack.c.l.b16 %v3494
        %v3591 = vunpack.c.l.b16 %v3495
        %v3592 = vunpack.c.l.b16 %v3496
        %v3593 = vunpack.c.l.b16 %v3497
        %v3594 = vunpack.c.l.b16 %v3498
        %v3595 = vunpack.c.l.b16 %v3499
        %v3596 = vunpack.c.l.b16 %v3500
        %v3597 = vunpack.c.l.b16 %v3501
        %v3598 = vunpack.c.l.b16 %v3502
        %v3599 = vunpack.c.l.b16 %v3503
        %v3600 = vunpack.c.l.b16 %v3504
        %v3601 = vunpack.c.l.b16 %v3505
        %v3602 = vunpack.c.l.b16 %v3506
        %v3603 = vunpack.c.l.b16 %v3507
        %v3604 = vunpack.c.l.b16 %v3508
        %v3605 = vunpack.c.l.b16 %v3509
        %v3606 = vpack.c.b16 %v3591, %v3590
        %v3607 = vpack.c.b16 %v3593, %v3592
        %v3608 = vpack.c.b16 %v3595, %v3594
        %v3609 = vpack.c.b16 %v3597, %v3596
        %v3610 = vpack.c.b16 %v3599, %v3598
        %v3611 = vpack.c.b16 %v3601, %v3600
        %v3612 = vpack.c.b16 %v3603, %v3602
        %v3613 = vpack.c.b16 %v3605, %v3604
        %3622 = vmatprep.subr.bf16.mxu0 0
        %3623 = vmatpush1.bf16.msra.mxu0 %v3606
        %3624 = vmatprep.subr.bf16.mxu0 0
        %3625 = vmatpush1.bf16.msra.mxu0 %v3607
        %3626 = vmatprep.subr.bf16.mxu0 0
        %3627 = vmatpush1.bf16.msra.mxu0 %v3608
        %3628 = vmatprep.subr.bf16.mxu0 0
        %3629 = vmatpush1.bf16.msra.mxu0 %v3609
        %3630 = vmatprep.subr.bf16.mxu0 0
        %3631 = vmatpush1.bf16.msra.mxu0 %v3610
        %3632 = vmatprep.subr.bf16.mxu0 0
        %3633 = vmatpush1.bf16.msra.mxu0 %v3611
        %3634 = vmatprep.subr.bf16.mxu0 0
        %3635 = vmatpush1.bf16.msra.mxu0 %v3612
        %3636 = vmatprep.subr.bf16.mxu0 0
        %3637 = vmatpush1.bf16.msra.mxu0 %v3613
        %3638 = vmatprep.subr.bf16.mxu0 0
        %3639 = vmatpush1.bf16.msra.mxu0 0
        %3640 = vmatprep.subr.bf16.mxu0 0
        %3641 = vmatpush1.bf16.msra.mxu0 0
        %3642 = vmatprep.subr.bf16.mxu0 0
        %3643 = vmatpush1.bf16.msra.mxu0 0
        %3644 = vmatprep.subr.bf16.mxu0 0
        %3645 = vmatpush1.bf16.msra.mxu0 0
        %3646 = vmatprep.subr.bf16.mxu0 0
        %3647 = vmatpush1.bf16.msra.mxu0 0
        %3648 = vmatprep.subr.bf16.mxu0 0
        %3649 = vmatpush1.bf16.msra.mxu0 0
        %3650 = vmatprep.subr.bf16.mxu0 0
        %3651 = vmatpush1.bf16.msra.mxu0 0
        %3652 = vmatprep.subr.bf16.mxu0 0
        %3653 = vmatpush1.bf16.msra.mxu0 0
        %3654 = vmatprep.mubr.bf16.mxu0 0
        %3655 = vmatmul.mubr.bf16.gmra.mrb[0].mxu0 %v3542
        %v3656 = vpop.f32.mrb[0].mxu0
        %v3657 = vadd.f32 0.0, %v3656
        %v3658 = vpop.f32.mrb[0].mxu0
        %v3659 = vpop.f32.mrb[0].mxu0
        %v3660 = vadd.f32 0.0, %v3659
        %v3661 = vpop.f32.mrb[0].mxu0
        %3662 = vmatprep.mubr.bf16.mxu0 0
        %3663 = vmatmul.mubr.bf16.gmra.mrb[0].mxu0 %v3543
        %v3664 = vpop.f32.mrb[0].mxu0
        %v3665 = vadd.f32 0.0, %v3664
        %v3666 = vpop.f32.mrb[0].mxu0
        %v3667 = vpop.f32.mrb[0].mxu0
        %v3668 = vadd.f32 0.0, %v3667
        %v3669 = vpop.f32.mrb[0].mxu0
        %3670 = vmatprep.mubr.bf16.mxu0 0
        %3671 = vmatmul.mubr.bf16.gmra.mrb[0].mxu0 %v3544
        %v3672 = vpop.f32.mrb[0].mxu0
        %v3673 = vadd.f32 0.0, %v3672
        %v3674 = vpop.f32.mrb[0].mxu0
        %v3675 = vpop.f32.mrb[0].mxu0
        %v3676 = vadd.f32 0.0, %v3675
        %v3677 = vpop.f32.mrb[0].mxu0
        %3678 = vmatprep.mubr.bf16.mxu0 0
        %3679 = vmatmul.mubr.bf16.gmra.mrb[0].mxu0 %v3545
        %v3680 = vpop.f32.mrb[0].mxu0
        %v3681 = vadd.f32 0.0, %v3680
        %v3682 = vpop.f32.mrb[0].mxu0
        %v3683 = vpop.f32.mrb[0].mxu0
        %v3684 = vadd.f32 0.0, %v3683
        %v3685 = vpop.f32.mrb[0].mxu0
        %3686 = vmatprep.mubr.bf16.mxu0 0
        %3687 = vmatmul.mubr.bf16.gmra.mrb[0].mxu0 %v3546
        %v3688 = vpop.f32.mrb[0].mxu0
        %v3689 = vadd.f32 0.0, %v3688
        %v3690 = vpop.f32.mrb[0].mxu0
        %v3691 = vpop.f32.mrb[0].mxu0
        %v3692 = vadd.f32 0.0, %v3691
        %v3693 = vpop.f32.mrb[0].mxu0
        %3694 = vmatprep.mubr.bf16.mxu0 0
        %3695 = vmatmul.mubr.bf16.gmra.mrb[0].mxu0 %v3547
        %v3696 = vpop.f32.mrb[0].mxu0
        %v3697 = vadd.f32 0.0, %v3696
        %v3698 = vpop.f32.mrb[0].mxu0
        %v3699 = vpop.f32.mrb[0].mxu0
        %v3700 = vadd.f32 0.0, %v3699
        %v3701 = vpop.f32.mrb[0].mxu0
        %3702 = vmatprep.mubr.bf16.mxu0 0
        %3703 = vmatmul.mubr.bf16.gmra.mrb[0].mxu0 %v3548
        %v3704 = vpop.f32.mrb[0].mxu0
        %v3705 = vadd.f32 0.0, %v3704
        %v3706 = vpop.f32.mrb[0].mxu0
        %v3707 = vpop.f32.mrb[0].mxu0
        %v3708 = vadd.f32 0.0, %v3707
        %v3709 = vpop.f32.mrb[0].mxu0
        %3710 = vmatprep.mubr.bf16.mxu0 0
        %3711 = vmatmul.mubr.bf16.gmra.mrb[0].mxu0 %v3549
        %v3712 = vpop.f32.mrb[0].mxu0
        %v3713 = vadd.f32 0.0, %v3712
        %v3714 = vpop.f32.mrb[0].mxu0
        %v3715 = vpop.f32.mrb[0].mxu0
        %v3716 = vadd.f32 0.0, %v3715
        %v3717 = vpop.f32.mrb[0].mxu0
        %3718 = vmatprep.mubr.bf16.mxu0 0
        %3719 = vmatmul.mubr.bf16.gmra.mrb[0].mxu0 %v3550
        %v3720 = vpop.f32.mrb[0].mxu0
        %v3721 = vadd.f32 0.0, %v3720
        %v3722 = vpop.f32.mrb[0].mxu0
        %v3723 = vpop.f32.mrb[0].mxu0
        %v3724 = vadd.f32 0.0, %v3723
        %v3725 = vpop.f32.mrb[0].mxu0
        %3726 = vmatprep.mubr.bf16.mxu0 0
        %3727 = vmatmul.mubr.bf16.gmra.mrb[0].mxu0 %v3551
        %v3728 = vpop.f32.mrb[0].mxu0
        %v3729 = vadd.f32 0.0, %v3728
        %v3730 = vpop.f32.mrb[0].mxu0
        %v3731 = vpop.f32.mrb[0].mxu0
        %v3732 = vadd.f32 0.0, %v3731
        %v3733 = vpop.f32.mrb[0].mxu0
        %3734 = vmatprep.mubr.bf16.mxu0 0
        %3735 = vmatmul.mubr.bf16.gmra.mrb[0].mxu0 %v3552
        %v3736 = vpop.f32.mrb[0].mxu0
        %v3737 = vadd.f32 0.0, %v3736
        %v3738 = vpop.f32.mrb[0].mxu0
        %v3739 = vpop.f32.mrb[0].mxu0
        %v3740 = vadd.f32 0.0, %v3739
        %v3741 = vpop.f32.mrb[0].mxu0
        %3742 = vmatprep.mubr.bf16.mxu0 0
        %3743 = vmatmul.mubr.bf16.gmra.mrb[0].mxu0 %v3553
        %v3744 = vpop.f32.mrb[0].mxu0
        %v3745 = vadd.f32 0.0, %v3744
        %v3746 = vpop.f32.mrb[0].mxu0
        %v3747 = vpop.f32.mrb[0].mxu0
        %v3748 = vadd.f32 0.0, %v3747
        %v3749 = vpop.f32.mrb[0].mxu0
        %3750 = vmatprep.mubr.bf16.mxu0 0
        %3751 = vmatmul.mubr.bf16.gmra.mrb[0].mxu0 %v3554
        %v3752 = vpop.f32.mrb[0].mxu0
        %v3753 = vadd.f32 0.0, %v3752
        %v3754 = vpop.f32.mrb[0].mxu0
        %v3755 = vpop.f32.mrb[0].mxu0
        %v3756 = vadd.f32 0.0, %v3755
        %v3757 = vpop.f32.mrb[0].mxu0
        %3758 = vmatprep.mubr.bf16.mxu0 0
        %3759 = vmatmul.mubr.bf16.gmra.mrb[0].mxu0 %v3555
        %v3760 = vpop.f32.mrb[0].mxu0
        %v3761 = vadd.f32 0.0, %v3760
        %v3762 = vpop.f32.mrb[0].mxu0
        %v3763 = vpop.f32.mrb[0].mxu0
        %v3764 = vadd.f32 0.0, %v3763
        %v3765 = vpop.f32.mrb[0].mxu0
        %3766 = vmatprep.mubr.bf16.mxu0 0
        %3767 = vmatmul.mubr.bf16.gmra.mrb[0].mxu0 %v3556
        %v3768 = vpop.f32.mrb[0].mxu0
        %v3769 = vadd.f32 0.0, %v3768
        %v3770 = vpop.f32.mrb[0].mxu0
        %v3771 = vpop.f32.mrb[0].mxu0
        %v3772 = vadd.f32 0.0, %v3771
        %v3773 = vpop.f32.mrb[0].mxu0
        %3774 = vmatprep.mubr.bf16.mxu0 0
        %3775 = vmatmul.mubr.bf16.gmra.mrb[0].mxu0 %v3557
        %v3776 = vpop.f32.mrb[0].mxu0
        %v3777 = vadd.f32 0.0, %v3776
        %v3778 = vpop.f32.mrb[0].mxu0
        %v3779 = vpop.f32.mrb[0].mxu0
        %v3780 = vadd.f32 0.0, %v3779
        %v3781 = vpop.f32.mrb[0].mxu0
        %3782 = vdwg.mxu0
        %v3783 = vld [vmem:[#allocation2] sm:$0xff]
        %v3784 = vld [vmem:[#allocation2 + $0x8] sm:$0xff]
        %v3785 = vld [vmem:[#allocation2 + $0x10] sm:$0xff]
        %v3786 = vld [vmem:[#allocation2 + $0x18] sm:$0xff]
        %v3787 = vld [vmem:[#allocation2 + $0x20] sm:$0xff]
        %v3788 = vld [vmem:[#allocation2 + $0x28] sm:$0xff]
        %v3789 = vld [vmem:[#allocation2 + $0x30] sm:$0xff]
        %v3790 = vld [vmem:[#allocation2 + $0x38] sm:$0xff]
        %v3791 = vld [vmem:[#allocation2 + $0x40] sm:$0xff]
        %v3792 = vld [vmem:[#allocation2 + $0x48] sm:$0xff]
        %v3793 = vld [vmem:[#allocation2 + $0x50] sm:$0xff]
        %v3794 = vld [vmem:[#allocation2 + $0x58] sm:$0xff]
        %v3795 = vld [vmem:[#allocation2 + $0x60] sm:$0xff]
        %v3796 = vld [vmem:[#allocation2 + $0x68] sm:$0xff]
        %v3797 = vld [vmem:[#allocation2 + $0x70] sm:$0xff]
        %v3798 = vld [vmem:[#allocation2 + $0x78] sm:$0xff]
        %v3799 = vld [vmem:[#allocation2 + $0x80] sm:$0xff]
        %v3800 = vld [vmem:[#allocation2 + $0x88] sm:$0xff]
        %v3801 = vld [vmem:[#allocation2 + $0x90] sm:$0xff]
        %v3802 = vld [vmem:[#allocation2 + $0x98] sm:$0xff]
        %v3803 = vld [vmem:[#allocation2 + $0xa0] sm:$0xff]
        %v3804 = vld [vmem:[#allocation2 + $0xa8] sm:$0xff]
        %v3805 = vld [vmem:[#allocation2 + $0xb0] sm:$0xff]
        %v3806 = vld [vmem:[#allocation2 + $0xb8] sm:$0xff]
        %v3807 = vld [vmem:[#allocation2 + $0xc0] sm:$0xff]
        %v3808 = vld [vmem:[#allocation2 + $0xc8] sm:$0xff]
        %v3809 = vld [vmem:[#allocation2 + $0xd0] sm:$0xff]
        %v3810 = vld [vmem:[#allocation2 + $0xd8] sm:$0xff]
        %v3811 = vld [vmem:[#allocation2 + $0xe0] sm:$0xff]
        %v3812 = vld [vmem:[#allocation2 + $0xe8] sm:$0xff]
        %v3813 = vld [vmem:[#allocation2 + $0xf0] sm:$0xff]
        %v3814 = vld [vmem:[#allocation2 + $0xf8] sm:$0xff]
        %v3815 = vadd.f32 %v3783, %v3657
        %v3816 = vadd.f32 %v3784, %v3660
        %v3817 = vadd.f32 %v3785, %v3665
        %v3818 = vadd.f32 %v3786, %v3668
        %v3819 = vadd.f32 %v3787, %v3673
        %v3820 = vadd.f32 %v3788, %v3676
        %v3821 = vadd.f32 %v3789, %v3681
        %v3822 = vadd.f32 %v3790, %v3684
        %v3823 = vadd.f32 %v3791, %v3689
        %v3824 = vadd.f32 %v3792, %v3692
        %v3825 = vadd.f32 %v3793, %v3697
        %v3826 = vadd.f32 %v3794, %v3700
        %v3827 = vadd.f32 %v3795, %v3705
        %v3828 = vadd.f32 %v3796, %v3708
        %v3829 = vadd.f32 %v3797, %v3713
        %v3830 = vadd.f32 %v3798, %v3716
        %v3831 = vadd.f32 %v3799, %v3721
        %v3832 = vadd.f32 %v3800, %v3724
        %v3833 = vadd.f32 %v3801, %v3729
        %v3834 = vadd.f32 %v3802, %v3732
        %v3835 = vadd.f32 %v3803, %v3737
        %v3836 = vadd.f32 %v3804, %v3740
        %v3837 = vadd.f32 %v3805, %v3745
        %v3838 = vadd.f32 %v3806, %v3748
        %v3839 = vadd.f32 %v3807, %v3753
        %v3840 = vadd.f32 %v3808, %v3756
        %v3841 = vadd.f32 %v3809, %v3761
        %v3842 = vadd.f32 %v3810, %v3764
        %v3843 = vadd.f32 %v3811, %v3769
        %v3844 = vadd.f32 %v3812, %v3772
        %v3845 = vadd.f32 %v3813, %v3777
        %v3846 = vadd.f32 %v3814, %v3780
        %3847 = vst [vmem:[#allocation2] sm:$0xff] %v3815
        %3848 = vst [vmem:[#allocation2 + $0x8] sm:$0xff] %v3816
        %3849 = vst [vmem:[#allocation2 + $0x10] sm:$0xff] %v3817
        %3850 = vst [vmem:[#allocation2 + $0x18] sm:$0xff] %v3818
        %3851 = vst [vmem:[#allocation2 + $0x20] sm:$0xff] %v3819
        %3852 = vst [vmem:[#allocation2 + $0x28] sm:$0xff] %v3820
        %3853 = vst [vmem:[#allocation2 + $0x30] sm:$0xff] %v3821
        %3854 = vst [vmem:[#allocation2 + $0x38] sm:$0xff] %v3822
        %3855 = vst [vmem:[#allocation2 + $0x40] sm:$0xff] %v3823
        %3856 = vst [vmem:[#allocation2 + $0x48] sm:$0xff] %v3824
        %3857 = vst [vmem:[#allocation2 + $0x50] sm:$0xff] %v3825
        %3858 = vst [vmem:[#allocation2 + $0x58] sm:$0xff] %v3826
        %3859 = vst [vmem:[#allocation2 + $0x60] sm:$0xff] %v3827
        %3860 = vst [vmem:[#allocation2 + $0x68] sm:$0xff] %v3828
        %3861 = vst [vmem:[#allocation2 + $0x70] sm:$0xff] %v3829
        %3862 = vst [vmem:[#allocation2 + $0x78] sm:$0xff] %v3830
        %3863 = vst [vmem:[#allocation2 + $0x80] sm:$0xff] %v3831
        %3864 = vst [vmem:[#allocation2 + $0x88] sm:$0xff] %v3832
        %3865 = vst [vmem:[#allocation2 + $0x90] sm:$0xff] %v3833
        %3866 = vst [vmem:[#allocation2 + $0x98] sm:$0xff] %v3834
        %3867 = vst [vmem:[#allocation2 + $0xa0] sm:$0xff] %v3835
        %3868 = vst [vmem:[#allocation2 + $0xa8] sm:$0xff] %v3836
        %3869 = vst [vmem:[#allocation2 + $0xb0] sm:$0xff] %v3837
        %3870 = vst [vmem:[#allocation2 + $0xb8] sm:$0xff] %v3838
        %3871 = vst [vmem:[#allocation2 + $0xc0] sm:$0xff] %v3839
        %3872 = vst [vmem:[#allocation2 + $0xc8] sm:$0xff] %v3840
        %3873 = vst [vmem:[#allocation2 + $0xd0] sm:$0xff] %v3841
        %3874 = vst [vmem:[#allocation2 + $0xd8] sm:$0xff] %v3842
        %3875 = vst [vmem:[#allocation2 + $0xe0] sm:$0xff] %v3843
        %3876 = vst [vmem:[#allocation2 + $0xe8] sm:$0xff] %v3844
        %3877 = vst [vmem:[#allocation2 + $0xf0] sm:$0xff] %v3845
        %3878 = vst [vmem:[#allocation2 + $0xf8] sm:$0xff] %v3846
        %s3879 = scalar_lea.vmem %s211, 24
        %v3880 = vld [vmem:[%s3879] sm:$0xf]
        %v3881 = vld [vmem:[%s3879 + $0x4] sm:$0xf]
        %v3882 = vld [vmem:[%s3879 + $0xc] sm:$0xf]
        %v3883 = vld [vmem:[%s3879 + $0x10] sm:$0xf]
        %v3884 = vld [vmem:[%s3879 + $0x18] sm:$0xf]
        %v3885 = vld [vmem:[%s3879 + $0x1c] sm:$0xf]
        %v3886 = vld [vmem:[%s3879 + $0x24] sm:$0xf]
        %v3887 = vld [vmem:[%s3879 + $0x28] sm:$0xf]
        %v3888 = vld [vmem:[%s3879 + $0x30] sm:$0xf]
        %v3889 = vld [vmem:[%s3879 + $0x34] sm:$0xf]
        %v3890 = vld [vmem:[%s3879 + $0x3c] sm:$0xf]
        %v3891 = vld [vmem:[%s3879 + $0x40] sm:$0xf]
        %v3892 = vld [vmem:[%s3879 + $0x48] sm:$0xf]
        %v3893 = vld [vmem:[%s3879 + $0x4c] sm:$0xf]
        %v3894 = vld [vmem:[%s3879 + $0x54] sm:$0xf]
        %v3895 = vld [vmem:[%s3879 + $0x58] sm:$0xf]
        %v3896 = vld [vmem:[%s3879 + $0x60] sm:$0xf]
        %v3897 = vld [vmem:[%s3879 + $0x64] sm:$0xf]
        %v3898 = vld [vmem:[%s3879 + $0x6c] sm:$0xf]
        %v3899 = vld [vmem:[%s3879 + $0x70] sm:$0xf]
        %v3900 = vld [vmem:[%s3879 + $0x78] sm:$0xf]
        %v3901 = vld [vmem:[%s3879 + $0x7c] sm:$0xf]
        %v3902 = vld [vmem:[%s3879 + $0x84] sm:$0xf]
        %v3903 = vld [vmem:[%s3879 + $0x88] sm:$0xf]
        %v3904 = vld [vmem:[%s3879 + $0x90] sm:$0xf]
        %v3905 = vld [vmem:[%s3879 + $0x94] sm:$0xf]
        %v3906 = vld [vmem:[%s3879 + $0x9c] sm:$0xf]
        %v3907 = vld [vmem:[%s3879 + $0xa0] sm:$0xf]
        %v3908 = vld [vmem:[%s3879 + $0xa8] sm:$0xf]
        %v3909 = vld [vmem:[%s3879 + $0xac] sm:$0xf]
        %v3910 = vld [vmem:[%s3879 + $0xb4] sm:$0xf]
        %v3911 = vld [vmem:[%s3879 + $0xb8] sm:$0xf]
        %s3912 = scalar_lea.vmem %s1, 384
        %v3913 = vld [vmem:[%s3912] sm:$0xf]
        %v3914 = vld [vmem:[%s3912 + $0x4] sm:$0xf]
        %v3915 = vld [vmem:[%s3912 + $0x8] sm:$0xf]
        %v3916 = vld [vmem:[%s3912 + $0xc] sm:$0xf]
        %v3917 = vld [vmem:[%s3912 + $0x10] sm:$0xf]
        %v3918 = vld [vmem:[%s3912 + $0x14] sm:$0xf]
        %v3919 = vld [vmem:[%s3912 + $0x18] sm:$0xf]
        %v3920 = vld [vmem:[%s3912 + $0x1c] sm:$0xf]
        %v3921 = vld [vmem:[%s3912 + $0x20] sm:$0xf]
        %v3922 = vld [vmem:[%s3912 + $0x24] sm:$0xf]
        %v3923 = vld [vmem:[%s3912 + $0x28] sm:$0xf]
        %v3924 = vld [vmem:[%s3912 + $0x2c] sm:$0xf]
        %v3925 = vld [vmem:[%s3912 + $0x30] sm:$0xf]
        %v3926 = vld [vmem:[%s3912 + $0x34] sm:$0xf]
        %v3927 = vld [vmem:[%s3912 + $0x38] sm:$0xf]
        %v3928 = vld [vmem:[%s3912 + $0x3c] sm:$0xf]
        %v3961 = vunpack.c.l.b16 %v3880
        %v3962 = vunpack.c.l.b16 %v3881
        %v3963 = vunpack.c.l.b16 %v3882
        %v3964 = vunpack.c.l.b16 %v3883
        %v3965 = vunpack.c.l.b16 %v3884
        %v3966 = vunpack.c.l.b16 %v3885
        %v3967 = vunpack.c.l.b16 %v3886
        %v3968 = vunpack.c.l.b16 %v3887
        %v3969 = vunpack.c.l.b16 %v3888
        %v3970 = vunpack.c.l.b16 %v3889
        %v3971 = vunpack.c.l.b16 %v3890
        %v3972 = vunpack.c.l.b16 %v3891
        %v3973 = vunpack.c.l.b16 %v3892
        %v3974 = vunpack.c.l.b16 %v3893
        %v3975 = vunpack.c.l.b16 %v3894
        %v3976 = vunpack.c.l.b16 %v3895
        %v3977 = vunpack.c.l.b16 %v3896
        %v3978 = vunpack.c.l.b16 %v3897
        %v3979 = vunpack.c.l.b16 %v3898
        %v3980 = vunpack.c.l.b16 %v3899
        %v3981 = vunpack.c.l.b16 %v3900
        %v3982 = vunpack.c.l.b16 %v3901
        %v3983 = vunpack.c.l.b16 %v3902
        %v3984 = vunpack.c.l.b16 %v3903
        %v3985 = vunpack.c.l.b16 %v3904
        %v3986 = vunpack.c.l.b16 %v3905
        %v3987 = vunpack.c.l.b16 %v3906
        %v3988 = vunpack.c.l.b16 %v3907
        %v3989 = vunpack.c.l.b16 %v3908
        %v3990 = vunpack.c.l.b16 %v3909
        %v3991 = vunpack.c.l.b16 %v3910
        %v3992 = vunpack.c.l.b16 %v3911
        %v3993 = vpack.c.b16 %v3962, %v3961
        %v3994 = vpack.c.b16 %v3964, %v3963
        %v3995 = vpack.c.b16 %v3966, %v3965
        %v3996 = vpack.c.b16 %v3968, %v3967
        %v3997 = vpack.c.b16 %v3970, %v3969
        %v3998 = vpack.c.b16 %v3972, %v3971
        %v3999 = vpack.c.b16 %v3974, %v3973
        %v4000 = vpack.c.b16 %v3976, %v3975
        %v4001 = vpack.c.b16 %v3978, %v3977
        %v4002 = vpack.c.b16 %v3980, %v3979
        %v4003 = vpack.c.b16 %v3982, %v3981
        %v4004 = vpack.c.b16 %v3984, %v3983
        %v4005 = vpack.c.b16 %v3986, %v3985
        %v4006 = vpack.c.b16 %v3988, %v3987
        %v4007 = vpack.c.b16 %v3990, %v3989
        %v4008 = vpack.c.b16 %v3992, %v3991
        %v4041 = vunpack.c.l.b16 %v3913
        %v4042 = vunpack.c.l.b16 %v3914
        %v4043 = vunpack.c.l.b16 %v3915
        %v4044 = vunpack.c.l.b16 %v3916
        %v4045 = vunpack.c.l.b16 %v3917
        %v4046 = vunpack.c.l.b16 %v3918
        %v4047 = vunpack.c.l.b16 %v3919
        %v4048 = vunpack.c.l.b16 %v3920
        %v4049 = vunpack.c.l.b16 %v3921
        %v4050 = vunpack.c.l.b16 %v3922
        %v4051 = vunpack.c.l.b16 %v3923
        %v4052 = vunpack.c.l.b16 %v3924
        %v4053 = vunpack.c.l.b16 %v3925
        %v4054 = vunpack.c.l.b16 %v3926
        %v4055 = vunpack.c.l.b16 %v3927
        %v4056 = vunpack.c.l.b16 %v3928
        %v4057 = vpack.c.b16 %v4042, %v4041
        %v4058 = vpack.c.b16 %v4044, %v4043
        %v4059 = vpack.c.b16 %v4046, %v4045
        %v4060 = vpack.c.b16 %v4048, %v4047
        %v4061 = vpack.c.b16 %v4050, %v4049
        %v4062 = vpack.c.b16 %v4052, %v4051
        %v4063 = vpack.c.b16 %v4054, %v4053
        %v4064 = vpack.c.b16 %v4056, %v4055
        %4073 = vmatprep.subr.bf16.mxu0 0
        %4074 = vmatpush1.bf16.msra.mxu0 %v4057
        %4075 = vmatprep.subr.bf16.mxu0 0
        %4076 = vmatpush1.bf16.msra.mxu0 %v4058
        %4077 = vmatprep.subr.bf16.mxu0 0
        %4078 = vmatpush1.bf16.msra.mxu0 %v4059
        %4079 = vmatprep.subr.bf16.mxu0 0
        %4080 = vmatpush1.bf16.msra.mxu0 %v4060
        %4081 = vmatprep.subr.bf16.mxu0 0
        %4082 = vmatpush1.bf16.msra.mxu0 %v4061
        %4083 = vmatprep.subr.bf16.mxu0 0
        %4084 = vmatpush1.bf16.msra.mxu0 %v4062
        %4085 = vmatprep.subr.bf16.mxu0 0
        %4086 = vmatpush1.bf16.msra.mxu0 %v4063
        %4087 = vmatprep.subr.bf16.mxu0 0
        %4088 = vmatpush1.bf16.msra.mxu0 %v4064
        %4089 = vmatprep.subr.bf16.mxu0 0
        %4090 = vmatpush1.bf16.msra.mxu0 0
        %4091 = vmatprep.subr.bf16.mxu0 0
        %4092 = vmatpush1.bf16.msra.mxu0 0
        %4093 = vmatprep.subr.bf16.mxu0 0
        %4094 = vmatpush1.bf16.msra.mxu0 0
        %4095 = vmatprep.subr.bf16.mxu0 0
        %4096 = vmatpush1.bf16.msra.mxu0 0
        %4097 = vmatprep.subr.bf16.mxu0 0
        %4098 = vmatpush1.bf16.msra.mxu0 0
        %4099 = vmatprep.subr.bf16.mxu0 0
        %4100 = vmatpush1.bf16.msra.mxu0 0
        %4101 = vmatprep.subr.bf16.mxu0 0
        %4102 = vmatpush1.bf16.msra.mxu0 0
        %4103 = vmatprep.subr.bf16.mxu0 0
        %4104 = vmatpush1.bf16.msra.mxu0 0
        %4105 = vmatprep.mubr.bf16.mxu0 0
        %4106 = vmatmul.mubr.bf16.gmra.mrb[0].mxu0 %v3993
        %v4107 = vpop.f32.mrb[0].mxu0
        %v4108 = vadd.f32 0.0, %v4107
        %v4109 = vpop.f32.mrb[0].mxu0
        %v4110 = vpop.f32.mrb[0].mxu0
        %v4111 = vadd.f32 0.0, %v4110
        %v4112 = vpop.f32.mrb[0].mxu0
        %4113 = vmatprep.mubr.bf16.mxu0 0
        %4114 = vmatmul.mubr.bf16.gmra.mrb[0].mxu0 %v3994
        %v4115 = vpop.f32.mrb[0].mxu0
        %v4116 = vadd.f32 0.0, %v4115
        %v4117 = vpop.f32.mrb[0].mxu0
        %v4118 = vpop.f32.mrb[0].mxu0
        %v4119 = vadd.f32 0.0, %v4118
        %v4120 = vpop.f32.mrb[0].mxu0
        %4121 = vmatprep.mubr.bf16.mxu0 0
        %4122 = vmatmul.mubr.bf16.gmra.mrb[0].mxu0 %v3995
        %v4123 = vpop.f32.mrb[0].mxu0
        %v4124 = vadd.f32 0.0, %v4123
        %v4125 = vpop.f32.mrb[0].mxu0
        %v4126 = vpop.f32.mrb[0].mxu0
        %v4127 = vadd.f32 0.0, %v4126
        %v4128 = vpop.f32.mrb[0].mxu0
        %4129 = vmatprep.mubr.bf16.mxu0 0
        %4130 = vmatmul.mubr.bf16.gmra.mrb[0].mxu0 %v3996
        %v4131 = vpop.f32.mrb[0].mxu0
        %v4132 = vadd.f32 0.0, %v4131
        %v4133 = vpop.f32.mrb[0].mxu0
        %v4134 = vpop.f32.mrb[0].mxu0
        %v4135 = vadd.f32 0.0, %v4134
        %v4136 = vpop.f32.mrb[0].mxu0
        %4137 = vmatprep.mubr.bf16.mxu0 0
        %4138 = vmatmul.mubr.bf16.gmra.mrb[0].mxu0 %v3997
        %v4139 = vpop.f32.mrb[0].mxu0
        %v4140 = vadd.f32 0.0, %v4139
        %v4141 = vpop.f32.mrb[0].mxu0
        %v4142 = vpop.f32.mrb[0].mxu0
        %v4143 = vadd.f32 0.0, %v4142
        %v4144 = vpop.f32.mrb[0].mxu0
        %4145 = vmatprep.mubr.bf16.mxu0 0
        %4146 = vmatmul.mubr.bf16.gmra.mrb[0].mxu0 %v3998
        %v4147 = vpop.f32.mrb[0].mxu0
        %v4148 = vadd.f32 0.0, %v4147
        %v4149 = vpop.f32.mrb[0].mxu0
        %v4150 = vpop.f32.mrb[0].mxu0
        %v4151 = vadd.f32 0.0, %v4150
        %v4152 = vpop.f32.mrb[0].mxu0
        %4153 = vmatprep.mubr.bf16.mxu0 0
        %4154 = vmatmul.mubr.bf16.gmra.mrb[0].mxu0 %v3999
        %v4155 = vpop.f32.mrb[0].mxu0
        %v4156 = vadd.f32 0.0, %v4155
        %v4157 = vpop.f32.mrb[0].mxu0
        %v4158 = vpop.f32.mrb[0].mxu0
        %v4159 = vadd.f32 0.0, %v4158
        %v4160 = vpop.f32.mrb[0].mxu0
        %4161 = vmatprep.mubr.bf16.mxu0 0
        %4162 = vmatmul.mubr.bf16.gmra.mrb[0].mxu0 %v4000
        %v4163 = vpop.f32.mrb[0].mxu0
        %v4164 = vadd.f32 0.0, %v4163
        %v4165 = vpop.f32.mrb[0].mxu0
        %v4166 = vpop.f32.mrb[0].mxu0
        %v4167 = vadd.f32 0.0, %v4166
        %v4168 = vpop.f32.mrb[0].mxu0
        %4169 = vmatprep.mubr.bf16.mxu0 0
        %4170 = vmatmul.mubr.bf16.gmra.mrb[0].mxu0 %v4001
        %v4171 = vpop.f32.mrb[0].mxu0
        %v4172 = vadd.f32 0.0, %v4171
        %v4173 = vpop.f32.mrb[0].mxu0
        %v4174 = vpop.f32.mrb[0].mxu0
        %v4175 = vadd.f32 0.0, %v4174
        %v4176 = vpop.f32.mrb[0].mxu0
        %4177 = vmatprep.mubr.bf16.mxu0 0
        %4178 = vmatmul.mubr.bf16.gmra.mrb[0].mxu0 %v4002
        %v4179 = vpop.f32.mrb[0].mxu0
        %v4180 = vadd.f32 0.0, %v4179
        %v4181 = vpop.f32.mrb[0].mxu0
        %v4182 = vpop.f32.mrb[0].mxu0
        %v4183 = vadd.f32 0.0, %v4182
        %v4184 = vpop.f32.mrb[0].mxu0
        %4185 = vmatprep.mubr.bf16.mxu0 0
        %4186 = vmatmul.mubr.bf16.gmra.mrb[0].mxu0 %v4003
        %v4187 = vpop.f32.mrb[0].mxu0
        %v4188 = vadd.f32 0.0, %v4187
        %v4189 = vpop.f32.mrb[0].mxu0
        %v4190 = vpop.f32.mrb[0].mxu0
        %v4191 = vadd.f32 0.0, %v4190
        %v4192 = vpop.f32.mrb[0].mxu0
        %4193 = vmatprep.mubr.bf16.mxu0 0
        %4194 = vmatmul.mubr.bf16.gmra.mrb[0].mxu0 %v4004
        %v4195 = vpop.f32.mrb[0].mxu0
        %v4196 = vadd.f32 0.0, %v4195
        %v4197 = vpop.f32.mrb[0].mxu0
        %v4198 = vpop.f32.mrb[0].mxu0
        %v4199 = vadd.f32 0.0, %v4198
        %v4200 = vpop.f32.mrb[0].mxu0
        %4201 = vmatprep.mubr.bf16.mxu0 0
        %4202 = vmatmul.mubr.bf16.gmra.mrb[0].mxu0 %v4005
        %v4203 = vpop.f32.mrb[0].mxu0
        %v4204 = vadd.f32 0.0, %v4203
        %v4205 = vpop.f32.mrb[0].mxu0
        %v4206 = vpop.f32.mrb[0].mxu0
        %v4207 = vadd.f32 0.0, %v4206
        %v4208 = vpop.f32.mrb[0].mxu0
        %4209 = vmatprep.mubr.bf16.mxu0 0
        %4210 = vmatmul.mubr.bf16.gmra.mrb[0].mxu0 %v4006
        %v4211 = vpop.f32.mrb[0].mxu0
        %v4212 = vadd.f32 0.0, %v4211
        %v4213 = vpop.f32.mrb[0].mxu0
        %v4214 = vpop.f32.mrb[0].mxu0
        %v4215 = vadd.f32 0.0, %v4214
        %v4216 = vpop.f32.mrb[0].mxu0
        %4217 = vmatprep.mubr.bf16.mxu0 0
        %4218 = vmatmul.mubr.bf16.gmra.mrb[0].mxu0 %v4007
        %v4219 = vpop.f32.mrb[0].mxu0
        %v4220 = vadd.f32 0.0, %v4219
        %v4221 = vpop.f32.mrb[0].mxu0
        %v4222 = vpop.f32.mrb[0].mxu0
        %v4223 = vadd.f32 0.0, %v4222
        %v4224 = vpop.f32.mrb[0].mxu0
        %4225 = vmatprep.mubr.bf16.mxu0 0
        %4226 = vmatmul.mubr.bf16.gmra.mrb[0].mxu0 %v4008
        %v4227 = vpop.f32.mrb[0].mxu0
        %v4228 = vadd.f32 0.0, %v4227
        %v4229 = vpop.f32.mrb[0].mxu0
        %v4230 = vpop.f32.mrb[0].mxu0
        %v4231 = vadd.f32 0.0, %v4230
        %v4232 = vpop.f32.mrb[0].mxu0
        %4233 = vdwg.mxu0
        %v4234 = vld [vmem:[#allocation2] sm:$0xff]
        %v4235 = vld [vmem:[#allocation2 + $0x8] sm:$0xff]
        %v4236 = vld [vmem:[#allocation2 + $0x10] sm:$0xff]
        %v4237 = vld [vmem:[#allocation2 + $0x18] sm:$0xff]
        %v4238 = vld [vmem:[#allocation2 + $0x20] sm:$0xff]
        %v4239 = vld [vmem:[#allocation2 + $0x28] sm:$0xff]
        %v4240 = vld [vmem:[#allocation2 + $0x30] sm:$0xff]
        %v4241 = vld [vmem:[#allocation2 + $0x38] sm:$0xff]
        %v4242 = vld [vmem:[#allocation2 + $0x40] sm:$0xff]
        %v4243 = vld [vmem:[#allocation2 + $0x48] sm:$0xff]
        %v4244 = vld [vmem:[#allocation2 + $0x50] sm:$0xff]
        %v4245 = vld [vmem:[#allocation2 + $0x58] sm:$0xff]
        %v4246 = vld [vmem:[#allocation2 + $0x60] sm:$0xff]
        %v4247 = vld [vmem:[#allocation2 + $0x68] sm:$0xff]
        %v4248 = vld [vmem:[#allocation2 + $0x70] sm:$0xff]
        %v4249 = vld [vmem:[#allocation2 + $0x78] sm:$0xff]
        %v4250 = vld [vmem:[#allocation2 + $0x80] sm:$0xff]
        %v4251 = vld [vmem:[#allocation2 + $0x88] sm:$0xff]
        %v4252 = vld [vmem:[#allocation2 + $0x90] sm:$0xff]
        %v4253 = vld [vmem:[#allocation2 + $0x98] sm:$0xff]
        %v4254 = vld [vmem:[#allocation2 + $0xa0] sm:$0xff]
        %v4255 = vld [vmem:[#allocation2 + $0xa8] sm:$0xff]
        %v4256 = vld [vmem:[#allocation2 + $0xb0] sm:$0xff]
        %v4257 = vld [vmem:[#allocation2 + $0xb8] sm:$0xff]
        %v4258 = vld [vmem:[#allocation2 + $0xc0] sm:$0xff]
        %v4259 = vld [vmem:[#allocation2 + $0xc8] sm:$0xff]
        %v4260 = vld [vmem:[#allocation2 + $0xd0] sm:$0xff]
        %v4261 = vld [vmem:[#allocation2 + $0xd8] sm:$0xff]
        %v4262 = vld [vmem:[#allocation2 + $0xe0] sm:$0xff]
        %v4263 = vld [vmem:[#allocation2 + $0xe8] sm:$0xff]
        %v4264 = vld [vmem:[#allocation2 + $0xf0] sm:$0xff]
        %v4265 = vld [vmem:[#allocation2 + $0xf8] sm:$0xff]
        %v4266 = vadd.f32 %v4234, %v4108
        %v4267 = vadd.f32 %v4235, %v4111
        %v4268 = vadd.f32 %v4236, %v4116
        %v4269 = vadd.f32 %v4237, %v4119
        %v4270 = vadd.f32 %v4238, %v4124
        %v4271 = vadd.f32 %v4239, %v4127
        %v4272 = vadd.f32 %v4240, %v4132
        %v4273 = vadd.f32 %v4241, %v4135
        %v4274 = vadd.f32 %v4242, %v4140
        %v4275 = vadd.f32 %v4243, %v4143
        %v4276 = vadd.f32 %v4244, %v4148
        %v4277 = vadd.f32 %v4245, %v4151
        %v4278 = vadd.f32 %v4246, %v4156
        %v4279 = vadd.f32 %v4247, %v4159
        %v4280 = vadd.f32 %v4248, %v4164
        %v4281 = vadd.f32 %v4249, %v4167
        %v4282 = vadd.f32 %v4250, %v4172
        %v4283 = vadd.f32 %v4251, %v4175
        %v4284 = vadd.f32 %v4252, %v4180
        %v4285 = vadd.f32 %v4253, %v4183
        %v4286 = vadd.f32 %v4254, %v4188
        %v4287 = vadd.f32 %v4255, %v4191
        %v4288 = vadd.f32 %v4256, %v4196
        %v4289 = vadd.f32 %v4257, %v4199
        %v4290 = vadd.f32 %v4258, %v4204
        %v4291 = vadd.f32 %v4259, %v4207
        %v4292 = vadd.f32 %v4260, %v4212
        %v4293 = vadd.f32 %v4261, %v4215
        %v4294 = vadd.f32 %v4262, %v4220
        %v4295 = vadd.f32 %v4263, %v4223
        %v4296 = vadd.f32 %v4264, %v4228
        %v4297 = vadd.f32 %v4265, %v4231
        %4298 = vst [vmem:[#allocation2] sm:$0xff] %v4266
        %4299 = vst [vmem:[#allocation2 + $0x8] sm:$0xff] %v4267
        %4300 = vst [vmem:[#allocation2 + $0x10] sm:$0xff] %v4268
        %4301 = vst [vmem:[#allocation2 + $0x18] sm:$0xff] %v4269
        %4302 = vst [vmem:[#allocation2 + $0x20] sm:$0xff] %v4270
        %4303 = vst [vmem:[#allocation2 + $0x28] sm:$0xff] %v4271
        %4304 = vst [vmem:[#allocation2 + $0x30] sm:$0xff] %v4272
        %4305 = vst [vmem:[#allocation2 + $0x38] sm:$0xff] %v4273
        %4306 = vst [vmem:[#allocation2 + $0x40] sm:$0xff] %v4274
        %4307 = vst [vmem:[#allocation2 + $0x48] sm:$0xff] %v4275
        %4308 = vst [vmem:[#allocation2 + $0x50] sm:$0xff] %v4276
        %4309 = vst [vmem:[#allocation2 + $0x58] sm:$0xff] %v4277
        %4310 = vst [vmem:[#allocation2 + $0x60] sm:$0xff] %v4278
        %4311 = vst [vmem:[#allocation2 + $0x68] sm:$0xff] %v4279
        %4312 = vst [vmem:[#allocation2 + $0x70] sm:$0xff] %v4280
        %4313 = vst [vmem:[#allocation2 + $0x78] sm:$0xff] %v4281
        %4314 = vst [vmem:[#allocation2 + $0x80] sm:$0xff] %v4282
        %4315 = vst [vmem:[#allocation2 + $0x88] sm:$0xff] %v4283
        %4316 = vst [vmem:[#allocation2 + $0x90] sm:$0xff] %v4284
        %4317 = vst [vmem:[#allocation2 + $0x98] sm:$0xff] %v4285
        %4318 = vst [vmem:[#allocation2 + $0xa0] sm:$0xff] %v4286
        %4319 = vst [vmem:[#allocation2 + $0xa8] sm:$0xff] %v4287
        %4320 = vst [vmem:[#allocation2 + $0xb0] sm:$0xff] %v4288
        %4321 = vst [vmem:[#allocation2 + $0xb8] sm:$0xff] %v4289
        %4322 = vst [vmem:[#allocation2 + $0xc0] sm:$0xff] %v4290
        %4323 = vst [vmem:[#allocation2 + $0xc8] sm:$0xff] %v4291
        %4324 = vst [vmem:[#allocation2 + $0xd0] sm:$0xff] %v4292
        %4325 = vst [vmem:[#allocation2 + $0xd8] sm:$0xff] %v4293
        %4326 = vst [vmem:[#allocation2 + $0xe0] sm:$0xff] %v4294
        %4327 = vst [vmem:[#allocation2 + $0xe8] sm:$0xff] %v4295
        %4328 = vst [vmem:[#allocation2 + $0xf0] sm:$0xff] %v4296
        %4329 = vst [vmem:[#allocation2 + $0xf8] sm:$0xff] %v4297
        %v4330 = vld [vmem:[%s3879] sm:$0xf]
        %v4331 = vld [vmem:[%s3879 + $0x4] sm:$0xf]
        %v4332 = vld [vmem:[%s3879 + $0x8] sm:$0x1]
        %v4333 = vld [vmem:[%s3879 + $0xc] sm:$0xf]
        %v4334 = vld [vmem:[%s3879 + $0x10] sm:$0xf]
        %v4335 = vld [vmem:[%s3879 + $0x14] sm:$0x1]
        %v4336 = vld [vmem:[%s3879 + $0x18] sm:$0xf]
        %v4337 = vld [vmem:[%s3879 + $0x1c] sm:$0xf]
        %v4338 = vld [vmem:[%s3879 + $0x20] sm:$0x1]
        %v4339 = vld [vmem:[%s3879 + $0x24] sm:$0xf]
        %v4340 = vld [vmem:[%s3879 + $0x28] sm:$0xf]
        %v4341 = vld [vmem:[%s3879 + $0x2c] sm:$0x1]
        %v4342 = vld [vmem:[%s3879 + $0x30] sm:$0xf]
        %v4343 = vld [vmem:[%s3879 + $0x34] sm:$0xf]
        %v4344 = vld [vmem:[%s3879 + $0x38] sm:$0x1]
        %v4345 = vld [vmem:[%s3879 + $0x3c] sm:$0xf]
        %v4346 = vld [vmem:[%s3879 + $0x40] sm:$0xf]
        %v4347 = vld [vmem:[%s3879 + $0x44] sm:$0x1]
        %v4348 = vld [vmem:[%s3879 + $0x48] sm:$0xf]
        %v4349 = vld [vmem:[%s3879 + $0x4c] sm:$0xf]
        %v4350 = vld [vmem:[%s3879 + $0x50] sm:$0x1]
        %v4351 = vld [vmem:[%s3879 + $0x54] sm:$0xf]
        %v4352 = vld [vmem:[%s3879 + $0x58] sm:$0xf]
        %v4353 = vld [vmem:[%s3879 + $0x5c] sm:$0x1]
        %v4354 = vld [vmem:[%s3879 + $0x60] sm:$0xf]
        %v4355 = vld [vmem:[%s3879 + $0x64] sm:$0xf]
        %v4356 = vld [vmem:[%s3879 + $0x68] sm:$0x1]
        %v4357 = vld [vmem:[%s3879 + $0x6c] sm:$0xf]
        %v4358 = vld [vmem:[%s3879 + $0x70] sm:$0xf]
        %v4359 = vld [vmem:[%s3879 + $0x74] sm:$0x1]
        %v4360 = vld [vmem:[%s3879 + $0x78] sm:$0xf]
        %v4361 = vld [vmem:[%s3879 + $0x7c] sm:$0xf]
        %v4362 = vld [vmem:[%s3879 + $0x80] sm:$0x1]
        %v4363 = vld [vmem:[%s3879 + $0x84] sm:$0xf]
        %v4364 = vld [vmem:[%s3879 + $0x88] sm:$0xf]
        %v4365 = vld [vmem:[%s3879 + $0x8c] sm:$0x1]
        %v4366 = vld [vmem:[%s3879 + $0x90] sm:$0xf]
        %v4367 = vld [vmem:[%s3879 + $0x94] sm:$0xf]
        %v4368 = vld [vmem:[%s3879 + $0x98] sm:$0x1]
        %v4369 = vld [vmem:[%s3879 + $0x9c] sm:$0xf]
        %v4370 = vld [vmem:[%s3879 + $0xa0] sm:$0xf]
        %v4371 = vld [vmem:[%s3879 + $0xa4] sm:$0x1]
        %v4372 = vld [vmem:[%s3879 + $0xa8] sm:$0xf]
        %v4373 = vld [vmem:[%s3879 + $0xac] sm:$0xf]
        %v4374 = vld [vmem:[%s3879 + $0xb0] sm:$0x1]
        %v4375 = vld [vmem:[%s3879 + $0xb4] sm:$0xf]
        %v4376 = vld [vmem:[%s3879 + $0xb8] sm:$0xf]
        %v4377 = vld [vmem:[%s3879 + $0xbc] sm:$0x1]
        %v4379 = vshrl.u32 %v4330, 16
        %v4381 = vrot.slane %v4379, 4
        %v4382 = vshll.u32 %v4330, 16
        %v4384 = vrot.slane %v4382, 5
        %v4385 = vor.u32 %v4381, %v4384
        %v4386 = vrot.slane %v4385, 4
        %v4388 = vshll.u32 %v4331, 16
        %v4390 = vrot.slane %v4388, 5
        %v4391 = vsel %vm648, %v4386, %v4390
        %v4392 = vshrl.u32 %v4331, 16
        %v4394 = vrot.slane %v4392, 4
        %v4395 = vor.u32 %v4394, %v4390
        %v4396 = vrot.slane %v4395, 4
        %v4398 = vshll.u32 %v4332, 16
        %v4400 = vrot.slane %v4398, 5
        %v4401 = vsel %vm648, %v4396, %v4400
        %v4403 = vshrl.u32 %v4333, 16
        %v4405 = vrot.slane %v4403, 4
        %v4406 = vshll.u32 %v4333, 16
        %v4408 = vrot.slane %v4406, 5
        %v4409 = vor.u32 %v4405, %v4408
        %v4410 = vrot.slane %v4409, 4
        %v4412 = vshll.u32 %v4334, 16
        %v4414 = vrot.slane %v4412, 5
        %v4415 = vsel %vm648, %v4410, %v4414
        %v4416 = vshrl.u32 %v4334, 16
        %v4418 = vrot.slane %v4416, 4
        %v4419 = vor.u32 %v4418, %v4414
        %v4420 = vrot.slane %v4419, 4
        %v4422 = vshll.u32 %v4335, 16
        %v4424 = vrot.slane %v4422, 5
        %v4425 = vsel %vm648, %v4420, %v4424
        %v4427 = vshrl.u32 %v4336, 16
        %v4429 = vrot.slane %v4427, 4
        %v4430 = vshll.u32 %v4336, 16
        %v4432 = vrot.slane %v4430, 5
        %v4433 = vor.u32 %v4429, %v4432
        %v4434 = vrot.slane %v4433, 4
        %v4436 = vshll.u32 %v4337, 16
        %v4438 = vrot.slane %v4436, 5
        %v4439 = vsel %vm648, %v4434, %v4438
        %v4440 = vshrl.u32 %v4337, 16
        %v4442 = vrot.slane %v4440, 4
        %v4443 = vor.u32 %v4442, %v4438
        %v4444 = vrot.slane %v4443, 4
        %v4446 = vshll.u32 %v4338, 16
        %v4448 = vrot.slane %v4446, 5
        %v4449 = vsel %vm648, %v4444, %v4448
        %v4451 = vshrl.u32 %v4339, 16
        %v4453 = vrot.slane %v4451, 4
        %v4454 = vshll.u32 %v4339, 16
        %v4456 = vrot.slane %v4454, 5
        %v4457 = vor.u32 %v4453, %v4456
        %v4458 = vrot.slane %v4457, 4
        %v4460 = vshll.u32 %v4340, 16
        %v4462 = vrot.slane %v4460, 5
        %v4463 = vsel %vm648, %v4458, %v4462
        %v4464 = vshrl.u32 %v4340, 16
        %v4466 = vrot.slane %v4464, 4
        %v4467 = vor.u32 %v4466, %v4462
        %v4468 = vrot.slane %v4467, 4
        %v4470 = vshll.u32 %v4341, 16
        %v4472 = vrot.slane %v4470, 5
        %v4473 = vsel %vm648, %v4468, %v4472
        %v4475 = vshrl.u32 %v4342, 16
        %v4477 = vrot.slane %v4475, 4
        %v4478 = vshll.u32 %v4342, 16
        %v4480 = vrot.slane %v4478, 5
        %v4481 = vor.u32 %v4477, %v4480
        %v4482 = vrot.slane %v4481, 4
        %v4484 = vshll.u32 %v4343, 16
        %v4486 = vrot.slane %v4484, 5
        %v4487 = vsel %vm648, %v4482, %v4486
        %v4488 = vshrl.u32 %v4343, 16
        %v4490 = vrot.slane %v4488, 4
        %v4491 = vor.u32 %v4490, %v4486
        %v4492 = vrot.slane %v4491, 4
        %v4494 = vshll.u32 %v4344, 16
        %v4496 = vrot.slane %v4494, 5
        %v4497 = vsel %vm648, %v4492, %v4496
        %v4499 = vshrl.u32 %v4345, 16
        %v4501 = vrot.slane %v4499, 4
        %v4502 = vshll.u32 %v4345, 16
        %v4504 = vrot.slane %v4502, 5
        %v4505 = vor.u32 %v4501, %v4504
        %v4506 = vrot.slane %v4505, 4
        %v4508 = vshll.u32 %v4346, 16
        %v4510 = vrot.slane %v4508, 5
        %v4511 = vsel %vm648, %v4506, %v4510
        %v4512 = vshrl.u32 %v4346, 16
        %v4514 = vrot.slane %v4512, 4
        %v4515 = vor.u32 %v4514, %v4510
        %v4516 = vrot.slane %v4515, 4
        %v4518 = vshll.u32 %v4347, 16
        %v4520 = vrot.slane %v4518, 5
        %v4521 = vsel %vm648, %v4516, %v4520
        %v4523 = vshrl.u32 %v4348, 16
        %v4525 = vrot.slane %v4523, 4
        %v4526 = vshll.u32 %v4348, 16
        %v4528 = vrot.slane %v4526, 5
        %v4529 = vor.u32 %v4525, %v4528
        %v4530 = vrot.slane %v4529, 4
        %v4532 = vshll.u32 %v4349, 16
        %v4534 = vrot.slane %v4532, 5
        %v4535 = vsel %vm648, %v4530, %v4534
        %v4536 = vshrl.u32 %v4349, 16
        %v4538 = vrot.slane %v4536, 4
        %v4539 = vor.u32 %v4538, %v4534
        %v4540 = vrot.slane %v4539, 4
        %v4542 = vshll.u32 %v4350, 16
        %v4544 = vrot.slane %v4542, 5
        %v4545 = vsel %vm648, %v4540, %v4544
        %v4547 = vshrl.u32 %v4351, 16
        %v4549 = vrot.slane %v4547, 4
        %v4550 = vshll.u32 %v4351, 16
        %v4552 = vrot.slane %v4550, 5
        %v4553 = vor.u32 %v4549, %v4552
        %v4554 = vrot.slane %v4553, 4
        %v4556 = vshll.u32 %v4352, 16
        %v4558 = vrot.slane %v4556, 5
        %v4559 = vsel %vm648, %v4554, %v4558
        %v4560 = vshrl.u32 %v4352, 16
        %v4562 = vrot.slane %v4560, 4
        %v4563 = vor.u32 %v4562, %v4558
        %v4564 = vrot.slane %v4563, 4
        %v4566 = vshll.u32 %v4353, 16
        %v4568 = vrot.slane %v4566, 5
        %v4569 = vsel %vm648, %v4564, %v4568
        %v4571 = vshrl.u32 %v4354, 16
        %v4573 = vrot.slane %v4571, 4
        %v4574 = vshll.u32 %v4354, 16
        %v4576 = vrot.slane %v4574, 5
        %v4577 = vor.u32 %v4573, %v4576
        %v4578 = vrot.slane %v4577, 4
        %v4580 = vshll.u32 %v4355, 16
        %v4582 = vrot.slane %v4580, 5
        %v4583 = vsel %vm648, %v4578, %v4582
        %v4584 = vshrl.u32 %v4355, 16
        %v4586 = vrot.slane %v4584, 4
        %v4587 = vor.u32 %v4586, %v4582
        %v4588 = vrot.slane %v4587, 4
        %v4590 = vshll.u32 %v4356, 16
        %v4592 = vrot.slane %v4590, 5
        %v4593 = vsel %vm648, %v4588, %v4592
        %v4595 = vshrl.u32 %v4357, 16
        %v4597 = vrot.slane %v4595, 4
        %v4598 = vshll.u32 %v4357, 16
        %v4600 = vrot.slane %v4598, 5
        %v4601 = vor.u32 %v4597, %v4600
        %v4602 = vrot.slane %v4601, 4
        %v4604 = vshll.u32 %v4358, 16
        %v4606 = vrot.slane %v4604, 5
        %v4607 = vsel %vm648, %v4602, %v4606
        %v4608 = vshrl.u32 %v4358, 16
        %v4610 = vrot.slane %v4608, 4
        %v4611 = vor.u32 %v4610, %v4606
        %v4612 = vrot.slane %v4611, 4
        %v4614 = vshll.u32 %v4359, 16
        %v4616 = vrot.slane %v4614, 5
        %v4617 = vsel %vm648, %v4612, %v4616
        %v4619 = vshrl.u32 %v4360, 16
        %v4621 = vrot.slane %v4619, 4
        %v4622 = vshll.u32 %v4360, 16
        %v4624 = vrot.slane %v4622, 5
        %v4625 = vor.u32 %v4621, %v4624
        %v4626 = vrot.slane %v4625, 4
        %v4628 = vshll.u32 %v4361, 16
        %v4630 = vrot.slane %v4628, 5
        %v4631 = vsel %vm648, %v4626, %v4630
        %v4632 = vshrl.u32 %v4361, 16
        %v4634 = vrot.slane %v4632, 4
        %v4635 = vor.u32 %v4634, %v4630
        %v4636 = vrot.slane %v4635, 4
        %v4638 = vshll.u32 %v4362, 16
        %v4640 = vrot.slane %v4638, 5
        %v4641 = vsel %vm648, %v4636, %v4640
        %v4643 = vshrl.u32 %v4363, 16
        %v4645 = vrot.slane %v4643, 4
        %v4646 = vshll.u32 %v4363, 16
        %v4648 = vrot.slane %v4646, 5
        %v4649 = vor.u32 %v4645, %v4648
        %v4650 = vrot.slane %v4649, 4
        %v4652 = vshll.u32 %v4364, 16
        %v4654 = vrot.slane %v4652, 5
        %v4655 = vsel %vm648, %v4650, %v4654
        %v4656 = vshrl.u32 %v4364, 16
        %v4658 = vrot.slane %v4656, 4
        %v4659 = vor.u32 %v4658, %v4654
        %v4660 = vrot.slane %v4659, 4
        %v4662 = vshll.u32 %v4365, 16
        %v4664 = vrot.slane %v4662, 5
        %v4665 = vsel %vm648, %v4660, %v4664
        %v4667 = vshrl.u32 %v4366, 16
        %v4669 = vrot.slane %v4667, 4
        %v4670 = vshll.u32 %v4366, 16
        %v4672 = vrot.slane %v4670, 5
        %v4673 = vor.u32 %v4669, %v4672
        %v4674 = vrot.slane %v4673, 4
        %v4676 = vshll.u32 %v4367, 16
        %v4678 = vrot.slane %v4676, 5
        %v4679 = vsel %vm648, %v4674, %v4678
        %v4680 = vshrl.u32 %v4367, 16
        %v4682 = vrot.slane %v4680, 4
        %v4683 = vor.u32 %v4682, %v4678
        %v4684 = vrot.slane %v4683, 4
        %v4686 = vshll.u32 %v4368, 16
        %v4688 = vrot.slane %v4686, 5
        %v4689 = vsel %vm648, %v4684, %v4688
        %v4691 = vshrl.u32 %v4369, 16
        %v4693 = vrot.slane %v4691, 4
        %v4694 = vshll.u32 %v4369, 16
        %v4696 = vrot.slane %v4694, 5
        %v4697 = vor.u32 %v4693, %v4696
        %v4698 = vrot.slane %v4697, 4
        %v4700 = vshll.u32 %v4370, 16
        %v4702 = vrot.slane %v4700, 5
        %v4703 = vsel %vm648, %v4698, %v4702
        %v4704 = vshrl.u32 %v4370, 16
        %v4706 = vrot.slane %v4704, 4
        %v4707 = vor.u32 %v4706, %v4702
        %v4708 = vrot.slane %v4707, 4
        %v4710 = vshll.u32 %v4371, 16
        %v4712 = vrot.slane %v4710, 5
        %v4713 = vsel %vm648, %v4708, %v4712
        %v4715 = vshrl.u32 %v4372, 16
        %v4717 = vrot.slane %v4715, 4
        %v4718 = vshll.u32 %v4372, 16
        %v4720 = vrot.slane %v4718, 5
        %v4721 = vor.u32 %v4717, %v4720
        %v4722 = vrot.slane %v4721, 4
        %v4724 = vshll.u32 %v4373, 16
        %v4726 = vrot.slane %v4724, 5
        %v4727 = vsel %vm648, %v4722, %v4726
        %v4728 = vshrl.u32 %v4373, 16
        %v4730 = vrot.slane %v4728, 4
        %v4731 = vor.u32 %v4730, %v4726
        %v4732 = vrot.slane %v4731, 4
        %v4734 = vshll.u32 %v4374, 16
        %v4736 = vrot.slane %v4734, 5
        %v4737 = vsel %vm648, %v4732, %v4736
        %v4739 = vshrl.u32 %v4375, 16
        %v4741 = vrot.slane %v4739, 4
        %v4742 = vshll.u32 %v4375, 16
        %v4744 = vrot.slane %v4742, 5
        %v4745 = vor.u32 %v4741, %v4744
        %v4746 = vrot.slane %v4745, 4
        %v4748 = vshll.u32 %v4376, 16
        %v4750 = vrot.slane %v4748, 5
        %v4751 = vsel %vm648, %v4746, %v4750
        %v4752 = vshrl.u32 %v4376, 16
        %v4754 = vrot.slane %v4752, 4
        %v4755 = vor.u32 %v4754, %v4750
        %v4756 = vrot.slane %v4755, 4
        %v4758 = vshll.u32 %v4377, 16
        %v4760 = vrot.slane %v4758, 5
        %v4761 = vsel %vm648, %v4756, %v4760
        %s4762 = scalar_lea.vmem %s1, 448
        %v4763 = vld [vmem:[%s4762] sm:$0xf]
        %v4764 = vld [vmem:[%s4762 + $0x4] sm:$0xf]
        %v4765 = vld [vmem:[%s4762 + $0x8] sm:$0xf]
        %v4766 = vld [vmem:[%s4762 + $0xc] sm:$0xf]
        %v4767 = vld [vmem:[%s4762 + $0x10] sm:$0xf]
        %v4768 = vld [vmem:[%s4762 + $0x14] sm:$0xf]
        %v4769 = vld [vmem:[%s4762 + $0x18] sm:$0xf]
        %v4770 = vld [vmem:[%s4762 + $0x1c] sm:$0xf]
        %v4771 = vld [vmem:[%s4762 + $0x20] sm:$0xf]
        %v4772 = vld [vmem:[%s4762 + $0x24] sm:$0xf]
        %v4773 = vld [vmem:[%s4762 + $0x28] sm:$0xf]
        %v4774 = vld [vmem:[%s4762 + $0x2c] sm:$0xf]
        %v4775 = vld [vmem:[%s4762 + $0x30] sm:$0xf]
        %v4776 = vld [vmem:[%s4762 + $0x34] sm:$0xf]
        %v4777 = vld [vmem:[%s4762 + $0x38] sm:$0xf]
        %v4778 = vld [vmem:[%s4762 + $0x3c] sm:$0xf]
        %v4779 = vunpack.c.l.b16 %v4391
        %v4780 = vunpack.c.l.b16 %v4401
        %v4781 = vunpack.c.l.b16 %v4415
        %v4782 = vunpack.c.l.b16 %v4425
        %v4783 = vunpack.c.l.b16 %v4439
        %v4784 = vunpack.c.l.b16 %v4449
        %v4785 = vunpack.c.l.b16 %v4463
        %v4786 = vunpack.c.l.b16 %v4473
        %v4787 = vunpack.c.l.b16 %v4487
        %v4788 = vunpack.c.l.b16 %v4497
        %v4789 = vunpack.c.l.b16 %v4511
        %v4790 = vunpack.c.l.b16 %v4521
        %v4791 = vunpack.c.l.b16 %v4535
        %v4792 = vunpack.c.l.b16 %v4545
        %v4793 = vunpack.c.l.b16 %v4559
        %v4794 = vunpack.c.l.b16 %v4569
        %v4795 = vunpack.c.l.b16 %v4583
        %v4796 = vunpack.c.l.b16 %v4593
        %v4797 = vunpack.c.l.b16 %v4607
        %v4798 = vunpack.c.l.b16 %v4617
        %v4799 = vunpack.c.l.b16 %v4631
        %v4800 = vunpack.c.l.b16 %v4641
        %v4801 = vunpack.c.l.b16 %v4655
        %v4802 = vunpack.c.l.b16 %v4665
        %v4803 = vunpack.c.l.b16 %v4679
        %v4804 = vunpack.c.l.b16 %v4689
        %v4805 = vunpack.c.l.b16 %v4703
        %v4806 = vunpack.c.l.b16 %v4713
        %v4807 = vunpack.c.l.b16 %v4727
        %v4808 = vunpack.c.l.b16 %v4737
        %v4809 = vunpack.c.l.b16 %v4751
        %v4810 = vunpack.c.l.b16 %v4761
        %v4811 = vpack.c.b16 %v4780, %v4779
        %v4812 = vpack.c.b16 %v4782, %v4781
        %v4813 = vpack.c.b16 %v4784, %v4783
        %v4814 = vpack.c.b16 %v4786, %v4785
        %v4815 = vpack.c.b16 %v4788, %v4787
        %v4816 = vpack.c.b16 %v4790, %v4789
        %v4817 = vpack.c.b16 %v4792, %v4791
        %v4818 = vpack.c.b16 %v4794, %v4793
        %v4819 = vpack.c.b16 %v4796, %v4795
        %v4820 = vpack.c.b16 %v4798, %v4797
        %v4821 = vpack.c.b16 %v4800, %v4799
        %v4822 = vpack.c.b16 %v4802, %v4801
        %v4823 = vpack.c.b16 %v4804, %v4803
        %v4824 = vpack.c.b16 %v4806, %v4805
        %v4825 = vpack.c.b16 %v4808, %v4807
        %v4826 = vpack.c.b16 %v4810, %v4809
        %v4859 = vunpack.c.l.b16 %v4763
        %v4860 = vunpack.c.l.b16 %v4764
        %v4861 = vunpack.c.l.b16 %v4765
        %v4862 = vunpack.c.l.b16 %v4766
        %v4863 = vunpack.c.l.b16 %v4767
        %v4864 = vunpack.c.l.b16 %v4768
        %v4865 = vunpack.c.l.b16 %v4769
        %v4866 = vunpack.c.l.b16 %v4770
        %v4867 = vunpack.c.l.b16 %v4771
        %v4868 = vunpack.c.l.b16 %v4772
        %v4869 = vunpack.c.l.b16 %v4773
        %v4870 = vunpack.c.l.b16 %v4774
        %v4871 = vunpack.c.l.b16 %v4775
        %v4872 = vunpack.c.l.b16 %v4776
        %v4873 = vunpack.c.l.b16 %v4777
        %v4874 = vunpack.c.l.b16 %v4778
        %v4875 = vpack.c.b16 %v4860, %v4859
        %v4876 = vpack.c.b16 %v4862, %v4861
        %v4877 = vpack.c.b16 %v4864, %v4863
        %v4878 = vpack.c.b16 %v4866, %v4865
        %v4879 = vpack.c.b16 %v4868, %v4867
        %v4880 = vpack.c.b16 %v4870, %v4869
        %v4881 = vpack.c.b16 %v4872, %v4871
        %v4882 = vpack.c.b16 %v4874, %v4873
        %4891 = vmatprep.subr.bf16.mxu0 0
        %4892 = vmatpush1.bf16.msra.mxu0 %v4875
        %4893 = vmatprep.subr.bf16.mxu0 0
        %4894 = vmatpush1.bf16.msra.mxu0 %v4876
        %4895 = vmatprep.subr.bf16.mxu0 0
        %4896 = vmatpush1.bf16.msra.mxu0 %v4877
        %4897 = vmatprep.subr.bf16.mxu0 0
        %4898 = vmatpush1.bf16.msra.mxu0 %v4878
        %4899 = vmatprep.subr.bf16.mxu0 0
        %4900 = vmatpush1.bf16.msra.mxu0 %v4879
        %4901 = vmatprep.subr.bf16.mxu0 0
        %4902 = vmatpush1.bf16.msra.mxu0 %v4880
        %4903 = vmatprep.subr.bf16.mxu0 0
        %4904 = vmatpush1.bf16.msra.mxu0 %v4881
        %4905 = vmatprep.subr.bf16.mxu0 0
        %4906 = vmatpush1.bf16.msra.mxu0 %v4882
        %4907 = vmatprep.subr.bf16.mxu0 0
        %4908 = vmatpush1.bf16.msra.mxu0 0
        %4909 = vmatprep.subr.bf16.mxu0 0
        %4910 = vmatpush1.bf16.msra.mxu0 0
        %4911 = vmatprep.subr.bf16.mxu0 0
        %4912 = vmatpush1.bf16.msra.mxu0 0
        %4913 = vmatprep.subr.bf16.mxu0 0
        %4914 = vmatpush1.bf16.msra.mxu0 0
        %4915 = vmatprep.subr.bf16.mxu0 0
        %4916 = vmatpush1.bf16.msra.mxu0 0
        %4917 = vmatprep.subr.bf16.mxu0 0
        %4918 = vmatpush1.bf16.msra.mxu0 0
        %4919 = vmatprep.subr.bf16.mxu0 0
        %4920 = vmatpush1.bf16.msra.mxu0 0
        %4921 = vmatprep.subr.bf16.mxu0 0
        %4922 = vmatpush1.bf16.msra.mxu0 0
        %4923 = vmatprep.mubr.bf16.mxu0 0
        %4924 = vmatmul.mubr.bf16.gmra.mrb[0].mxu0 %v4811
        %v4925 = vpop.f32.mrb[0].mxu0
        %v4926 = vadd.f32 0.0, %v4925
        %v4927 = vpop.f32.mrb[0].mxu0
        %v4928 = vpop.f32.mrb[0].mxu0
        %v4929 = vadd.f32 0.0, %v4928
        %v4930 = vpop.f32.mrb[0].mxu0
        %4931 = vmatprep.mubr.bf16.mxu0 0
        %4932 = vmatmul.mubr.bf16.gmra.mrb[0].mxu0 %v4812
        %v4933 = vpop.f32.mrb[0].mxu0
        %v4934 = vadd.f32 0.0, %v4933
        %v4935 = vpop.f32.mrb[0].mxu0
        %v4936 = vpop.f32.mrb[0].mxu0
        %v4937 = vadd.f32 0.0, %v4936
        %v4938 = vpop.f32.mrb[0].mxu0
        %4939 = vmatprep.mubr.bf16.mxu0 0
        %4940 = vmatmul.mubr.bf16.gmra.mrb[0].mxu0 %v4813
        %v4941 = vpop.f32.mrb[0].mxu0
        %v4942 = vadd.f32 0.0, %v4941
        %v4943 = vpop.f32.mrb[0].mxu0
        %v4944 = vpop.f32.mrb[0].mxu0
        %v4945 = vadd.f32 0.0, %v4944
        %v4946 = vpop.f32.mrb[0].mxu0
        %4947 = vmatprep.mubr.bf16.mxu0 0
        %4948 = vmatmul.mubr.bf16.gmra.mrb[0].mxu0 %v4814
        %v4949 = vpop.f32.mrb[0].mxu0
        %v4950 = vadd.f32 0.0, %v4949
        %v4951 = vpop.f32.mrb[0].mxu0
        %v4952 = vpop.f32.mrb[0].mxu0
        %v4953 = vadd.f32 0.0, %v4952
        %v4954 = vpop.f32.mrb[0].mxu0
        %4955 = vmatprep.mubr.bf16.mxu0 0
        %4956 = vmatmul.mubr.bf16.gmra.mrb[0].mxu0 %v4815
        %v4957 = vpop.f32.mrb[0].mxu0
        %v4958 = vadd.f32 0.0, %v4957
        %v4959 = vpop.f32.mrb[0].mxu0
        %v4960 = vpop.f32.mrb[0].mxu0
        %v4961 = vadd.f32 0.0, %v4960
        %v4962 = vpop.f32.mrb[0].mxu0
        %4963 = vmatprep.mubr.bf16.mxu0 0
        %4964 = vmatmul.mubr.bf16.gmra.mrb[0].mxu0 %v4816
        %v4965 = vpop.f32.mrb[0].mxu0
        %v4966 = vadd.f32 0.0, %v4965
        %v4967 = vpop.f32.mrb[0].mxu0
        %v4968 = vpop.f32.mrb[0].mxu0
        %v4969 = vadd.f32 0.0, %v4968
        %v4970 = vpop.f32.mrb[0].mxu0
        %4971 = vmatprep.mubr.bf16.mxu0 0
        %4972 = vmatmul.mubr.bf16.gmra.mrb[0].mxu0 %v4817
        %v4973 = vpop.f32.mrb[0].mxu0
        %v4974 = vadd.f32 0.0, %v4973
        %v4975 = vpop.f32.mrb[0].mxu0
        %v4976 = vpop.f32.mrb[0].mxu0
        %v4977 = vadd.f32 0.0, %v4976
        %v4978 = vpop.f32.mrb[0].mxu0
        %4979 = vmatprep.mubr.bf16.mxu0 0
        %4980 = vmatmul.mubr.bf16.gmra.mrb[0].mxu0 %v4818
        %v4981 = vpop.f32.mrb[0].mxu0
        %v4982 = vadd.f32 0.0, %v4981
        %v4983 = vpop.f32.mrb[0].mxu0
        %v4984 = vpop.f32.mrb[0].mxu0
        %v4985 = vadd.f32 0.0, %v4984
        %v4986 = vpop.f32.mrb[0].mxu0
        %4987 = vmatprep.mubr.bf16.mxu0 0
        %4988 = vmatmul.mubr.bf16.gmra.mrb[0].mxu0 %v4819
        %v4989 = vpop.f32.mrb[0].mxu0
        %v4990 = vadd.f32 0.0, %v4989
        %v4991 = vpop.f32.mrb[0].mxu0
        %v4992 = vpop.f32.mrb[0].mxu0
        %v4993 = vadd.f32 0.0, %v4992
        %v4994 = vpop.f32.mrb[0].mxu0
        %4995 = vmatprep.mubr.bf16.mxu0 0
        %4996 = vmatmul.mubr.bf16.gmra.mrb[0].mxu0 %v4820
        %v4997 = vpop.f32.mrb[0].mxu0
        %v4998 = vadd.f32 0.0, %v4997
        %v4999 = vpop.f32.mrb[0].mxu0
        %v5000 = vpop.f32.mrb[0].mxu0
        %v5001 = vadd.f32 0.0, %v5000
        %v5002 = vpop.f32.mrb[0].mxu0
        %5003 = vmatprep.mubr.bf16.mxu0 0
        %5004 = vmatmul.mubr.bf16.gmra.mrb[0].mxu0 %v4821
        %v5005 = vpop.f32.mrb[0].mxu0
        %v5006 = vadd.f32 0.0, %v5005
        %v5007 = vpop.f32.mrb[0].mxu0
        %v5008 = vpop.f32.mrb[0].mxu0
        %v5009 = vadd.f32 0.0, %v5008
        %v5010 = vpop.f32.mrb[0].mxu0
        %5011 = vmatprep.mubr.bf16.mxu0 0
        %5012 = vmatmul.mubr.bf16.gmra.mrb[0].mxu0 %v4822
        %v5013 = vpop.f32.mrb[0].mxu0
        %v5014 = vadd.f32 0.0, %v5013
        %v5015 = vpop.f32.mrb[0].mxu0
        %v5016 = vpop.f32.mrb[0].mxu0
        %v5017 = vadd.f32 0.0, %v5016
        %v5018 = vpop.f32.mrb[0].mxu0
        %5019 = vmatprep.mubr.bf16.mxu0 0
        %5020 = vmatmul.mubr.bf16.gmra.mrb[0].mxu0 %v4823
        %v5021 = vpop.f32.mrb[0].mxu0
        %v5022 = vadd.f32 0.0, %v5021
        %v5023 = vpop.f32.mrb[0].mxu0
        %v5024 = vpop.f32.mrb[0].mxu0
        %v5025 = vadd.f32 0.0, %v5024
        %v5026 = vpop.f32.mrb[0].mxu0
        %5027 = vmatprep.mubr.bf16.mxu0 0
        %5028 = vmatmul.mubr.bf16.gmra.mrb[0].mxu0 %v4824
        %v5029 = vpop.f32.mrb[0].mxu0
        %v5030 = vadd.f32 0.0, %v5029
        %v5031 = vpop.f32.mrb[0].mxu0
        %v5032 = vpop.f32.mrb[0].mxu0
        %v5033 = vadd.f32 0.0, %v5032
        %v5034 = vpop.f32.mrb[0].mxu0
        %5035 = vmatprep.mubr.bf16.mxu0 0
        %5036 = vmatmul.mubr.bf16.gmra.mrb[0].mxu0 %v4825
        %v5037 = vpop.f32.mrb[0].mxu0
        %v5038 = vadd.f32 0.0, %v5037
        %v5039 = vpop.f32.mrb[0].mxu0
        %v5040 = vpop.f32.mrb[0].mxu0
        %v5041 = vadd.f32 0.0, %v5040
        %v5042 = vpop.f32.mrb[0].mxu0
        %5043 = vmatprep.mubr.bf16.mxu0 0
        %5044 = vmatmul.mubr.bf16.gmra.mrb[0].mxu0 %v4826
        %v5045 = vpop.f32.mrb[0].mxu0
        %v5046 = vadd.f32 0.0, %v5045
        %v5047 = vpop.f32.mrb[0].mxu0
        %v5048 = vpop.f32.mrb[0].mxu0
        %v5049 = vadd.f32 0.0, %v5048
        %v5050 = vpop.f32.mrb[0].mxu0
        %5051 = vdwg.mxu0
        %v5052 = vld [vmem:[#allocation2] sm:$0xff]
        %v5053 = vld [vmem:[#allocation2 + $0x8] sm:$0xff]
        %v5054 = vld [vmem:[#allocation2 + $0x10] sm:$0xff]
        %v5055 = vld [vmem:[#allocation2 + $0x18] sm:$0xff]
        %v5056 = vld [vmem:[#allocation2 + $0x20] sm:$0xff]
        %v5057 = vld [vmem:[#allocation2 + $0x28] sm:$0xff]
        %v5058 = vld [vmem:[#allocation2 + $0x30] sm:$0xff]
        %v5059 = vld [vmem:[#allocation2 + $0x38] sm:$0xff]
        %v5060 = vld [vmem:[#allocation2 + $0x40] sm:$0xff]
        %v5061 = vld [vmem:[#allocation2 + $0x48] sm:$0xff]
        %v5062 = vld [vmem:[#allocation2 + $0x50] sm:$0xff]
        %v5063 = vld [vmem:[#allocation2 + $0x58] sm:$0xff]
        %v5064 = vld [vmem:[#allocation2 + $0x60] sm:$0xff]
        %v5065 = vld [vmem:[#allocation2 + $0x68] sm:$0xff]
        %v5066 = vld [vmem:[#allocation2 + $0x70] sm:$0xff]
        %v5067 = vld [vmem:[#allocation2 + $0x78] sm:$0xff]
        %v5068 = vld [vmem:[#allocation2 + $0x80] sm:$0xff]
        %v5069 = vld [vmem:[#allocation2 + $0x88] sm:$0xff]
        %v5070 = vld [vmem:[#allocation2 + $0x90] sm:$0xff]
        %v5071 = vld [vmem:[#allocation2 + $0x98] sm:$0xff]
        %v5072 = vld [vmem:[#allocation2 + $0xa0] sm:$0xff]
        %v5073 = vld [vmem:[#allocation2 + $0xa8] sm:$0xff]
        %v5074 = vld [vmem:[#allocation2 + $0xb0] sm:$0xff]
        %v5075 = vld [vmem:[#allocation2 + $0xb8] sm:$0xff]
        %v5076 = vld [vmem:[#allocation2 + $0xc0] sm:$0xff]
        %v5077 = vld [vmem:[#allocation2 + $0xc8] sm:$0xff]
        %v5078 = vld [vmem:[#allocation2 + $0xd0] sm:$0xff]
        %v5079 = vld [vmem:[#allocation2 + $0xd8] sm:$0xff]
        %v5080 = vld [vmem:[#allocation2 + $0xe0] sm:$0xff]
        %v5081 = vld [vmem:[#allocation2 + $0xe8] sm:$0xff]
        %v5082 = vld [vmem:[#allocation2 + $0xf0] sm:$0xff]
        %v5083 = vld [vmem:[#allocation2 + $0xf8] sm:$0xff]
        %v5084 = vadd.f32 %v5052, %v4926
        %v5085 = vadd.f32 %v5053, %v4929
        %v5086 = vadd.f32 %v5054, %v4934
        %v5087 = vadd.f32 %v5055, %v4937
        %v5088 = vadd.f32 %v5056, %v4942
        %v5089 = vadd.f32 %v5057, %v4945
        %v5090 = vadd.f32 %v5058, %v4950
        %v5091 = vadd.f32 %v5059, %v4953
        %v5092 = vadd.f32 %v5060, %v4958
        %v5093 = vadd.f32 %v5061, %v4961
        %v5094 = vadd.f32 %v5062, %v4966
        %v5095 = vadd.f32 %v5063, %v4969
        %v5096 = vadd.f32 %v5064, %v4974
        %v5097 = vadd.f32 %v5065, %v4977
        %v5098 = vadd.f32 %v5066, %v4982
        %v5099 = vadd.f32 %v5067, %v4985
        %v5100 = vadd.f32 %v5068, %v4990
        %v5101 = vadd.f32 %v5069, %v4993
        %v5102 = vadd.f32 %v5070, %v4998
        %v5103 = vadd.f32 %v5071, %v5001
        %v5104 = vadd.f32 %v5072, %v5006
        %v5105 = vadd.f32 %v5073, %v5009
        %v5106 = vadd.f32 %v5074, %v5014
        %v5107 = vadd.f32 %v5075, %v5017
        %v5108 = vadd.f32 %v5076, %v5022
        %v5109 = vadd.f32 %v5077, %v5025
        %v5110 = vadd.f32 %v5078, %v5030
        %v5111 = vadd.f32 %v5079, %v5033
        %v5112 = vadd.f32 %v5080, %v5038
        %v5113 = vadd.f32 %v5081, %v5041
        %v5114 = vadd.f32 %v5082, %v5046
        %v5115 = vadd.f32 %v5083, %v5049
        %5116 = vst [vmem:[#allocation2] sm:$0xff] %v5084
        %5117 = vst [vmem:[#allocation2 + $0x8] sm:$0xff] %v5085
        %5118 = vst [vmem:[#allocation2 + $0x10] sm:$0xff] %v5086
        %5119 = vst [vmem:[#allocation2 + $0x18] sm:$0xff] %v5087
        %5120 = vst [vmem:[#allocation2 + $0x20] sm:$0xff] %v5088
        %5121 = vst [vmem:[#allocation2 + $0x28] sm:$0xff] %v5089
        %5122 = vst [vmem:[#allocation2 + $0x30] sm:$0xff] %v5090
        %5123 = vst [vmem:[#allocation2 + $0x38] sm:$0xff] %v5091
        %5124 = vst [vmem:[#allocation2 + $0x40] sm:$0xff] %v5092
        %5125 = vst [vmem:[#allocation2 + $0x48] sm:$0xff] %v5093
        %5126 = vst [vmem:[#allocation2 + $0x50] sm:$0xff] %v5094
        %5127 = vst [vmem:[#allocation2 + $0x58] sm:$0xff] %v5095
        %5128 = vst [vmem:[#allocation2 + $0x60] sm:$0xff] %v5096
        %5129 = vst [vmem:[#allocation2 + $0x68] sm:$0xff] %v5097
        %5130 = vst [vmem:[#allocation2 + $0x70] sm:$0xff] %v5098
        %5131 = vst [vmem:[#allocation2 + $0x78] sm:$0xff] %v5099
        %5132 = vst [vmem:[#allocation2 + $0x80] sm:$0xff] %v5100
        %5133 = vst [vmem:[#allocation2 + $0x88] sm:$0xff] %v5101
        %5134 = vst [vmem:[#allocation2 + $0x90] sm:$0xff] %v5102
        %5135 = vst [vmem:[#allocation2 + $0x98] sm:$0xff] %v5103
        %5136 = vst [vmem:[#allocation2 + $0xa0] sm:$0xff] %v5104
        %5137 = vst [vmem:[#allocation2 + $0xa8] sm:$0xff] %v5105
        %5138 = vst [vmem:[#allocation2 + $0xb0] sm:$0xff] %v5106
        %5139 = vst [vmem:[#allocation2 + $0xb8] sm:$0xff] %v5107
        %5140 = vst [vmem:[#allocation2 + $0xc0] sm:$0xff] %v5108
        %5141 = vst [vmem:[#allocation2 + $0xc8] sm:$0xff] %v5109
        %5142 = vst [vmem:[#allocation2 + $0xd0] sm:$0xff] %v5110
        %5143 = vst [vmem:[#allocation2 + $0xd8] sm:$0xff] %v5111
        %5144 = vst [vmem:[#allocation2 + $0xe0] sm:$0xff] %v5112
        %5145 = vst [vmem:[#allocation2 + $0xe8] sm:$0xff] %v5113
        %5146 = vst [vmem:[#allocation2 + $0xf0] sm:$0xff] %v5114
        %5147 = vst [vmem:[#allocation2 + $0xf8] sm:$0xff] %v5115
        %v5148 = vld [vmem:[%s3879] sm:$0xe]
        %v5149 = vld [vmem:[%s3879 + $0x4] sm:$0xf]
        %v5150 = vld [vmem:[%s3879 + $0x8] sm:$0x1]
        %v5151 = vld [vmem:[%s3879 + $0xc] sm:$0xe]
        %v5152 = vld [vmem:[%s3879 + $0x10] sm:$0xf]
        %v5153 = vld [vmem:[%s3879 + $0x14] sm:$0x1]
        %v5154 = vld [vmem:[%s3879 + $0x18] sm:$0xe]
        %v5155 = vld [vmem:[%s3879 + $0x1c] sm:$0xf]
        %v5156 = vld [vmem:[%s3879 + $0x20] sm:$0x1]
        %v5157 = vld [vmem:[%s3879 + $0x24] sm:$0xe]
        %v5158 = vld [vmem:[%s3879 + $0x28] sm:$0xf]
        %v5159 = vld [vmem:[%s3879 + $0x2c] sm:$0x1]
        %v5160 = vld [vmem:[%s3879 + $0x30] sm:$0xe]
        %v5161 = vld [vmem:[%s3879 + $0x34] sm:$0xf]
        %v5162 = vld [vmem:[%s3879 + $0x38] sm:$0x1]
        %v5163 = vld [vmem:[%s3879 + $0x3c] sm:$0xe]
        %v5164 = vld [vmem:[%s3879 + $0x40] sm:$0xf]
        %v5165 = vld [vmem:[%s3879 + $0x44] sm:$0x1]
        %v5166 = vld [vmem:[%s3879 + $0x48] sm:$0xe]
        %v5167 = vld [vmem:[%s3879 + $0x4c] sm:$0xf]
        %v5168 = vld [vmem:[%s3879 + $0x50] sm:$0x1]
        %v5169 = vld [vmem:[%s3879 + $0x54] sm:$0xe]
        %v5170 = vld [vmem:[%s3879 + $0x58] sm:$0xf]
        %v5171 = vld [vmem:[%s3879 + $0x5c] sm:$0x1]
        %v5172 = vld [vmem:[%s3879 + $0x60] sm:$0xe]
        %v5173 = vld [vmem:[%s3879 + $0x64] sm:$0xf]
        %v5174 = vld [vmem:[%s3879 + $0x68] sm:$0x1]
        %v5175 = vld [vmem:[%s3879 + $0x6c] sm:$0xe]
        %v5176 = vld [vmem:[%s3879 + $0x70] sm:$0xf]
        %v5177 = vld [vmem:[%s3879 + $0x74] sm:$0x1]
        %v5178 = vld [vmem:[%s3879 + $0x78] sm:$0xe]
        %v5179 = vld [vmem:[%s3879 + $0x7c] sm:$0xf]
        %v5180 = vld [vmem:[%s3879 + $0x80] sm:$0x1]
        %v5181 = vld [vmem:[%s3879 + $0x84] sm:$0xe]
        %v5182 = vld [vmem:[%s3879 + $0x88] sm:$0xf]
        %v5183 = vld [vmem:[%s3879 + $0x8c] sm:$0x1]
        %v5184 = vld [vmem:[%s3879 + $0x90] sm:$0xe]
        %v5185 = vld [vmem:[%s3879 + $0x94] sm:$0xf]
        %v5186 = vld [vmem:[%s3879 + $0x98] sm:$0x1]
        %v5187 = vld [vmem:[%s3879 + $0x9c] sm:$0xe]
        %v5188 = vld [vmem:[%s3879 + $0xa0] sm:$0xf]
        %v5189 = vld [vmem:[%s3879 + $0xa4] sm:$0x1]
        %v5190 = vld [vmem:[%s3879 + $0xa8] sm:$0xe]
        %v5191 = vld [vmem:[%s3879 + $0xac] sm:$0xf]
        %v5192 = vld [vmem:[%s3879 + $0xb0] sm:$0x1]
        %v5193 = vld [vmem:[%s3879 + $0xb4] sm:$0xe]
        %v5194 = vld [vmem:[%s3879 + $0xb8] sm:$0xf]
        %v5195 = vld [vmem:[%s3879 + $0xbc] sm:$0x1]
        %v5244 = vrot.slane %v5148, 5
        %v5245 = vrot.slane %v5244, 4
        %v5246 = vrot.slane %v5149, 5
        %v5247 = vsel %vm1517, %v5245, %v5246
        %v5248 = vrot.slane %v5246, 4
        %v5249 = vrot.slane %v5150, 5
        %v5250 = vsel %vm1517, %v5248, %v5249
        %v5251 = vrot.slane %v5151, 5
        %v5252 = vrot.slane %v5251, 4
        %v5253 = vrot.slane %v5152, 5
        %v5254 = vsel %vm1517, %v5252, %v5253
        %v5255 = vrot.slane %v5253, 4
        %v5256 = vrot.slane %v5153, 5
        %v5257 = vsel %vm1517, %v5255, %v5256
        %v5258 = vrot.slane %v5154, 5
        %v5259 = vrot.slane %v5258, 4
        %v5260 = vrot.slane %v5155, 5
        %v5261 = vsel %vm1517, %v5259, %v5260
        %v5262 = vrot.slane %v5260, 4
        %v5263 = vrot.slane %v5156, 5
        %v5264 = vsel %vm1517, %v5262, %v5263
        %v5265 = vrot.slane %v5157, 5
        %v5266 = vrot.slane %v5265, 4
        %v5267 = vrot.slane %v5158, 5
        %v5268 = vsel %vm1517, %v5266, %v5267
        %v5269 = vrot.slane %v5267, 4
        %v5270 = vrot.slane %v5159, 5
        %v5271 = vsel %vm1517, %v5269, %v5270
        %v5272 = vrot.slane %v5160, 5
        %v5273 = vrot.slane %v5272, 4
        %v5274 = vrot.slane %v5161, 5
        %v5275 = vsel %vm1517, %v5273, %v5274
        %v5276 = vrot.slane %v5274, 4
        %v5277 = vrot.slane %v5162, 5
        %v5278 = vsel %vm1517, %v5276, %v5277
        %v5279 = vrot.slane %v5163, 5
        %v5280 = vrot.slane %v5279, 4
        %v5281 = vrot.slane %v5164, 5
        %v5282 = vsel %vm1517, %v5280, %v5281
        %v5283 = vrot.slane %v5281, 4
        %v5284 = vrot.slane %v5165, 5
        %v5285 = vsel %vm1517, %v5283, %v5284
        %v5286 = vrot.slane %v5166, 5
        %v5287 = vrot.slane %v5286, 4
        %v5288 = vrot.slane %v5167, 5
        %v5289 = vsel %vm1517, %v5287, %v5288
        %v5290 = vrot.slane %v5288, 4
        %v5291 = vrot.slane %v5168, 5
        %v5292 = vsel %vm1517, %v5290, %v5291
        %v5293 = vrot.slane %v5169, 5
        %v5294 = vrot.slane %v5293, 4
        %v5295 = vrot.slane %v5170, 5
        %v5296 = vsel %vm1517, %v5294, %v5295
        %v5297 = vrot.slane %v5295, 4
        %v5298 = vrot.slane %v5171, 5
        %v5299 = vsel %vm1517, %v5297, %v5298
        %v5300 = vrot.slane %v5172, 5
        %v5301 = vrot.slane %v5300, 4
        %v5302 = vrot.slane %v5173, 5
        %v5303 = vsel %vm1517, %v5301, %v5302
        %v5304 = vrot.slane %v5302, 4
        %v5305 = vrot.slane %v5174, 5
        %v5306 = vsel %vm1517, %v5304, %v5305
        %v5307 = vrot.slane %v5175, 5
        %v5308 = vrot.slane %v5307, 4
        %v5309 = vrot.slane %v5176, 5
        %v5310 = vsel %vm1517, %v5308, %v5309
        %v5311 = vrot.slane %v5309, 4
        %v5312 = vrot.slane %v5177, 5
        %v5313 = vsel %vm1517, %v5311, %v5312
        %v5314 = vrot.slane %v5178, 5
        %v5315 = vrot.slane %v5314, 4
        %v5316 = vrot.slane %v5179, 5
        %v5317 = vsel %vm1517, %v5315, %v5316
        %v5318 = vrot.slane %v5316, 4
        %v5319 = vrot.slane %v5180, 5
        %v5320 = vsel %vm1517, %v5318, %v5319
        %v5321 = vrot.slane %v5181, 5
        %v5322 = vrot.slane %v5321, 4
        %v5323 = vrot.slane %v5182, 5
        %v5324 = vsel %vm1517, %v5322, %v5323
        %v5325 = vrot.slane %v5323, 4
        %v5326 = vrot.slane %v5183, 5
        %v5327 = vsel %vm1517, %v5325, %v5326
        %v5328 = vrot.slane %v5184, 5
        %v5329 = vrot.slane %v5328, 4
        %v5330 = vrot.slane %v5185, 5
        %v5331 = vsel %vm1517, %v5329, %v5330
        %v5332 = vrot.slane %v5330, 4
        %v5333 = vrot.slane %v5186, 5
        %v5334 = vsel %vm1517, %v5332, %v5333
        %v5335 = vrot.slane %v5187, 5
        %v5336 = vrot.slane %v5335, 4
        %v5337 = vrot.slane %v5188, 5
        %v5338 = vsel %vm1517, %v5336, %v5337
        %v5339 = vrot.slane %v5337, 4
        %v5340 = vrot.slane %v5189, 5
        %v5341 = vsel %vm1517, %v5339, %v5340
        %v5342 = vrot.slane %v5190, 5
        %v5343 = vrot.slane %v5342, 4
        %v5344 = vrot.slane %v5191, 5
        %v5345 = vsel %vm1517, %v5343, %v5344
        %v5346 = vrot.slane %v5344, 4
        %v5347 = vrot.slane %v5192, 5
        %v5348 = vsel %vm1517, %v5346, %v5347
        %v5349 = vrot.slane %v5193, 5
        %v5350 = vrot.slane %v5349, 4
        %v5351 = vrot.slane %v5194, 5
        %v5352 = vsel %vm1517, %v5350, %v5351
        %v5353 = vrot.slane %v5351, 4
        %v5354 = vrot.slane %v5195, 5
        %v5355 = vsel %vm1517, %v5353, %v5354
        %s5356 = scalar_lea.vmem %s1, 512
        %v5357 = vld [vmem:[%s5356] sm:$0xf]
        %v5358 = vld [vmem:[%s5356 + $0x4] sm:$0xf]
        %v5359 = vld [vmem:[%s5356 + $0x8] sm:$0xf]
        %v5360 = vld [vmem:[%s5356 + $0xc] sm:$0xf]
        %v5361 = vld [vmem:[%s5356 + $0x10] sm:$0xf]
        %v5362 = vld [vmem:[%s5356 + $0x14] sm:$0xf]
        %v5363 = vld [vmem:[%s5356 + $0x18] sm:$0xf]
        %v5364 = vld [vmem:[%s5356 + $0x1c] sm:$0xf]
        %v5365 = vld [vmem:[%s5356 + $0x20] sm:$0xf]
        %v5366 = vld [vmem:[%s5356 + $0x24] sm:$0xf]
        %v5367 = vld [vmem:[%s5356 + $0x28] sm:$0xf]
        %v5368 = vld [vmem:[%s5356 + $0x2c] sm:$0xf]
        %v5369 = vld [vmem:[%s5356 + $0x30] sm:$0xf]
        %v5370 = vld [vmem:[%s5356 + $0x34] sm:$0xf]
        %v5371 = vld [vmem:[%s5356 + $0x38] sm:$0xf]
        %v5372 = vld [vmem:[%s5356 + $0x3c] sm:$0xf]
        %v5373 = vunpack.c.l.b16 %v5247
        %v5374 = vunpack.c.l.b16 %v5250
        %v5375 = vunpack.c.l.b16 %v5254
        %v5376 = vunpack.c.l.b16 %v5257
        %v5377 = vunpack.c.l.b16 %v5261
        %v5378 = vunpack.c.l.b16 %v5264
        %v5379 = vunpack.c.l.b16 %v5268
        %v5380 = vunpack.c.l.b16 %v5271
        %v5381 = vunpack.c.l.b16 %v5275
        %v5382 = vunpack.c.l.b16 %v5278
        %v5383 = vunpack.c.l.b16 %v5282
        %v5384 = vunpack.c.l.b16 %v5285
        %v5385 = vunpack.c.l.b16 %v5289
        %v5386 = vunpack.c.l.b16 %v5292
        %v5387 = vunpack.c.l.b16 %v5296
        %v5388 = vunpack.c.l.b16 %v5299
        %v5389 = vunpack.c.l.b16 %v5303
        %v5390 = vunpack.c.l.b16 %v5306
        %v5391 = vunpack.c.l.b16 %v5310
        %v5392 = vunpack.c.l.b16 %v5313
        %v5393 = vunpack.c.l.b16 %v5317
        %v5394 = vunpack.c.l.b16 %v5320
        %v5395 = vunpack.c.l.b16 %v5324
        %v5396 = vunpack.c.l.b16 %v5327
        %v5397 = vunpack.c.l.b16 %v5331
        %v5398 = vunpack.c.l.b16 %v5334
        %v5399 = vunpack.c.l.b16 %v5338
        %v5400 = vunpack.c.l.b16 %v5341
        %v5401 = vunpack.c.l.b16 %v5345
        %v5402 = vunpack.c.l.b16 %v5348
        %v5403 = vunpack.c.l.b16 %v5352
        %v5404 = vunpack.c.l.b16 %v5355
        %v5405 = vpack.c.b16 %v5374, %v5373
        %v5406 = vpack.c.b16 %v5376, %v5375
        %v5407 = vpack.c.b16 %v5378, %v5377
        %v5408 = vpack.c.b16 %v5380, %v5379
        %v5409 = vpack.c.b16 %v5382, %v5381
        %v5410 = vpack.c.b16 %v5384, %v5383
        %v5411 = vpack.c.b16 %v5386, %v5385
        %v5412 = vpack.c.b16 %v5388, %v5387
        %v5413 = vpack.c.b16 %v5390, %v5389
        %v5414 = vpack.c.b16 %v5392, %v5391
        %v5415 = vpack.c.b16 %v5394, %v5393
        %v5416 = vpack.c.b16 %v5396, %v5395
        %v5417 = vpack.c.b16 %v5398, %v5397
        %v5418 = vpack.c.b16 %v5400, %v5399
        %v5419 = vpack.c.b16 %v5402, %v5401
        %v5420 = vpack.c.b16 %v5404, %v5403
        %v5453 = vunpack.c.l.b16 %v5357
        %v5454 = vunpack.c.l.b16 %v5358
        %v5455 = vunpack.c.l.b16 %v5359
        %v5456 = vunpack.c.l.b16 %v5360
        %v5457 = vunpack.c.l.b16 %v5361
        %v5458 = vunpack.c.l.b16 %v5362
        %v5459 = vunpack.c.l.b16 %v5363
        %v5460 = vunpack.c.l.b16 %v5364
        %v5461 = vunpack.c.l.b16 %v5365
        %v5462 = vunpack.c.l.b16 %v5366
        %v5463 = vunpack.c.l.b16 %v5367
        %v5464 = vunpack.c.l.b16 %v5368
        %v5465 = vunpack.c.l.b16 %v5369
        %v5466 = vunpack.c.l.b16 %v5370
        %v5467 = vunpack.c.l.b16 %v5371
        %v5468 = vunpack.c.l.b16 %v5372
        %v5469 = vpack.c.b16 %v5454, %v5453
        %v5470 = vpack.c.b16 %v5456, %v5455
        %v5471 = vpack.c.b16 %v5458, %v5457
        %v5472 = vpack.c.b16 %v5460, %v5459
        %v5473 = vpack.c.b16 %v5462, %v5461
        %v5474 = vpack.c.b16 %v5464, %v5463
        %v5475 = vpack.c.b16 %v5466, %v5465
        %v5476 = vpack.c.b16 %v5468, %v5467
        %5485 = vmatprep.subr.bf16.mxu0 0
        %5486 = vmatpush1.bf16.msra.mxu0 %v5469
        %5487 = vmatprep.subr.bf16.mxu0 0
        %5488 = vmatpush1.bf16.msra.mxu0 %v5470
        %5489 = vmatprep.subr.bf16.mxu0 0
        %5490 = vmatpush1.bf16.msra.mxu0 %v5471
        %5491 = vmatprep.subr.bf16.mxu0 0
        %5492 = vmatpush1.bf16.msra.mxu0 %v5472
        %5493 = vmatprep.subr.bf16.mxu0 0
        %5494 = vmatpush1.bf16.msra.mxu0 %v5473
        %5495 = vmatprep.subr.bf16.mxu0 0
        %5496 = vmatpush1.bf16.msra.mxu0 %v5474
        %5497 = vmatprep.subr.bf16.mxu0 0
        %5498 = vmatpush1.bf16.msra.mxu0 %v5475
        %5499 = vmatprep.subr.bf16.mxu0 0
        %5500 = vmatpush1.bf16.msra.mxu0 %v5476
        %5501 = vmatprep.subr.bf16.mxu0 0
        %5502 = vmatpush1.bf16.msra.mxu0 0
        %5503 = vmatprep.subr.bf16.mxu0 0
        %5504 = vmatpush1.bf16.msra.mxu0 0
        %5505 = vmatprep.subr.bf16.mxu0 0
        %5506 = vmatpush1.bf16.msra.mxu0 0
        %5507 = vmatprep.subr.bf16.mxu0 0
        %5508 = vmatpush1.bf16.msra.mxu0 0
        %5509 = vmatprep.subr.bf16.mxu0 0
        %5510 = vmatpush1.bf16.msra.mxu0 0
        %5511 = vmatprep.subr.bf16.mxu0 0
        %5512 = vmatpush1.bf16.msra.mxu0 0
        %5513 = vmatprep.subr.bf16.mxu0 0
        %5514 = vmatpush1.bf16.msra.mxu0 0
        %5515 = vmatprep.subr.bf16.mxu0 0
        %5516 = vmatpush1.bf16.msra.mxu0 0
        %5517 = vmatprep.mubr.bf16.mxu0 0
        %5518 = vmatmul.mubr.bf16.gmra.mrb[0].mxu0 %v5405
        %v5519 = vpop.f32.mrb[0].mxu0
        %v5520 = vadd.f32 0.0, %v5519
        %v5521 = vpop.f32.mrb[0].mxu0
        %v5522 = vpop.f32.mrb[0].mxu0
        %v5523 = vadd.f32 0.0, %v5522
        %v5524 = vpop.f32.mrb[0].mxu0
        %5525 = vmatprep.mubr.bf16.mxu0 0
        %5526 = vmatmul.mubr.bf16.gmra.mrb[0].mxu0 %v5406
        %v5527 = vpop.f32.mrb[0].mxu0
        %v5528 = vadd.f32 0.0, %v5527
        %v5529 = vpop.f32.mrb[0].mxu0
        %v5530 = vpop.f32.mrb[0].mxu0
        %v5531 = vadd.f32 0.0, %v5530
        %v5532 = vpop.f32.mrb[0].mxu0
        %5533 = vmatprep.mubr.bf16.mxu0 0
        %5534 = vmatmul.mubr.bf16.gmra.mrb[0].mxu0 %v5407
        %v5535 = vpop.f32.mrb[0].mxu0
        %v5536 = vadd.f32 0.0, %v5535
        %v5537 = vpop.f32.mrb[0].mxu0
        %v5538 = vpop.f32.mrb[0].mxu0
        %v5539 = vadd.f32 0.0, %v5538
        %v5540 = vpop.f32.mrb[0].mxu0
        %5541 = vmatprep.mubr.bf16.mxu0 0
        %5542 = vmatmul.mubr.bf16.gmra.mrb[0].mxu0 %v5408
        %v5543 = vpop.f32.mrb[0].mxu0
        %v5544 = vadd.f32 0.0, %v5543
        %v5545 = vpop.f32.mrb[0].mxu0
        %v5546 = vpop.f32.mrb[0].mxu0
        %v5547 = vadd.f32 0.0, %v5546
        %v5548 = vpop.f32.mrb[0].mxu0
        %5549 = vmatprep.mubr.bf16.mxu0 0
        %5550 = vmatmul.mubr.bf16.gmra.mrb[0].mxu0 %v5409
        %v5551 = vpop.f32.mrb[0].mxu0
        %v5552 = vadd.f32 0.0, %v5551
        %v5553 = vpop.f32.mrb[0].mxu0
        %v5554 = vpop.f32.mrb[0].mxu0
        %v5555 = vadd.f32 0.0, %v5554
        %v5556 = vpop.f32.mrb[0].mxu0
        %5557 = vmatprep.mubr.bf16.mxu0 0
        %5558 = vmatmul.mubr.bf16.gmra.mrb[0].mxu0 %v5410
        %v5559 = vpop.f32.mrb[0].mxu0
        %v5560 = vadd.f32 0.0, %v5559
        %v5561 = vpop.f32.mrb[0].mxu0
        %v5562 = vpop.f32.mrb[0].mxu0
        %v5563 = vadd.f32 0.0, %v5562
        %v5564 = vpop.f32.mrb[0].mxu0
        %5565 = vmatprep.mubr.bf16.mxu0 0
        %5566 = vmatmul.mubr.bf16.gmra.mrb[0].mxu0 %v5411
        %v5567 = vpop.f32.mrb[0].mxu0
        %v5568 = vadd.f32 0.0, %v5567
        %v5569 = vpop.f32.mrb[0].mxu0
        %v5570 = vpop.f32.mrb[0].mxu0
        %v5571 = vadd.f32 0.0, %v5570
        %v5572 = vpop.f32.mrb[0].mxu0
        %5573 = vmatprep.mubr.bf16.mxu0 0
        %5574 = vmatmul.mubr.bf16.gmra.mrb[0].mxu0 %v5412
        %v5575 = vpop.f32.mrb[0].mxu0
        %v5576 = vadd.f32 0.0, %v5575
        %v5577 = vpop.f32.mrb[0].mxu0
        %v5578 = vpop.f32.mrb[0].mxu0
        %v5579 = vadd.f32 0.0, %v5578
        %v5580 = vpop.f32.mrb[0].mxu0
        %5581 = vmatprep.mubr.bf16.mxu0 0
        %5582 = vmatmul.mubr.bf16.gmra.mrb[0].mxu0 %v5413
        %v5583 = vpop.f32.mrb[0].mxu0
        %v5584 = vadd.f32 0.0, %v5583
        %v5585 = vpop.f32.mrb[0].mxu0
        %v5586 = vpop.f32.mrb[0].mxu0
        %v5587 = vadd.f32 0.0, %v5586
        %v5588 = vpop.f32.mrb[0].mxu0
        %5589 = vmatprep.mubr.bf16.mxu0 0
        %5590 = vmatmul.mubr.bf16.gmra.mrb[0].mxu0 %v5414
        %v5591 = vpop.f32.mrb[0].mxu0
        %v5592 = vadd.f32 0.0, %v5591
        %v5593 = vpop.f32.mrb[0].mxu0
        %v5594 = vpop.f32.mrb[0].mxu0
        %v5595 = vadd.f32 0.0, %v5594
        %v5596 = vpop.f32.mrb[0].mxu0
        %5597 = vmatprep.mubr.bf16.mxu0 0
        %5598 = vmatmul.mubr.bf16.gmra.mrb[0].mxu0 %v5415
        %v5599 = vpop.f32.mrb[0].mxu0
        %v5600 = vadd.f32 0.0, %v5599
        %v5601 = vpop.f32.mrb[0].mxu0
        %v5602 = vpop.f32.mrb[0].mxu0
        %v5603 = vadd.f32 0.0, %v5602
        %v5604 = vpop.f32.mrb[0].mxu0
        %5605 = vmatprep.mubr.bf16.mxu0 0
        %5606 = vmatmul.mubr.bf16.gmra.mrb[0].mxu0 %v5416
        %v5607 = vpop.f32.mrb[0].mxu0
        %v5608 = vadd.f32 0.0, %v5607
        %v5609 = vpop.f32.mrb[0].mxu0
        %v5610 = vpop.f32.mrb[0].mxu0
        %v5611 = vadd.f32 0.0, %v5610
        %v5612 = vpop.f32.mrb[0].mxu0
        %5613 = vmatprep.mubr.bf16.mxu0 0
        %5614 = vmatmul.mubr.bf16.gmra.mrb[0].mxu0 %v5417
        %v5615 = vpop.f32.mrb[0].mxu0
        %v5616 = vadd.f32 0.0, %v5615
        %v5617 = vpop.f32.mrb[0].mxu0
        %v5618 = vpop.f32.mrb[0].mxu0
        %v5619 = vadd.f32 0.0, %v5618
        %v5620 = vpop.f32.mrb[0].mxu0
        %5621 = vmatprep.mubr.bf16.mxu0 0
        %5622 = vmatmul.mubr.bf16.gmra.mrb[0].mxu0 %v5418
        %v5623 = vpop.f32.mrb[0].mxu0
        %v5624 = vadd.f32 0.0, %v5623
        %v5625 = vpop.f32.mrb[0].mxu0
        %v5626 = vpop.f32.mrb[0].mxu0
        %v5627 = vadd.f32 0.0, %v5626
        %v5628 = vpop.f32.mrb[0].mxu0
        %5629 = vmatprep.mubr.bf16.mxu0 0
        %5630 = vmatmul.mubr.bf16.gmra.mrb[0].mxu0 %v5419
        %v5631 = vpop.f32.mrb[0].mxu0
        %v5632 = vadd.f32 0.0, %v5631
        %v5633 = vpop.f32.mrb[0].mxu0
        %v5634 = vpop.f32.mrb[0].mxu0
        %v5635 = vadd.f32 0.0, %v5634
        %v5636 = vpop.f32.mrb[0].mxu0
        %5637 = vmatprep.mubr.bf16.mxu0 0
        %5638 = vmatmul.mubr.bf16.gmra.mrb[0].mxu0 %v5420
        %v5639 = vpop.f32.mrb[0].mxu0
        %v5640 = vadd.f32 0.0, %v5639
        %v5641 = vpop.f32.mrb[0].mxu0
        %v5642 = vpop.f32.mrb[0].mxu0
        %v5643 = vadd.f32 0.0, %v5642
        %v5644 = vpop.f32.mrb[0].mxu0
        %5645 = vdwg.mxu0
        %v5646 = vld [vmem:[#allocation2] sm:$0xff]
        %v5647 = vld [vmem:[#allocation2 + $0x8] sm:$0xff]
        %v5648 = vld [vmem:[#allocation2 + $0x10] sm:$0xff]
        %v5649 = vld [vmem:[#allocation2 + $0x18] sm:$0xff]
        %v5650 = vld [vmem:[#allocation2 + $0x20] sm:$0xff]
        %v5651 = vld [vmem:[#allocation2 + $0x28] sm:$0xff]
        %v5652 = vld [vmem:[#allocation2 + $0x30] sm:$0xff]
        %v5653 = vld [vmem:[#allocation2 + $0x38] sm:$0xff]
        %v5654 = vld [vmem:[#allocation2 + $0x40] sm:$0xff]
        %v5655 = vld [vmem:[#allocation2 + $0x48] sm:$0xff]
        %v5656 = vld [vmem:[#allocation2 + $0x50] sm:$0xff]
        %v5657 = vld [vmem:[#allocation2 + $0x58] sm:$0xff]
        %v5658 = vld [vmem:[#allocation2 + $0x60] sm:$0xff]
        %v5659 = vld [vmem:[#allocation2 + $0x68] sm:$0xff]
        %v5660 = vld [vmem:[#allocation2 + $0x70] sm:$0xff]
        %v5661 = vld [vmem:[#allocation2 + $0x78] sm:$0xff]
        %v5662 = vld [vmem:[#allocation2 + $0x80] sm:$0xff]
        %v5663 = vld [vmem:[#allocation2 + $0x88] sm:$0xff]
        %v5664 = vld [vmem:[#allocation2 + $0x90] sm:$0xff]
        %v5665 = vld [vmem:[#allocation2 + $0x98] sm:$0xff]
        %v5666 = vld [vmem:[#allocation2 + $0xa0] sm:$0xff]
        %v5667 = vld [vmem:[#allocation2 + $0xa8] sm:$0xff]
        %v5668 = vld [vmem:[#allocation2 + $0xb0] sm:$0xff]
        %v5669 = vld [vmem:[#allocation2 + $0xb8] sm:$0xff]
        %v5670 = vld [vmem:[#allocation2 + $0xc0] sm:$0xff]
        %v5671 = vld [vmem:[#allocation2 + $0xc8] sm:$0xff]
        %v5672 = vld [vmem:[#allocation2 + $0xd0] sm:$0xff]
        %v5673 = vld [vmem:[#allocation2 + $0xd8] sm:$0xff]
        %v5674 = vld [vmem:[#allocation2 + $0xe0] sm:$0xff]
        %v5675 = vld [vmem:[#allocation2 + $0xe8] sm:$0xff]
        %v5676 = vld [vmem:[#allocation2 + $0xf0] sm:$0xff]
        %v5677 = vld [vmem:[#allocation2 + $0xf8] sm:$0xff]
        %v5678 = vadd.f32 %v5646, %v5520
        %v5679 = vadd.f32 %v5647, %v5523
        %v5680 = vadd.f32 %v5648, %v5528
        %v5681 = vadd.f32 %v5649, %v5531
        %v5682 = vadd.f32 %v5650, %v5536
        %v5683 = vadd.f32 %v5651, %v5539
        %v5684 = vadd.f32 %v5652, %v5544
        %v5685 = vadd.f32 %v5653, %v5547
        %v5686 = vadd.f32 %v5654, %v5552
        %v5687 = vadd.f32 %v5655, %v5555
        %v5688 = vadd.f32 %v5656, %v5560
        %v5689 = vadd.f32 %v5657, %v5563
        %v5690 = vadd.f32 %v5658, %v5568
        %v5691 = vadd.f32 %v5659, %v5571
        %v5692 = vadd.f32 %v5660, %v5576
        %v5693 = vadd.f32 %v5661, %v5579
        %v5694 = vadd.f32 %v5662, %v5584
        %v5695 = vadd.f32 %v5663, %v5587
        %v5696 = vadd.f32 %v5664, %v5592
        %v5697 = vadd.f32 %v5665, %v5595
        %v5698 = vadd.f32 %v5666, %v5600
        %v5699 = vadd.f32 %v5667, %v5603
        %v5700 = vadd.f32 %v5668, %v5608
        %v5701 = vadd.f32 %v5669, %v5611
        %v5702 = vadd.f32 %v5670, %v5616
        %v5703 = vadd.f32 %v5671, %v5619
        %v5704 = vadd.f32 %v5672, %v5624
        %v5705 = vadd.f32 %v5673, %v5627
        %v5706 = vadd.f32 %v5674, %v5632
        %v5707 = vadd.f32 %v5675, %v5635
        %v5708 = vadd.f32 %v5676, %v5640
        %v5709 = vadd.f32 %v5677, %v5643
        %5710 = vst [vmem:[#allocation2] sm:$0xff] %v5678
        %5711 = vst [vmem:[#allocation2 + $0x8] sm:$0xff] %v5679
        %5712 = vst [vmem:[#allocation2 + $0x10] sm:$0xff] %v5680
        %5713 = vst [vmem:[#allocation2 + $0x18] sm:$0xff] %v5681
        %5714 = vst [vmem:[#allocation2 + $0x20] sm:$0xff] %v5682
        %5715 = vst [vmem:[#allocation2 + $0x28] sm:$0xff] %v5683
        %5716 = vst [vmem:[#allocation2 + $0x30] sm:$0xff] %v5684
        %5717 = vst [vmem:[#allocation2 + $0x38] sm:$0xff] %v5685
        %5718 = vst [vmem:[#allocation2 + $0x40] sm:$0xff] %v5686
        %5719 = vst [vmem:[#allocation2 + $0x48] sm:$0xff] %v5687
        %5720 = vst [vmem:[#allocation2 + $0x50] sm:$0xff] %v5688
        %5721 = vst [vmem:[#allocation2 + $0x58] sm:$0xff] %v5689
        %5722 = vst [vmem:[#allocation2 + $0x60] sm:$0xff] %v5690
        %5723 = vst [vmem:[#allocation2 + $0x68] sm:$0xff] %v5691
        %5724 = vst [vmem:[#allocation2 + $0x70] sm:$0xff] %v5692
        %5725 = vst [vmem:[#allocation2 + $0x78] sm:$0xff] %v5693
        %5726 = vst [vmem:[#allocation2 + $0x80] sm:$0xff] %v5694
        %5727 = vst [vmem:[#allocation2 + $0x88] sm:$0xff] %v5695
        %5728 = vst [vmem:[#allocation2 + $0x90] sm:$0xff] %v5696
        %5729 = vst [vmem:[#allocation2 + $0x98] sm:$0xff] %v5697
        %5730 = vst [vmem:[#allocation2 + $0xa0] sm:$0xff] %v5698
        %5731 = vst [vmem:[#allocation2 + $0xa8] sm:$0xff] %v5699
        %5732 = vst [vmem:[#allocation2 + $0xb0] sm:$0xff] %v5700
        %5733 = vst [vmem:[#allocation2 + $0xb8] sm:$0xff] %v5701
        %5734 = vst [vmem:[#allocation2 + $0xc0] sm:$0xff] %v5702
        %5735 = vst [vmem:[#allocation2 + $0xc8] sm:$0xff] %v5703
        %5736 = vst [vmem:[#allocation2 + $0xd0] sm:$0xff] %v5704
        %5737 = vst [vmem:[#allocation2 + $0xd8] sm:$0xff] %v5705
        %5738 = vst [vmem:[#allocation2 + $0xe0] sm:$0xff] %v5706
        %5739 = vst [vmem:[#allocation2 + $0xe8] sm:$0xff] %v5707
        %5740 = vst [vmem:[#allocation2 + $0xf0] sm:$0xff] %v5708
        %5741 = vst [vmem:[#allocation2 + $0xf8] sm:$0xff] %v5709
        %v5742 = vld [vmem:[#allocation2] sm:$0xff]
        %v5743 = vld [vmem:[#allocation2 + $0x8] sm:$0xff]
        %v5744 = vld [vmem:[#allocation2 + $0x10] sm:$0xff]
        %v5745 = vld [vmem:[#allocation2 + $0x18] sm:$0xff]
        %v5746 = vld [vmem:[#allocation2 + $0x20] sm:$0xff]
        %v5747 = vld [vmem:[#allocation2 + $0x28] sm:$0xff]
        %v5748 = vld [vmem:[#allocation2 + $0x30] sm:$0xff]
        %v5749 = vld [vmem:[#allocation2 + $0x38] sm:$0xff]
        %v5750 = vld [vmem:[#allocation2 + $0x40] sm:$0xff]
        %v5751 = vld [vmem:[#allocation2 + $0x48] sm:$0xff]
        %v5752 = vld [vmem:[#allocation2 + $0x50] sm:$0xff]
        %v5753 = vld [vmem:[#allocation2 + $0x58] sm:$0xff]
        %v5754 = vld [vmem:[#allocation2 + $0x60] sm:$0xff]
        %v5755 = vld [vmem:[#allocation2 + $0x68] sm:$0xff]
        %v5756 = vld [vmem:[#allocation2 + $0x70] sm:$0xff]
        %v5757 = vld [vmem:[#allocation2 + $0x78] sm:$0xff]
        %v5758 = vld [vmem:[#allocation2 + $0x80] sm:$0xff]
        %v5759 = vld [vmem:[#allocation2 + $0x88] sm:$0xff]
        %v5760 = vld [vmem:[#allocation2 + $0x90] sm:$0xff]
        %v5761 = vld [vmem:[#allocation2 + $0x98] sm:$0xff]
        %v5762 = vld [vmem:[#allocation2 + $0xa0] sm:$0xff]
        %v5763 = vld [vmem:[#allocation2 + $0xa8] sm:$0xff]
        %v5764 = vld [vmem:[#allocation2 + $0xb0] sm:$0xff]
        %v5765 = vld [vmem:[#allocation2 + $0xb8] sm:$0xff]
        %v5766 = vld [vmem:[#allocation2 + $0xc0] sm:$0xff]
        %v5767 = vld [vmem:[#allocation2 + $0xc8] sm:$0xff]
        %v5768 = vld [vmem:[#allocation2 + $0xd0] sm:$0xff]
        %v5769 = vld [vmem:[#allocation2 + $0xd8] sm:$0xff]
        %v5770 = vld [vmem:[#allocation2 + $0xe0] sm:$0xff]
        %v5771 = vld [vmem:[#allocation2 + $0xe8] sm:$0xff]
        %v5772 = vld [vmem:[#allocation2 + $0xf0] sm:$0xff]
        %v5773 = vld [vmem:[#allocation2 + $0xf8] sm:$0xff]
        %v5774 = vpack.c.bf16 %v5743, %v5742
        %v5775 = vpack.c.bf16 %v5745, %v5744
        %v5776 = vpack.c.bf16 %v5747, %v5746
        %v5777 = vpack.c.bf16 %v5749, %v5748
        %v5778 = vpack.c.bf16 %v5751, %v5750
        %v5779 = vpack.c.bf16 %v5753, %v5752
        %v5780 = vpack.c.bf16 %v5755, %v5754
        %v5781 = vpack.c.bf16 %v5757, %v5756
        %v5782 = vpack.c.bf16 %v5759, %v5758
        %v5783 = vpack.c.bf16 %v5761, %v5760
        %v5784 = vpack.c.bf16 %v5763, %v5762
        %v5785 = vpack.c.bf16 %v5765, %v5764
        %v5786 = vpack.c.bf16 %v5767, %v5766
        %v5787 = vpack.c.bf16 %v5769, %v5768
        %v5788 = vpack.c.bf16 %v5771, %v5770
        %v5789 = vpack.c.bf16 %v5773, %v5772
        %v5806 = vunpack.c.l.b16 %v5774
        %v5807 = vunpack.c.h.b16 %v5774
        %v5808 = vunpack.c.l.b16 %v5775
        %v5809 = vunpack.c.h.b16 %v5775
        %v5810 = vunpack.c.l.b16 %v5776
        %v5811 = vunpack.c.h.b16 %v5776
        %v5812 = vunpack.c.l.b16 %v5777
        %v5813 = vunpack.c.h.b16 %v5777
        %v5814 = vunpack.c.l.b16 %v5778
        %v5815 = vunpack.c.h.b16 %v5778
        %v5816 = vunpack.c.l.b16 %v5779
        %v5817 = vunpack.c.h.b16 %v5779
        %v5818 = vunpack.c.l.b16 %v5780
        %v5819 = vunpack.c.h.b16 %v5780
        %v5820 = vunpack.c.l.b16 %v5781
        %v5821 = vunpack.c.h.b16 %v5781
        %v5822 = vunpack.c.l.b16 %v5782
        %v5823 = vunpack.c.h.b16 %v5782
        %v5824 = vunpack.c.l.b16 %v5783
        %v5825 = vunpack.c.h.b16 %v5783
        %v5826 = vunpack.c.l.b16 %v5784
        %v5827 = vunpack.c.h.b16 %v5784
        %v5828 = vunpack.c.l.b16 %v5785
        %v5829 = vunpack.c.h.b16 %v5785
        %v5830 = vunpack.c.l.b16 %v5786
        %v5831 = vunpack.c.h.b16 %v5786
        %v5832 = vunpack.c.l.b16 %v5787
        %v5833 = vunpack.c.h.b16 %v5787
        %v5834 = vunpack.c.l.b16 %v5788
        %v5835 = vunpack.c.h.b16 %v5788
        %v5836 = vunpack.c.l.b16 %v5789
        %v5837 = vunpack.c.h.b16 %v5789
        %v5838 = vpack.c.b16 %v5806, %v5806
        %v5839 = vpack.c.b16 %v5807, %v5807
        %v5840 = vpack.c.b16 %v5808, %v5808
        %v5841 = vpack.c.b16 %v5809, %v5809
        %v5842 = vpack.c.b16 %v5810, %v5810
        %v5843 = vpack.c.b16 %v5811, %v5811
        %v5844 = vpack.c.b16 %v5812, %v5812
        %v5845 = vpack.c.b16 %v5813, %v5813
        %v5846 = vpack.c.b16 %v5814, %v5814
        %v5847 = vpack.c.b16 %v5815, %v5815
        %v5848 = vpack.c.b16 %v5816, %v5816
        %v5849 = vpack.c.b16 %v5817, %v5817
        %v5850 = vpack.c.b16 %v5818, %v5818
        %v5851 = vpack.c.b16 %v5819, %v5819
        %v5852 = vpack.c.b16 %v5820, %v5820
        %v5853 = vpack.c.b16 %v5821, %v5821
        %v5854 = vpack.c.b16 %v5822, %v5822
        %v5855 = vpack.c.b16 %v5823, %v5823
        %v5856 = vpack.c.b16 %v5824, %v5824
        %v5857 = vpack.c.b16 %v5825, %v5825
        %v5858 = vpack.c.b16 %v5826, %v5826
        %v5859 = vpack.c.b16 %v5827, %v5827
        %v5860 = vpack.c.b16 %v5828, %v5828
        %v5861 = vpack.c.b16 %v5829, %v5829
        %v5862 = vpack.c.b16 %v5830, %v5830
        %v5863 = vpack.c.b16 %v5831, %v5831
        %v5864 = vpack.c.b16 %v5832, %v5832
        %v5865 = vpack.c.b16 %v5833, %v5833
        %v5866 = vpack.c.b16 %v5834, %v5834
        %v5867 = vpack.c.b16 %v5835, %v5835
        %v5868 = vpack.c.b16 %v5836, %v5836
        %v5869 = vpack.c.b16 %v5837, %v5837
        %5902 = vst [vmem:[%s194] sm:$0xf] %v5838
        %5903 = vst [vmem:[%s194 + $0x4] sm:$0xf] %v5839
        %5904 = vst [vmem:[%s194 + $0x8] sm:$0xf] %v5840
        %5905 = vst [vmem:[%s194 + $0xc] sm:$0xf] %v5841
        %5906 = vst [vmem:[%s194 + $0x10] sm:$0xf] %v5842
        %5907 = vst [vmem:[%s194 + $0x14] sm:$0xf] %v5843
        %5908 = vst [vmem:[%s194 + $0x18] sm:$0xf] %v5844
        %5909 = vst [vmem:[%s194 + $0x1c] sm:$0xf] %v5845
        %5910 = vst [vmem:[%s194 + $0x20] sm:$0xf] %v5846
        %5911 = vst [vmem:[%s194 + $0x24] sm:$0xf] %v5847
        %5912 = vst [vmem:[%s194 + $0x28] sm:$0xf] %v5848
        %5913 = vst [vmem:[%s194 + $0x2c] sm:$0xf] %v5849
        %5914 = vst [vmem:[%s194 + $0x30] sm:$0xf] %v5850
        %5915 = vst [vmem:[%s194 + $0x34] sm:$0xf] %v5851
        %5916 = vst [vmem:[%s194 + $0x38] sm:$0xf] %v5852
        %5917 = vst [vmem:[%s194 + $0x3c] sm:$0xf] %v5853
        %5918 = vst [vmem:[%s194 + $0x40] sm:$0xf] %v5854
        %5919 = vst [vmem:[%s194 + $0x44] sm:$0xf] %v5855
        %5920 = vst [vmem:[%s194 + $0x48] sm:$0xf] %v5856
        %5921 = vst [vmem:[%s194 + $0x4c] sm:$0xf] %v5857
        %5922 = vst [vmem:[%s194 + $0x50] sm:$0xf] %v5858
        %5923 = vst [vmem:[%s194 + $0x54] sm:$0xf] %v5859
        %5924 = vst [vmem:[%s194 + $0x58] sm:$0xf] %v5860
        %5925 = vst [vmem:[%s194 + $0x5c] sm:$0xf] %v5861
        %5926 = vst [vmem:[%s194 + $0x60] sm:$0xf] %v5862
        %5927 = vst [vmem:[%s194 + $0x64] sm:$0xf] %v5863
        %5928 = vst [vmem:[%s194 + $0x68] sm:$0xf] %v5864
        %5929 = vst [vmem:[%s194 + $0x6c] sm:$0xf] %v5865
        %5930 = vst [vmem:[%s194 + $0x70] sm:$0xf] %v5866
        %5931 = vst [vmem:[%s194 + $0x74] sm:$0xf] %v5867
        %5932 = vst [vmem:[%s194 + $0x78] sm:$0xf] %v5868
        %5933 = vst [vmem:[%s194 + $0x7c] sm:$0xf] %v5869
        %v5934 = vadd.f32 %v5742, %v5743
        %v5935 = vadd.f32 %v5934, %v5744
        %v5936 = vadd.f32 %v5935, %v5745
        %v5937 = vadd.f32 %v5936, %v5746
        %v5938 = vadd.f32 %v5937, %v5747
        %v5939 = vadd.f32 %v5938, %v5748
        %v5940 = vadd.f32 %v5939, %v5749
        %v5941 = vadd.f32 %v5940, %v5750
        %v5942 = vadd.f32 %v5941, %v5751
        %v5943 = vadd.f32 %v5942, %v5752
        %v5944 = vadd.f32 %v5943, %v5753
        %v5945 = vadd.f32 %v5944, %v5754
        %v5946 = vadd.f32 %v5945, %v5755
        %v5947 = vadd.f32 %v5946, %v5756
        %v5948 = vadd.f32 %v5947, %v5757
        %v5949 = vadd.f32 %v5948, %v5758
        %v5950 = vadd.f32 %v5949, %v5759
        %v5951 = vadd.f32 %v5950, %v5760
        %v5952 = vadd.f32 %v5951, %v5761
        %v5953 = vadd.f32 %v5952, %v5762
        %v5954 = vadd.f32 %v5953, %v5763
        %v5955 = vadd.f32 %v5954, %v5764
        %v5956 = vadd.f32 %v5955, %v5765
        %v5957 = vadd.f32 %v5956, %v5766
        %v5958 = vadd.f32 %v5957, %v5767
        %v5959 = vadd.f32 %v5958, %v5768
        %v5960 = vadd.f32 %v5959, %v5769
        %v5961 = vadd.f32 %v5960, %v5770
        %v5962 = vadd.f32 %v5961, %v5771
        %v5963 = vadd.f32 %v5962, %v5772
        %v5964 = vadd.f32 %v5963, %v5773
        %v5965 = vrot.slane %v5964, 4
        %v5966 = vadd.f32 %v5964, %v5965
        %v5967 = vrot.slane %v5966, 2
        %v5968 = vadd.f32 %v5966, %v5967
        %v5969 = vrot.slane %v5968, 1
        %v5970 = vadd.f32 %v5968, %v5969
        %5971 = vst [vmem:[%s200] sm:$0x1] %v5970
        %v5972 = vmul.f32 %v5742, %v5742
        %v5973 = vmul.f32 %v5743, %v5743
        %v5974 = vmul.f32 %v5744, %v5744
        %v5975 = vmul.f32 %v5745, %v5745
        %v5976 = vmul.f32 %v5746, %v5746
        %v5977 = vmul.f32 %v5747, %v5747
        %v5978 = vmul.f32 %v5748, %v5748
        %v5979 = vmul.f32 %v5749, %v5749
        %v5980 = vmul.f32 %v5750, %v5750
        %v5981 = vmul.f32 %v5751, %v5751
        %v5982 = vmul.f32 %v5752, %v5752
        %v5983 = vmul.f32 %v5753, %v5753
        %v5984 = vmul.f32 %v5754, %v5754
        %v5985 = vmul.f32 %v5755, %v5755
        %v5986 = vmul.f32 %v5756, %v5756
        %v5987 = vmul.f32 %v5757, %v5757
        %v5988 = vmul.f32 %v5758, %v5758
        %v5989 = vmul.f32 %v5759, %v5759
        %v5990 = vmul.f32 %v5760, %v5760
        %v5991 = vmul.f32 %v5761, %v5761
        %v5992 = vmul.f32 %v5762, %v5762
        %v5993 = vmul.f32 %v5763, %v5763
        %v5994 = vmul.f32 %v5764, %v5764
        %v5995 = vmul.f32 %v5765, %v5765
        %v5996 = vmul.f32 %v5766, %v5766
        %v5997 = vmul.f32 %v5767, %v5767
        %v5998 = vmul.f32 %v5768, %v5768
        %v5999 = vmul.f32 %v5769, %v5769
        %v6000 = vmul.f32 %v5770, %v5770
        %v6001 = vmul.f32 %v5771, %v5771
        %v6002 = vmul.f32 %v5772, %v5772
        %v6003 = vmul.f32 %v5773, %v5773
        %v6004 = vadd.f32 %v5972, %v5973
        %v6005 = vadd.f32 %v6004, %v5974
        %v6006 = vadd.f32 %v6005, %v5975
        %v6007 = vadd.f32 %v6006, %v5976
        %v6008 = vadd.f32 %v6007, %v5977
        %v6009 = vadd.f32 %v6008, %v5978
        %v6010 = vadd.f32 %v6009, %v5979
        %v6011 = vadd.f32 %v6010, %v5980
        %v6012 = vadd.f32 %v6011, %v5981
        %v6013 = vadd.f32 %v6012, %v5982
        %v6014 = vadd.f32 %v6013, %v5983
        %v6015 = vadd.f32 %v6014, %v5984
        %v6016 = vadd.f32 %v6015, %v5985
        %v6017 = vadd.f32 %v6016, %v5986
        %v6018 = vadd.f32 %v6017, %v5987
        %v6019 = vadd.f32 %v6018, %v5988
        %v6020 = vadd.f32 %v6019, %v5989
        %v6021 = vadd.f32 %v6020, %v5990
        %v6022 = vadd.f32 %v6021, %v5991
        %v6023 = vadd.f32 %v6022, %v5992
        %v6024 = vadd.f32 %v6023, %v5993
        %v6025 = vadd.f32 %v6024, %v5994
        %v6026 = vadd.f32 %v6025, %v5995
        %v6027 = vadd.f32 %v6026, %v5996
        %v6028 = vadd.f32 %v6027, %v5997
        %v6029 = vadd.f32 %v6028, %v5998
        %v6030 = vadd.f32 %v6029, %v5999
        %v6031 = vadd.f32 %v6030, %v6000
        %v6032 = vadd.f32 %v6031, %v6001
        %v6033 = vadd.f32 %v6032, %v6002
        %v6034 = vadd.f32 %v6033, %v6003
        %v6035 = vrot.slane %v6034, 4
        %v6036 = vadd.f32 %v6034, %v6035
        %v6037 = vrot.slane %v6036, 2
        %v6038 = vadd.f32 %v6036, %v6037
        %v6039 = vrot.slane %v6038, 1
        %v6040 = vadd.f32 %v6038, %v6039
        %6041 = vst [vmem:[%s206] sm:$0x1] %v6040
        %s6042 = sand.u32 %s77, 1
        %s6043 = scalar_lea.sflag [#allocation4], %s6042
        %s6044 = sand.u32 %s77, 1
        %s6045 = smul.addr %s6044, 128
        %s6046 = scalar_lea.vmem [#allocation3], %s6045
        %s6047 = sand.u32 %s22, 1
        %s6048 = scalar_lea.sflag [#allocation6], %s6047
        %s6049 = sand.u32 %s103, 1
        %s6050 = scalar_lea.vmem [#allocation5], %s6049
        %s6051 = sand.u32 %s22, 1
        %s6052 = scalar_lea.sflag [#allocation6], %s6051
        %s6053 = sand.u32 %s129, 1
        %s6054 = scalar_lea.vmem [#allocation7], %s6053
        // Predicated region
        $region29: #{tpu_custom_call.1} parent=27 // pred_check
          %p6055 = pneg %p87
        $region30: #{tpu_custom_call.1} parent=27 // pred_check_branch
          %6057 = sbr.rel (%p6055) target = $region32
        $region31: #{tpu_custom_call.1} parent=27 // pred_region
          %s6059 = ssub.s32 2048, 2048
          %6060 = vsyncadd %s6043, %s6059
          %s6061 = smul.addr %s22, 32
          %s6062 = smul.addr %s6061, 64
          %s6063 = scalar_lea.hbm %s2, %s6062
          %s6064 = sshll.u32 %s6046, 4
          %s6065 = int_to_ptr.vmem [resolvable:$true] %s6064
          %6070 = dma.vmem_to_hbm [thread:$0]  %s6065, 2048, %s6063, %s6043, 64, 64, 4
        $region32: #{tpu_custom_call.1} parent=27 // pred_fallthru
          _
        // Predicated region
        $region33: #{tpu_custom_call.1} parent=27 // pred_check
          %p6071 = pneg %p113
        $region34: #{tpu_custom_call.1} parent=27 // pred_check_branch
          %6073 = sbr.rel (%p6071) target = $region36
        $region35: #{tpu_custom_call.1} parent=27 // pred_region
          %s6075 = ssub.s32 16, 16
          %6076 = vsyncadd %s6048, %s6075
          %s6077 = smul.addr %s22, 16
          %s6078 = scalar_lea.hbm %s3, %s6077
          %s6080 = sshll.u32 %s6050, 4
          %s6081 = int_to_ptr.vmem [resolvable:$true] %s6080
          %6083 = dma.vmem_to_hbm [thread:$0]  %s6081, 16, %s6078, %s6048
        $region36: #{tpu_custom_call.1} parent=27 // pred_fallthru
          _
        // Predicated region
        $region37: #{tpu_custom_call.1} parent=27 // pred_check
          %p6084 = pneg %p139
        $region38: #{tpu_custom_call.1} parent=27 // pred_check_branch
          %6086 = sbr.rel (%p6084) target = $region40
        $region39: #{tpu_custom_call.1} parent=27 // pred_region
          %s6088 = ssub.s32 16, 16
          %6089 = vsyncadd %s6052, %s6088
          %s6090 = smul.addr %s22, 16
          %s6091 = scalar_lea.hbm %s4, %s6090
          %s6093 = sshll.u32 %s6054, 4
          %s6094 = int_to_ptr.vmem [resolvable:$true] %s6093
          %6096 = dma.vmem_to_hbm [thread:$0]  %s6094, 16, %s6091, %s6052
        $region40: #{tpu_custom_call.1} parent=27 // pred_fallthru
          _
      $region28: #{tpu_custom_call.1} parent=5 // pred_fallthru
        _
      %p6097 = scmp.le.s32.totalorder 2, %s17
      // Predicated region
      $region41: #{tpu_custom_call.1} parent=5 // pred_check
        %p6098 = pneg %p6097
      $region42: #{tpu_custom_call.1} parent=5 // pred_check_branch
        %6100 = sbr.rel (%p6098) target = $region44
      $region43: #{tpu_custom_call.1} parent=5 // pred_region
        %s6101 = ssub.s32 %s17, 2
        // Predicated region
        $region45: #{tpu_custom_call.1} parent=43 // pred_check
          %p6102 = pneg %p93
        $region46: #{tpu_custom_call.1} parent=43 // pred_check_branch
          %6104 = sbr.rel (%p6102) target = $region48
        $region47: #{tpu_custom_call.1} parent=43 // pred_region
          %s6105 = sand.u32 %s78, 1
          %s6106 = scalar_lea.sflag [#allocation4], %s6105
          %s6107 = sand.u32 %s78, 1
          %s6108 = smul.addr %s6107, 128
          %s6109 = scalar_lea.vmem [#allocation3], %s6108
          %6110 = dma.done %s6106, 2048
        $region48: #{tpu_custom_call.1} parent=43 // pred_fallthru
          _
        // Predicated region
        $region49: #{tpu_custom_call.1} parent=43 // pred_check
          %p6111 = pneg %p119
        $region50: #{tpu_custom_call.1} parent=43 // pred_check_branch
          %6113 = sbr.rel (%p6111) target = $region52
        $region51: #{tpu_custom_call.1} parent=43 // pred_region
          %s6114 = sand.u32 %s23, 1
          %s6115 = scalar_lea.sflag [#allocation6], %s6114
          %s6116 = sand.u32 %s104, 1
          %s6117 = scalar_lea.vmem [#allocation5], %s6116
          %6118 = dma.done %s6115, 16
        $region52: #{tpu_custom_call.1} parent=43 // pred_fallthru
          _
        // Predicated region
        $region53: #{tpu_custom_call.1} parent=43 // pred_check
          %p6119 = pneg %p145
        $region54: #{tpu_custom_call.1} parent=43 // pred_check_branch
          %6121 = sbr.rel (%p6119) target = $region56
        $region55: #{tpu_custom_call.1} parent=43 // pred_region
          %s6122 = sand.u32 %s23, 1
          %s6123 = scalar_lea.sflag [#allocation6], %s6122
          %s6124 = sand.u32 %s130, 1
          %s6125 = scalar_lea.vmem [#allocation7], %s6124
          %6126 = dma.done %s6123, 16
        $region56: #{tpu_custom_call.1} parent=43 // pred_fallthru
          _
      $region44: #{tpu_custom_call.1} parent=5 // pred_fallthru
        _
    $region6: #{tpu_custom_call.1} parent=1 // loop_footer
      %s21 = sadd.s32 1, %s17
    $region7: #{tpu_custom_call.1} parent=1 // loop_footer_branch
      %16 = sbr.rel target = $region3
    $region8: #{tpu_custom_call.1} parent=1 // loop_exit
      _
    %6127 = vsyncpa [#allocation4], 1
    %s6128 = scalar_lea.sflag [#allocation4], 1
    %6129 = vsyncpa %s6128, 1
    %6130 = vsyncpa [#allocation6], 1
    %s6131 = scalar_lea.sflag [#allocation6], 1
    %6132 = vsyncpa %s6131, 1

</llo_original>
